<compile_context>
chip_gen: v6e
topology: v6e:2x2x1
jax: 0.10.0
libtpu: 0.0.40
codegen_flags: <defaults>
</compile_context>

<pallas_src>
import functools

import jax
import jax.numpy as jnp
from jax.experimental import pallas as pl
from jax.experimental.pallas import tpu as pltpu


# ----------------------------------------------------------------------------
# small helpers (all static Python)
# ----------------------------------------------------------------------------
def _round_up(n, m):
    return ((n + m - 1) // m) * m


def _pow2_leq(n):
    p = 1
    while p * 2 <= n:
        p *= 2
    return p


def _largest_divisor_leq(n, cap):
    for c in range(min(n, cap), 0, -1):
        if n % c == 0:
            return c
    return 1


def _pick_n_tile(n):
    """n is a multiple of 128; pick a lane-dense N tile <= 1024 dividing n."""
    if n <= 1024:
        return n
    return 128 * _largest_divisor_leq(n // 128, 8)


def _tpu_caps():
    """(vmem_capacity_bytes, num_tensorcores) with conservative fallbacks."""
    vmem_bytes = 64 << 20     # safe for every generation (v7x floor)
    num_tc = 1                # no batch split unless we positively detect 2 TCs
    try:
        info = pltpu.get_tpu_info()
        for name in ("vmem_capacity_bytes", "vmem_bytes", "vmem_capacity"):
            v = getattr(info, name, None)
            if v:
                vmem_bytes = int(v)
                break
        for name in ("num_tensorcores", "tensorcore_count", "num_cores",
                     "core_count"):
            v = getattr(info, name, None)
            if v:
                num_tc = int(v)
                break
    except Exception:
        pass
    return vmem_bytes, num_tc


def _single_buffered(block_shape, index_map):
    """BlockSpec for a grid-invariant operand: request a single buffer."""
    try:
        return pl.BlockSpec(block_shape, index_map, pipeline_mode=pl.Buffered(1))
    except (AttributeError, TypeError):
        return pl.BlockSpec(block_shape, index_map)


# ----------------------------------------------------------------------------
# Kernel 1: row/N-tiled  y = x @ W + b   (fully parallel).
# Used for the hoisted LSTM input projection and the final Linear layer.
# ----------------------------------------------------------------------------
def _matmul_bias_kernel(x_ref, w_ref, b_ref, out_ref):
    out_ref[...] = (
        jnp.dot(x_ref[...], w_ref[...], preferred_element_type=jnp.float32)
        + b_ref[...]
    ).astype(out_ref.dtype)


def matmul_bias(x2d, w_t, bias, *, row_tile, out_dtype, vmem_budget):
    """x2d: (rows, d_in) bf16; w_t: (d_in, N) bf16; bias: (1, N) f32 -> (rows, N)."""
    rows, d_in = x2d.shape
    n = w_t.shape[1]
    n_tile = _pick_n_tile(n)
    n_tiles = n // n_tile
    out_bytes = jnp.dtype(out_dtype).itemsize

    w_bufs = 1 if n_tiles == 1 else 2
    need = (2 * (row_tile * d_in * 2 + row_tile * n_tile * out_bytes)
            + w_bufs * (d_in * n_tile * 2 + n_tile * 4)
            + (2 << 20))
    vmem_limit = int(min(max(need, 16 << 20), vmem_budget))

    if n_tiles == 1:  # fully grid-invariant weight/bias -> single buffer
        w_spec = _single_buffered((d_in, n_tile), lambda c, r: (0, c))
        b_spec = _single_buffered((1, n_tile), lambda c, r: (0, c))
    else:
        w_spec = pl.BlockSpec((d_in, n_tile), lambda c, r: (0, c))
        b_spec = pl.BlockSpec((1, n_tile), lambda c, r: (0, c))

    return pl.pallas_call(
        _matmul_bias_kernel,
        out_shape=jax.ShapeDtypeStruct((rows, n), out_dtype),
        grid_spec=pltpu.PrefetchScalarGridSpec(
            num_scalar_prefetch=0,
            grid=(n_tiles, rows // row_tile),   # N outer: weight fetched once per tile
            in_specs=[
                pl.BlockSpec((row_tile, d_in), lambda c, r: (r, 0)),
                w_spec,
                b_spec,
            ],
            out_specs=pl.BlockSpec((row_tile, n_tile), lambda c, r: (r, c)),
        ),
        compiler_params=pltpu.CompilerParams(
            dimension_semantics=("parallel", "parallel"),
            vmem_limit_bytes=vmem_limit,
        ),
    )(x2d, w_t, bias)


# ----------------------------------------------------------------------------
# Kernel 2: sequential LSTM recurrence, time-chunked.
#   gates_t = G_x[t] + h_{t-1} @ W_hh   (G_x precomputed, bias folded in)
# grid = (batch_blocks ["parallel"], time_chunks ["arbitrary"]); h/c carries
# live in per-core VMEM scratch and persist across time chunks.
# Gate order inside the padded 4Hp axis is [i, f, o, g].
# ----------------------------------------------------------------------------
def _lstm_rec_kernel(gx_ref, whh_ref, out_ref, h_scr, c_scr):
    tc = gx_ref.shape[0]       # timesteps per chunk (static)
    hp = h_scr.shape[1]        # padded hidden size (static, multiple of 128)

    @pl.when(pl.program_id(1) == 0)
    def _():
        h_scr[...] = jnp.zeros_like(h_scr)
        c_scr[...] = jnp.zeros_like(c_scr)

    def step(t, carry):
        gates = gx_ref[t].astype(jnp.float32) + jnp.dot(
            h_scr[...], whh_ref[...], preferred_element_type=jnp.float32)
        # One sigmoid over the contiguous [i|f|o] block, one tanh for g.
        sig = jax.nn.sigmoid(gates[:, : 3 * hp])
        i = sig[:, 0 * hp:1 * hp]
        f = sig[:, 1 * hp:2 * hp]
        o = sig[:, 2 * hp:3 * hp]
        g = jnp.tanh(gates[:, 3 * hp:4 * hp])
        c_new = f * c_scr[...] + i * g                       # fp32 cell state
        h_new = (o * jnp.tanh(c_new)).astype(jnp.bfloat16)   # bf16 hidden (MXU input)
        c_scr[...] = c_new
        h_scr[...] = h_new
        out_ref[t] = h_new
        return carry

    # Partial unroll: visibility for the LLO scheduler without icache blowup.
    jax.lax.fori_loop(0, tc, step, 0, unroll=min(8, tc))


def _rec_vmem_need(time_chunk, batch_block, hp, g4):
    gx_blk = time_chunk * batch_block * g4 * 2     # bf16
    out_blk = time_chunk * batch_block * hp * 2    # bf16
    whh = hp * g4 * 2                              # bf16, single-buffered
    scratch = batch_block * hp * (2 + 4)
    return 2 * (gx_blk + out_blk) + whh + scratch + (2 << 20)


def lstm_recurrence(gx, w_hh_t, *, time_chunk, batch_block, vmem_budget):
    """gx: (Tp, Bp, 4Hp) bf16; w_hh_t: (Hp, 4Hp) bf16 -> (Tp, Bp, Hp) bf16."""
    Tp, Bp, g4 = gx.shape
    Hp = g4 // 4
    need = _rec_vmem_need(time_chunk, batch_block, Hp, g4)
    vmem_limit = int(min(max(need, 16 << 20), vmem_budget))

    return pl.pallas_call(
        _lstm_rec_kernel,
        out_shape=jax.ShapeDtypeStruct((Tp, Bp, Hp), jnp.bfloat16),
        grid_spec=pltpu.PrefetchScalarGridSpec(
            num_scalar_prefetch=0,
            grid=(Bp // batch_block, Tp // time_chunk),
            in_specs=[
                pl.BlockSpec((time_chunk, batch_block, g4), lambda b, t: (t, b, 0)),
                _single_buffered((Hp, g4), lambda b, t: (0, 0)),  # invariant weight
            ],
            out_specs=pl.BlockSpec((time_chunk, batch_block, Hp),
                                   lambda b, t: (t, b, 0)),
            scratch_shapes=[
                pltpu.VMEM((batch_block, Hp), jnp.bfloat16),  # h carry
                pltpu.VMEM((batch_block, Hp), jnp.float32),   # c carry
            ],
        ),
        compiler_params=pltpu.CompilerParams(
            dimension_semantics=("parallel", "arbitrary"),  # batch-blocks ||, time sequential
            vmem_limit_bytes=vmem_limit,
        ),
    )(gx, w_hh_t)


# ----------------------------------------------------------------------------
# Parameters: raw PyTorch-layout init + conversion to padded TPU layout
# ----------------------------------------------------------------------------
def init_raw_params(key, input_dim, hidden_dim, num_layers, num_classes):
    """PyTorch-layout parameters with U(-1/sqrt(H), 1/sqrt(H)) init."""
    bound = hidden_dim ** -0.5
    lstm = []
    for layer in range(num_layers):
        d_in = input_dim if layer == 0 else hidden_dim
        key, k1, k2, k3, k4 = jax.random.split(key, 5)
        w_ih = jax.random.uniform(k1, (4 * hidden_dim, d_in), jnp.float32, -bound, bound)
        w_hh = jax.random.uniform(k2, (4 * hidden_dim, hidden_dim), jnp.float32, -bound, bound)
        b_ih = jax.random.uniform(k3, (4 * hidden_dim,), jnp.float32, -bound, bound)
        b_hh = jax.random.uniform(k4, (4 * hidden_dim,), jnp.float32, -bound, bound)
        lstm.append((w_ih, w_hh, b_ih, b_hh))
    key, k5, k6 = jax.random.split(key, 3)
    w_fc = jax.random.uniform(k5, (num_classes, hidden_dim), jnp.float32, -bound, bound)
    b_fc = jax.random.uniform(k6, (num_classes,), jnp.float32, -bound, bound)
    return {"lstm": lstm, "fc": (w_fc, b_fc)}


# PyTorch gate order [i, f, g, o]  ->  kernel gate order [i, f, o, g]
_GATE_ORDER = (0, 1, 3, 2)


def _pad_gates(w_t, h, hp):
    """(in, 4h) PyTorch-ordered -> (in, 4hp) [i,f,o,g]-ordered, per-gate zero-padded."""
    parts = []
    for k in _GATE_ORDER:
        blk = w_t[:, k * h:(k + 1) * h]
        parts.append(jnp.pad(blk, ((0, 0), (0, hp - h))))
    return jnp.concatenate(parts, axis=1)


def prepare_params(raw):
    """Transpose, pad dims to multiples of 128, reorder gates, fold biases, cast to bf16."""
    h = raw["lstm"][0][1].shape[1]
    hp = _round_up(h, 128)
    lstm = []
    for layer, (w_ih, w_hh, b_ih, b_hh) in enumerate(raw["lstm"]):
        d_in = w_ih.shape[1]
        d_in_p = hp if layer > 0 else _round_up(d_in, 128)    # layer-0 K padded to 128
        w_ih_t = _pad_gates(w_ih.T, h, hp)                    # (d_in, 4hp)
        w_ih_t = jnp.pad(w_ih_t, ((0, d_in_p - d_in), (0, 0)))
        w_hh_t = jnp.pad(_pad_gates(w_hh.T, h, hp), ((0, hp - h), (0, 0)))  # (hp, 4hp)
        bias = _pad_gates((b_ih + b_hh)[None, :], h, hp)      # (1, 4hp)
        lstm.append({
            "w_ih_t": w_ih_t.astype(jnp.bfloat16),
            "w_hh_t": w_hh_t.astype(jnp.bfloat16),
            "bias": bias.astype(jnp.float32),
        })
    w_fc, b_fc = raw["fc"]
    c = w_fc.shape[0]
    cp = _round_up(c, 128)
    w_fc_t = jnp.pad(w_fc.T, ((0, hp - h), (0, cp - c)))      # (hp, cp)
    b_fcp = jnp.pad(b_fc[None, :], ((0, 0), (0, cp - c)))     # (1, cp)
    return {
        "lstm": lstm,
        "fc": {"w_t": w_fc_t.astype(jnp.bfloat16), "b": b_fcp.astype(jnp.float32)},
    }


# ----------------------------------------------------------------------------
# Forward pass
# ----------------------------------------------------------------------------
@functools.partial(jax.jit, static_argnames=("num_classes",))
def rnn_seq_note_forward(params, x, eos_mask, *, num_classes):
    """x: (T, B, input_dim); eos_mask: (T, B) -> (T, B, num_classes)."""
    T, B, D = x.shape
    Hp = params["lstm"][0]["w_hh_t"].shape[0]
    g4 = params["lstm"][0]["w_hh_t"].shape[1]
    Dp = params["lstm"][0]["w_ih_t"].shape[0]
    Cp = params["fc"]["w_t"].shape[1]

    vmem_cap, num_tc = _tpu_caps()
    vmem_budget = min(int(0.9 * vmem_cap), vmem_cap - (8 << 20))

    # Pad batch so the sublane dim is >= 8; padded rows are sliced off at the end.
    Bp = _round_up(max(B, 8), 8)

    # Split the batch across batch blocks only on multi-TC chips, and only if each
    # half keeps >= 16 sublanes (full bf16 tile).  Single-TC: keep the full batch.
    if num_tc >= 2 and Bp >= 32 and Bp % 16 == 0:
        batch_block = Bp // 2
    else:
        batch_block = Bp

    # Time chunk (power of two), co-derived with the VMEM budget.
    T2 = pl.next_power_of_2(T)
    time_chunk = min(16, T2)
    while time_chunk > 1 and _rec_vmem_need(time_chunk, batch_block, Hp, g4) > vmem_budget:
        time_chunk //= 2

    # Row tile for the parallel matmuls: tile_T timesteps * Bp rows (>= ~512 rows
    # when T allows).  Pad T so both the time chunk and the row tile divide it.
    tile_T = min(T2, _pow2_leq(max(1, 512 // Bp)))
    Tp = _round_up(T, max(time_chunk, tile_T))
    row_tile = tile_T * Bp

    xp = jnp.pad(x, ((0, Tp - T), (0, Bp - B), (0, Dp - D)))
    feats = xp.astype(jnp.bfloat16).reshape(Tp * Bp, Dp)

    for lp in params["lstm"]:
        # Hoisted, fully-parallel input projection (bias folded in), stored in bf16.
        gx = matmul_bias(feats, lp["w_ih_t"], lp["bias"], row_tile=row_tile,
                         out_dtype=jnp.bfloat16, vmem_budget=vmem_budget)
        gx = gx.reshape(Tp, Bp, g4)
        # Sequential part: only h_{t-1} @ W_hh remains on the critical path.
        h_seq = lstm_recurrence(gx, lp["w_hh_t"], time_chunk=time_chunk,
                                batch_block=batch_block, vmem_budget=vmem_budget)
        feats = h_seq.reshape(Tp * Bp, Hp)

    # Final Linear; eos mask applied in XLA on the small sliced output
    # (avoids a 1-lane, non-lane-dense mask block inside the kernel).
    y = matmul_bias(feats, params["fc"]["w_t"], params["fc"]["b"],
                    row_tile=row_tile, out_dtype=jnp.float32,
                    vmem_budget=vmem_budget)
    y = y.reshape(Tp, Bp, Cp)[:T, :B, :num_classes]
    return y * eos_mask.astype(jnp.float32)[..., None]


# ----------------------------------------------------------------------------
# Pure-JAX reference (PyTorch math/gate-order with the same bf16-MXU recipe)
# ----------------------------------------------------------------------------
def _reference_forward(raw, x, eos_mask):
    h_seq = x.astype(jnp.float32)
    B = x.shape[1]
    for (w_ih, w_hh, b_ih, b_hh) in raw["lstm"]:
        H = w_hh.shape[1]
        wih_t = w_ih.T.astype(jnp.bfloat16)
        whh_t = w_hh.T.astype(jnp.bfloat16)
        bias = (b_ih + b_hh)[None, :]
        gx = jnp.dot(h_seq.astype(jnp.bfloat16), wih_t,
                     preferred_element_type=jnp.float32) + bias     # (T, B, 4H)

        def step(carry, gx_t):
            h, c = carry
            gates = gx_t + jnp.dot(h, whh_t, preferred_element_type=jnp.float32)
            i = jax.nn.sigmoid(gates[:, 0 * H:1 * H])
            f = jax.nn.sigmoid(gates[:, 1 * H:2 * H])
            g = jnp.tanh(gates[:, 2 * H:3 * H])
            o = jax.nn.sigmoid(gates[:, 3 * H:4 * H])
            c = f * c + i * g
            h = (o * jnp.tanh(c)).astype(jnp.bfloat16)
            return (h, c), h

        init = (jnp.zeros((B, H), jnp.bfloat16), jnp.zeros((B, H), jnp.float32))
        _, h_seq = jax.lax.scan(step, init, gx)
    w_fc, b_fc = raw["fc"]
    y = jnp.dot(h_seq, w_fc.T.astype(jnp.bfloat16),
                preferred_element_type=jnp.float32) + b_fc
    return y * eos_mask[..., None]


if __name__ == "__main__":
    T, B = 8, 2
    input_dim, hidden_dim, num_layers, num_classes = 16, 32, 2, 10

    key = jax.random.PRNGKey(0)
    key, kx, km = jax.random.split(key, 3)
    x = jax.random.normal(kx, (T, B, input_dim), jnp.float32)
    eos_mask = (jax.random.uniform(km, (T, B)) > 0.3).astype(jnp.float32)

    raw = init_raw_params(key, input_dim, hidden_dim, num_layers, num_classes)
    params = prepare_params(raw)

    out = rnn_seq_note_forward(params, x, eos_mask, num_classes=num_classes)
    out = jax.block_until_ready(out)

    ref = _reference_forward(raw, x, eos_mask)
    assert out.shape == (T, B, num_classes)
    max_err = float(jnp.abs(out - ref).max())
    assert jnp.allclose(out, ref, atol=1e-2, rtol=1e-2), f"max_err={max_err}"

    print("KERNEL_OK")
</pallas_src>

<mosaic_0001>
module attributes {stable_mosaic.version = 11 : i64} {
  func.func @_matmul_bias_kernel(%arg0: i32, %arg1: i32, %arg2: memref<64x128xbf16, #tpu.memory_space<vmem>>, %arg3: memref<128x512xbf16, #tpu.memory_space<vmem>>, %arg4: memref<1x512xf32, #tpu.memory_space<vmem>>, %arg5: memref<64x512xbf16, #tpu.memory_space<vmem>>) attributes {dimension_semantics = [#tpu.dimension_semantics<parallel>, #tpu.dimension_semantics<parallel>], iteration_bounds = array<i64: 1, 1>, scalar_prefetch = 0 : i64, scratch_operands = 0 : i64, tpu.core_type = #tpu.core_type<tc>, window_params = [{transform_indices = @transform_0, window_bounds = array<i64: 64, 128>}, {pipeline_mode = #tpu.pipeline_mode<synchronous>, transform_indices = @transform_1, window_bounds = array<i64: 128, 512>}, {pipeline_mode = #tpu.pipeline_mode<synchronous>, transform_indices = @transform_2, window_bounds = array<i64: 1, 512>}, {transform_indices = @transform_3, window_bounds = array<i64: 64, 512>}]} {
    %c0 = arith.constant 0 : index
    %c0_0 = arith.constant 0 : index
    %0 = vector.load %arg2[%c0, %c0_0] : memref<64x128xbf16, #tpu.memory_space<vmem>>, vector<64x128xbf16>
    %c0_1 = arith.constant 0 : index
    %c0_2 = arith.constant 0 : index
    %1 = vector.load %arg3[%c0_1, %c0_2] : memref<128x512xbf16, #tpu.memory_space<vmem>>, vector<128x512xbf16>
    %cst = arith.constant dense<0.000000e+00> : vector<64x512xf32>
    %2 = tpu.matmul %0, %1, %cst {dimension_numbers = #tpu.dot_dimension_numbers<[1], [0], [0], [1], [0, 0, 1, 1], [], []>} : vector<64x128xbf16>, vector<128x512xbf16>, vector<64x512xf32> -> vector<64x512xf32>
    %c0_3 = arith.constant 0 : index
    %c0_4 = arith.constant 0 : index
    %3 = vector.load %arg4[%c0_3, %c0_4] : memref<1x512xf32, #tpu.memory_space<vmem>>, vector<1x512xf32>
    %4 = vector.broadcast %3 : vector<1x512xf32> to vector<64x512xf32>
    %5 = arith.addf %2, %4 : vector<64x512xf32>
    %6 = arith.truncf %5 : vector<64x512xf32> to vector<64x512xbf16>
    %c0_5 = arith.constant 0 : index
    %c0_6 = arith.constant 0 : index
    %7 = vector.load %arg5[%c0_5, %c0_6] : memref<64x512xbf16, #tpu.memory_space<vmem>>, vector<64x512xbf16>
    tpu.vector_store %arg5[%c0_5, %c0_6], %6 {strides = array<i32>} : memref<64x512xbf16, #tpu.memory_space<vmem>>, vector<64x512xbf16>,
    return
  }
  func.func @transform_0(%arg0: i32, %arg1: i32) -> (i32, i32) {
    %c0_i32 = arith.constant 0 : i32
    %c0_i32_0 = arith.constant 0 : i32
    return %arg1, %c0_i32 : i32, i32
  }
  func.func @transform_1(%arg0: i32, %arg1: i32) -> (i32, i32) {
    %c0_i32 = arith.constant 0 : i32
    %c0_i32_0 = arith.constant 0 : i32
    return %c0_i32, %arg0 : i32, i32
  }
  func.func @transform_2(%arg0: i32, %arg1: i32) -> (i32, i32) {
    %c0_i32 = arith.constant 0 : i32
    %c0_i32_0 = arith.constant 0 : i32
    return %c0_i32, %arg0 : i32, i32
  }
  func.func @transform_3(%arg0: i32, %arg1: i32) -> (i32, i32) {
    %c0_i32 = arith.constant 0 : i32
    return %arg1, %arg0 : i32, i32
  }
}

module attributes {stable_mosaic.version = 11 : i64} {
  func.func @_lstm_rec_kernel(%arg0: i32, %arg1: i32, %arg2: memref<8x8x512xbf16, #tpu.memory_space<vmem>>, %arg3: memref<128x512xbf16, #tpu.memory_space<vmem>>, %arg4: memref<8x8x128xbf16, #tpu.memory_space<vmem>>, %arg5: memref<8x128xbf16, #tpu.memory_space<vmem>>, %arg6: memref<8x128xf32, #tpu.memory_space<vmem>>) attributes {dimension_semantics = [#tpu.dimension_semantics<parallel>, #tpu.dimension_semantics<arbitrary>], iteration_bounds = array<i64: 1, 1>, scalar_prefetch = 0 : i64, scratch_operands = 2 : i64, tpu.core_type = #tpu.core_type<tc>, window_params = [{transform_indices = @transform_0, window_bounds = array<i64: 8, 8, 512>}, {pipeline_mode = #tpu.pipeline_mode<synchronous>, transform_indices = @transform_1, window_bounds = array<i64: 128, 512>}, {transform_indices = @transform_2, window_bounds = array<i64: 8, 8, 128>}]} {
    %c0_i32 = arith.constant 0 : i32
    %0 = arith.cmpi eq, %arg1, %c0_i32 : i32
    %1 = arith.extui %0 : i1 to i32
    %c0_i32_0 = arith.constant 0 : i32
    %2 = arith.cmpi ne, %1, %c0_i32_0 : i32
    scf.if %2 {
      %cst_128 = arith.constant 0.000000e+00 : bf16
      %259 = vector.broadcast %cst_128 : bf16 to vector<8x128xbf16>
      %c0_129 = arith.constant 0 : index
      %c0_130 = arith.constant 0 : index
      %260 = vector.load %arg5[%c0_129, %c0_130] : memref<8x128xbf16, #tpu.memory_space<vmem>>, vector<8x128xbf16>
      tpu.vector_store %arg5[%c0_129, %c0_130], %259 {strides = array<i32>} : memref<8x128xbf16, #tpu.memory_space<vmem>>, vector<8x128xbf16>,
      %cst_131 = arith.constant 0.000000e+00 : f32
      %261 = vector.broadcast %cst_131 : f32 to vector<8x128xf32>
      %c0_132 = arith.constant 0 : index
      %c0_133 = arith.constant 0 : index
      %262 = vector.load %arg6[%c0_132, %c0_133] : memref<8x128xf32, #tpu.memory_space<vmem>>, vector<8x128xf32>
      tpu.vector_store %arg6[%c0_132, %c0_133], %261 {strides = array<i32>} : memref<8x128xf32, #tpu.memory_space<vmem>>, vector<8x128xf32>,
    } else {
    }
    %c0_i32_1 = arith.constant 0 : i32
    %3 = arith.index_cast %c0_i32_1 : i32 to index
    %c0 = arith.constant 0 : index
    %c0_2 = arith.constant 0 : index
    %4 = vector.load %arg2[%3, %c0, %c0_2] : memref<8x8x512xbf16, #tpu.memory_space<vmem>>, vector<1x8x512xbf16>
    %5 = vector.shape_cast %4 : vector<1x8x512xbf16> to vector<8x512xbf16>
    %6 = arith.extf %5 : vector<8x512xbf16> to vector<8x512xf32>
    %c0_3 = arith.constant 0 : index
    %c0_4 = arith.constant 0 : index
    %7 = vector.load %arg5[%c0_3, %c0_4] : memref<8x128xbf16, #tpu.memory_space<vmem>>, vector<8x128xbf16>
    %c0_5 = arith.constant 0 : index
    %c0_6 = arith.constant 0 : index
    %8 = vector.load %arg3[%c0_5, %c0_6] : memref<128x512xbf16, #tpu.memory_space<vmem>>, vector<128x512xbf16>
    %cst = arith.constant dense<0.000000e+00> : vector<8x512xf32>
    %9 = tpu.matmul %7, %8, %cst {dimension_numbers = #tpu.dot_dimension_numbers<[1], [0], [0], [1], [0, 0, 1, 1], [], []>} : vector<8x128xbf16>, vector<128x512xbf16>, vector<8x512xf32> -> vector<8x512xf32>
    %10 = arith.addf %6, %9 : vector<8x512xf32>
    %11 = vector.extract_strided_slice %10 {offsets = [0, 0], sizes = [8, 384], strides = [1, 1]} : vector<8x512xf32> to vector<8x384xf32>
    %12 = arith.negf %11 : vector<8x384xf32>
    %13 = math.exp %12 : vector<8x384xf32>
    %cst_7 = arith.constant 1.000000e+00 : f32
    %14 = vector.broadcast %cst_7 : f32 to vector<8x384xf32>
    %15 = arith.addf %14, %13 : vector<8x384xf32>
    %16 = arith.divf %14, %15 : vector<8x384xf32>
    %17 = vector.extract_strided_slice %16 {offsets = [0, 0], sizes = [8, 128], strides = [1, 1]} : vector<8x384xf32> to vector<8x128xf32>
    %18 = vector.extract_strided_slice %16 {offsets = [0, 128], sizes = [8, 128], strides = [1, 1]} : vector<8x384xf32> to vector<8x128xf32>
    %19 = vector.extract_strided_slice %16 {offsets = [0, 256], sizes = [8, 128], strides = [1, 1]} : vector<8x384xf32> to vector<8x128xf32>
    %20 = vector.extract_strided_slice %10 {offsets = [0, 384], sizes = [8, 128], strides = [1, 1]} : vector<8x512xf32> to vector<8x128xf32>
    %21 = math.tanh %20 : vector<8x128xf32>
    %c0_8 = arith.constant 0 : index
    %c0_9 = arith.constant 0 : index
    %22 = vector.load %arg6[%c0_8, %c0_9] : memref<8x128xf32, #tpu.memory_space<vmem>>, vector<8x128xf32>
    %23 = arith.mulf %18, %22 : vector<8x128xf32>
    %24 = arith.mulf %17, %21 : vector<8x128xf32>
    %25 = arith.addf %23, %24 : vector<8x128xf32>
    %26 = math.tanh %25 : vector<8x128xf32>
    %27 = arith.mulf %19, %26 : vector<8x128xf32>
    %28 = arith.truncf %27 : vector<8x128xf32> to vector<8x128xbf16>
    %c0_10 = arith.constant 0 : index
    %c0_11 = arith.constant 0 : index
    %29 = vector.load %arg6[%c0_10, %c0_11] : memref<8x128xf32, #tpu.memory_space<vmem>>, vector<8x128xf32>
    tpu.vector_store %arg6[%c0_10, %c0_11], %25 {strides = array<i32>} : memref<8x128xf32, #tpu.memory_space<vmem>>, vector<8x128xf32>,
    %c0_12 = arith.constant 0 : index
    %c0_13 = arith.constant 0 : index
    %30 = vector.load %arg5[%c0_12, %c0_13] : memref<8x128xbf16, #tpu.memory_space<vmem>>, vector<8x128xbf16>
    tpu.vector_store %arg5[%c0_12, %c0_13], %28 {strides = array<i32>} : memref<8x128xbf16, #tpu.memory_space<vmem>>, vector<8x128xbf16>,
    %31 = arith.index_cast %c0_i32_1 : i32 to index
    %c0_14 = arith.constant 0 : index
    %c0_15 = arith.constant 0 : index
    %32 = vector.load %arg4[%31, %c0_14, %c0_15] : memref<8x8x128xbf16, #tpu.memory_space<vmem>>, vector<1x8x128xbf16>
    %33 = vector.shape_cast %32 : vector<1x8x128xbf16> to vector<8x128xbf16>
    %34 = vector.shape_cast %28 : vector<8x128xbf16> to vector<1x8x128xbf16>
    tpu.vector_store %arg4[%31, %c0_14, %c0_15], %34 {strides = array<i32>} : memref<8x8x128xbf16, #tpu.memory_space<vmem>>, vector<1x8x128xbf16>,
    %c1_i32 = arith.constant 1 : i32
    %35 = arith.index_cast %c1_i32 : i32 to index
    %c0_16 = arith.constant 0 : index
    %c0_17 = arith.constant 0 : index
    %36 = vector.load %arg2[%35, %c0_16, %c0_17] : memref<8x8x512xbf16, #tpu.memory_space<vmem>>, vector<1x8x512xbf16>
    %37 = vector.shape_cast %36 : vector<1x8x512xbf16> to vector<8x512xbf16>
    %38 = arith.extf %37 : vector<8x512xbf16> to vector<8x512xf32>
    %c0_18 = arith.constant 0 : index
    %c0_19 = arith.constant 0 : index
    %39 = vector.load %arg5[%c0_18, %c0_19] : memref<8x128xbf16, #tpu.memory_space<vmem>>, vector<8x128xbf16>
    %c0_20 = arith.constant 0 : index
    %c0_21 = arith.constant 0 : index
    %40 = vector.load %arg3[%c0_20, %c0_21] : memref<128x512xbf16, #tpu.memory_space<vmem>>, vector<128x512xbf16>
    %cst_22 = arith.constant dense<0.000000e+00> : vector<8x512xf32>
    %41 = tpu.matmul %39, %40, %cst_22 {dimension_numbers = #tpu.dot_dimension_numbers<[1], [0], [0], [1], [0, 0, 1, 1], [], []>} : vector<8x128xbf16>, vector<128x512xbf16>, vector<8x512xf32> -> vector<8x512xf32>
    %42 = arith.addf %38, %41 : vector<8x512xf32>
    %43 = vector.extract_strided_slice %42 {offsets = [0, 0], sizes = [8, 384], strides = [1, 1]} : vector<8x512xf32> to vector<8x384xf32>
    %44 = arith.negf %43 : vector<8x384xf32>
    %45 = math.exp %44 : vector<8x384xf32>
    %cst_23 = arith.constant 1.000000e+00 : f32
    %46 = vector.broadcast %cst_23 : f32 to vector<8x384xf32>
    %47 = arith.addf %46, %45 : vector<8x384xf32>
    %48 = arith.divf %46, %47 : vector<8x384xf32>
    %49 = vector.extract_strided_slice %48 {offsets = [0, 0], sizes = [8, 128], strides = [1, 1]} : vector<8x384xf32> to vector<8x128xf32>
    %50 = vector.extract_strided_slice %48 {offsets = [0, 128], sizes = [8, 128], strides = [1, 1]} : vector<8x384xf32> to vector<8x128xf32>
    %51 = vector.extract_strided_slice %48 {offsets = [0, 256], sizes = [8, 128], strides = [1, 1]} : vector<8x384xf32> to vector<8x128xf32>
    %52 = vector.extract_strided_slice %42 {offsets = [0, 384], sizes = [8, 128], strides = [1, 1]} : vector<8x512xf32> to vector<8x128xf32>
    %53 = math.tanh %52 : vector<8x128xf32>
    %c0_24 = arith.constant 0 : index
    %c0_25 = arith.constant 0 : index
    %54 = vector.load %arg6[%c0_24, %c0_25] : memref<8x128xf32, #tpu.memory_space<vmem>>, vector<8x128xf32>
    %55 = arith.mulf %50, %54 : vector<8x128xf32>
    %56 = arith.mulf %49, %53 : vector<8x128xf32>
    %57 = arith.addf %55, %56 : vector<8x128xf32>
    %58 = math.tanh %57 : vector<8x128xf32>
    %59 = arith.mulf %51, %58 : vector<8x128xf32>
    %60 = arith.truncf %59 : vector<8x128xf32> to vector<8x128xbf16>
    %c0_26 = arith.constant 0 : index
    %c0_27 = arith.constant 0 : index
    %61 = vector.load %arg6[%c0_26, %c0_27] : memref<8x128xf32, #tpu.memory_space<vmem>>, vector<8x128xf32>
    tpu.vector_store %arg6[%c0_26, %c0_27], %57 {strides = array<i32>} : memref<8x128xf32, #tpu.memory_space<vmem>>, vector<8x128xf32>,
    %c0_28 = arith.constant 0 : index
    %c0_29 = arith.constant 0 : index
    %62 = vector.load %arg5[%c0_28, %c0_29] : memref<8x128xbf16, #tpu.memory_space<vmem>>, vector<8x128xbf16>
    tpu.vector_store %arg5[%c0_28, %c0_29], %60 {strides = array<i32>} : memref<8x128xbf16, #tpu.memory_space<vmem>>, vector<8x128xbf16>,
    %63 = arith.index_cast %c1_i32 : i32 to index
    %c0_30 = arith.constant 0 : index
    %c0_31 = arith.constant 0 : index
    %64 = vector.load %arg4[%63, %c0_30, %c0_31] : memref<8x8x128xbf16, #tpu.memory_space<vmem>>, vector<1x8x128xbf16>
    %65 = vector.shape_cast %64 : vector<1x8x128xbf16> to vector<8x128xbf16>
    %66 = vector.shape_cast %60 : vector<8x128xbf16> to vector<1x8x128xbf16>
    tpu.vector_store %arg4[%63, %c0_30, %c0_31], %66 {strides = array<i32>} : memref<8x8x128xbf16, #tpu.memory_space<vmem>>, vector<1x8x128xbf16>,
    %c2_i32 = arith.constant 2 : i32
    %67 = arith.index_cast %c2_i32 : i32 to index
    %c0_32 = arith.constant 0 : index
    %c0_33 = arith.constant 0 : index
    %68 = vector.load %arg2[%67, %c0_32, %c0_33] : memref<8x8x512xbf16, #tpu.memory_space<vmem>>, vector<1x8x512xbf16>
    %69 = vector.shape_cast %68 : vector<1x8x512xbf16> to vector<8x512xbf16>
    %70 = arith.extf %69 : vector<8x512xbf16> to vector<8x512xf32>
    %c0_34 = arith.constant 0 : index
    %c0_35 = arith.constant 0 : index
    %71 = vector.load %arg5[%c0_34, %c0_35] : memref<8x128xbf16, #tpu.memory_space<vmem>>, vector<8x128xbf16>
    %c0_36 = arith.constant 0 : index
    %c0_37 = arith.constant 0 : index
    %72 = vector.load %arg3[%c0_36, %c0_37] : memref<128x512xbf16, #tpu.memory_space<vmem>>, vector<128x512xbf16>
    %cst_38 = arith.constant dense<0.000000e+00> : vector<8x512xf32>
    %73 = tpu.matmul %71, %72, %cst_38 {dimension_numbers = #tpu.dot_dimension_numbers<[1], [0], [0], [1], [0, 0, 1, 1], [], []>} : vector<8x128xbf16>, vector<128x512xbf16>, vector<8x512xf32> -> vector<8x512xf32>
    %74 = arith.addf %70, %73 : vector<8x512xf32>
    %75 = vector.extract_strided_slice %74 {offsets = [0, 0], sizes = [8, 384], strides = [1, 1]} : vector<8x512xf32> to vector<8x384xf32>
    %76 = arith.negf %75 : vector<8x384xf32>
    %77 = math.exp %76 : vector<8x384xf32>
    %cst_39 = arith.constant 1.000000e+00 : f32
    %78 = vector.broadcast %cst_39 : f32 to vector<8x384xf32>
    %79 = arith.addf %78, %77 : vector<8x384xf32>
    %80 = arith.divf %78, %79 : vector<8x384xf32>
    %81 = vector.extract_strided_slice %80 {offsets = [0, 0], sizes = [8, 128], strides = [1, 1]} : vector<8x384xf32> to vector<8x128xf32>
    %82 = vector.extract_strided_slice %80 {offsets = [0, 128], sizes = [8, 128], strides = [1, 1]} : vector<8x384xf32> to vector<8x128xf32>
    %83 = vector.extract_strided_slice %80 {offsets = [0, 256], sizes = [8, 128], strides = [1, 1]} : vector<8x384xf32> to vector<8x128xf32>
    %84 = vector.extract_strided_slice %74 {offsets = [0, 384], sizes = [8, 128], strides = [1, 1]} : vector<8x512xf32> to vector<8x128xf32>
    %85 = math.tanh %84 : vector<8x128xf32>
    %c0_40 = arith.constant 0 : index
    %c0_41 = arith.constant 0 : index
    %86 = vector.load %arg6[%c0_40, %c0_41] : memref<8x128xf32, #tpu.memory_space<vmem>>, vector<8x128xf32>
    %87 = arith.mulf %82, %86 : vector<8x128xf32>
    %88 = arith.mulf %81, %85 : vector<8x128xf32>
    %89 = arith.addf %87, %88 : vector<8x128xf32>
    %90 = math.tanh %89 : vector<8x128xf32>
    %91 = arith.mulf %83, %90 : vector<8x128xf32>
    %92 = arith.truncf %91 : vector<8x128xf32> to vector<8x128xbf16>
    %c0_42 = arith.constant 0 : index
    %c0_43 = arith.constant 0 : index
    %93 = vector.load %arg6[%c0_42, %c0_43] : memref<8x128xf32, #tpu.memory_space<vmem>>, vector<8x128xf32>
    tpu.vector_store %arg6[%c0_42, %c0_43], %89 {strides = array<i32>} : memref<8x128xf32, #tpu.memory_space<vmem>>, vector<8x128xf32>,
    %c0_44 = arith.constant 0 : index
    %c0_45 = arith.constant 0 : index
    %94 = vector.load %arg5[%c0_44, %c0_45] : memref<8x128xbf16, #tpu.memory_space<vmem>>, vector<8x128xbf16>
    tpu.vector_store %arg5[%c0_44, %c0_45], %92 {strides = array<i32>} : memref<8x128xbf16, #tpu.memory_space<vmem>>, vector<8x128xbf16>,
    %95 = arith.index_cast %c2_i32 : i32 to index
    %c0_46 = arith.constant 0 : index
    %c0_47 = arith.constant 0 : index
    %96 = vector.load %arg4[%95, %c0_46, %c0_47] : memref<8x8x128xbf16, #tpu.memory_space<vmem>>, vector<1x8x128xbf16>
    %97 = vector.shape_cast %96 : vector<1x8x128xbf16> to vector<8x128xbf16>
    %98 = vector.shape_cast %92 : vector<8x128xbf16> to vector<1x8x128xbf16>
    tpu.vector_store %arg4[%95, %c0_46, %c0_47], %98 {strides = array<i32>} : memref<8x8x128xbf16, #tpu.memory_space<vmem>>, vector<1x8x128xbf16>,
    %c3_i32 = arith.constant 3 : i32
    %99 = arith.index_cast %c3_i32 : i32 to index
    %c0_48 = arith.constant 0 : index
    %c0_49 = arith.constant 0 : index
    %100 = vector.load %arg2[%99, %c0_48, %c0_49] : memref<8x8x512xbf16, #tpu.memory_space<vmem>>, vector<1x8x512xbf16>
    %101 = vector.shape_cast %100 : vector<1x8x512xbf16> to vector<8x512xbf16>
    %102 = arith.extf %101 : vector<8x512xbf16> to vector<8x512xf32>
    %c0_50 = arith.constant 0 : index
    %c0_51 = arith.constant 0 : index
    %103 = vector.load %arg5[%c0_50, %c0_51] : memref<8x128xbf16, #tpu.memory_space<vmem>>, vector<8x128xbf16>
    %c0_52 = arith.constant 0 : index
    %c0_53 = arith.constant 0 : index
    %104 = vector.load %arg3[%c0_52, %c0_53] : memref<128x512xbf16, #tpu.memory_space<vmem>>, vector<128x512xbf16>
    %cst_54 = arith.constant dense<0.000000e+00> : vector<8x512xf32>
    %105 = tpu.matmul %103, %104, %cst_54 {dimension_numbers = #tpu.dot_dimension_numbers<[1], [0], [0], [1], [0, 0, 1, 1], [], []>} : vector<8x128xbf16>, vector<128x512xbf16>, vector<8x512xf32> -> vector<8x512xf32>
    %106 = arith.addf %102, %105 : vector<8x512xf32>
    %107 = vector.extract_strided_slice %106 {offsets = [0, 0], sizes = [8, 384], strides = [1, 1]} : vector<8x512xf32> to vector<8x384xf32>
    %108 = arith.negf %107 : vector<8x384xf32>
    %109 = math.exp %108 : vector<8x384xf32>
    %cst_55 = arith.constant 1.000000e+00 : f32
    %110 = vector.broadcast %cst_55 : f32 to vector<8x384xf32>
    %111 = arith.addf %110, %109 : vector<8x384xf32>
    %112 = arith.divf %110, %111 : vector<8x384xf32>
    %113 = vector.extract_strided_slice %112 {offsets = [0, 0], sizes = [8, 128], strides = [1, 1]} : vector<8x384xf32> to vector<8x128xf32>
    %114 = vector.extract_strided_slice %112 {offsets = [0, 128], sizes = [8, 128], strides = [1, 1]} : vector<8x384xf32> to vector<8x128xf32>
    %115 = vector.extract_strided_slice %112 {offsets = [0, 256], sizes = [8, 128], strides = [1, 1]} : vector<8x384xf32> to vector<8x128xf32>
    %116 = vector.extract_strided_slice %106 {offsets = [0, 384], sizes = [8, 128], strides = [1, 1]} : vector<8x512xf32> to vector<8x128xf32>
    %117 = math.tanh %116 : vector<8x128xf32>
    %c0_56 = arith.constant 0 : index
    %c0_57 = arith.constant 0 : index
    %118 = vector.load %arg6[%c0_56, %c0_57] : memref<8x128xf32, #tpu.memory_space<vmem>>, vector<8x128xf32>
    %119 = arith.mulf %114, %118 : vector<8x128xf32>
    %120 = arith.mulf %113, %117 : vector<8x128xf32>
    %121 = arith.addf %119, %120 : vector<8x128xf32>
    %122 = math.tanh %121 : vector<8x128xf32>
    %123 = arith.mulf %115, %122 : vector<8x128xf32>
    %124 = arith.truncf %123 : vector<8x128xf32> to vector<8x128xbf16>
    %c0_58 = arith.constant 0 : index
    %c0_59 = arith.constant 0 : index
    %125 = vector.load %arg6[%c0_58, %c0_59] : memref<8x128xf32, #tpu.memory_space<vmem>>, vector<8x128xf32>
    tpu.vector_store %arg6[%c0_58, %c0_59], %121 {strides = array<i32>} : memref<8x128xf32, #tpu.memory_space<vmem>>, vector<8x128xf32>,
    %c0_60 = arith.constant 0 : index
    %c0_61 = arith.constant 0 : index
    %126 = vector.load %arg5[%c0_60, %c0_61] : memref<8x128xbf16, #tpu.memory_space<vmem>>, vector<8x128xbf16>
    tpu.vector_store %arg5[%c0_60, %c0_61], %124 {strides = array<i32>} : memref<8x128xbf16, #tpu.memory_space<vmem>>, vector<8x128xbf16>,
    %127 = arith.index_cast %c3_i32 : i32 to index
    %c0_62 = arith.constant 0 : index
    %c0_63 = arith.constant 0 : index
    %128 = vector.load %arg4[%127, %c0_62, %c0_63] : memref<8x8x128xbf16, #tpu.memory_space<vmem>>, vector<1x8x128xbf16>
    %129 = vector.shape_cast %128 : vector<1x8x128xbf16> to vector<8x128xbf16>
    %130 = vector.shape_cast %124 : vector<8x128xbf16> to vector<1x8x128xbf16>
    tpu.vector_store %arg4[%127, %c0_62, %c0_63], %130 {strides = array<i32>} : memref<8x8x128xbf16, #tpu.memory_space<vmem>>, vector<1x8x128xbf16>,
    %c4_i32 = arith.constant 4 : i32
    %131 = arith.index_cast %c4_i32 : i32 to index
    %c0_64 = arith.constant 0 : index
    %c0_65 = arith.constant 0 : index
    %132 = vector.load %arg2[%131, %c0_64, %c0_65] : memref<8x8x512xbf16, #tpu.memory_space<vmem>>, vector<1x8x512xbf16>
    %133 = vector.shape_cast %132 : vector<1x8x512xbf16> to vector<8x512xbf16>
    %134 = arith.extf %133 : vector<8x512xbf16> to vector<8x512xf32>
    %c0_66 = arith.constant 0 : index
    %c0_67 = arith.constant 0 : index
    %135 = vector.load %arg5[%c0_66, %c0_67] : memref<8x128xbf16, #tpu.memory_space<vmem>>, vector<8x128xbf16>
    %c0_68 = arith.constant 0 : index
    %c0_69 = arith.constant 0 : index
    %136 = vector.load %arg3[%c0_68, %c0_69] : memref<128x512xbf16, #tpu.memory_space<vmem>>, vector<128x512xbf16>
    %cst_70 = arith.constant dense<0.000000e+00> : vector<8x512xf32>
    %137 = tpu.matmul %135, %136, %cst_70 {dimension_numbers = #tpu.dot_dimension_numbers<[1], [0], [0], [1], [0, 0, 1, 1], [], []>} : vector<8x128xbf16>, vector<128x512xbf16>, vector<8x512xf32> -> vector<8x512xf32>
    %138 = arith.addf %134, %137 : vector<8x512xf32>
    %139 = vector.extract_strided_slice %138 {offsets = [0, 0], sizes = [8, 384], strides = [1, 1]} : vector<8x512xf32> to vector<8x384xf32>
    %140 = arith.negf %139 : vector<8x384xf32>
    %141 = math.exp %140 : vector<8x384xf32>
    %cst_71 = arith.constant 1.000000e+00 : f32
    %142 = vector.broadcast %cst_71 : f32 to vector<8x384xf32>
    %143 = arith.addf %142, %141 : vector<8x384xf32>
    %144 = arith.divf %142, %143 : vector<8x384xf32>
    %145 = vector.extract_strided_slice %144 {offsets = [0, 0], sizes = [8, 128], strides = [1, 1]} : vector<8x384xf32> to vector<8x128xf32>
    %146 = vector.extract_strided_slice %144 {offsets = [0, 128], sizes = [8, 128], strides = [1, 1]} : vector<8x384xf32> to vector<8x128xf32>
    %147 = vector.extract_strided_slice %144 {offsets = [0, 256], sizes = [8, 128], strides = [1, 1]} : vector<8x384xf32> to vector<8x128xf32>
    %148 = vector.extract_strided_slice %138 {offsets = [0, 384], sizes = [8, 128], strides = [1, 1]} : vector<8x512xf32> to vector<8x128xf32>
    %149 = math.tanh %148 : vector<8x128xf32>
    %c0_72 = arith.constant 0 : index
    %c0_73 = arith.constant 0 : index
    %150 = vector.load %arg6[%c0_72, %c0_73] : memref<8x128xf32, #tpu.memory_space<vmem>>, vector<8x128xf32>
    %151 = arith.mulf %146, %150 : vector<8x128xf32>
    %152 = arith.mulf %145, %149 : vector<8x128xf32>
    %153 = arith.addf %151, %152 : vector<8x128xf32>
    %154 = math.tanh %153 : vector<8x128xf32>
    %155 = arith.mulf %147, %154 : vector<8x128xf32>
    %156 = arith.truncf %155 : vector<8x128xf32> to vector<8x128xbf16>
    %c0_74 = arith.constant 0 : index
    %c0_75 = arith.constant 0 : index
    %157 = vector.load %arg6[%c0_74, %c0_75] : memref<8x128xf32, #tpu.memory_space<vmem>>, vector<8x128xf32>
    tpu.vector_store %arg6[%c0_74, %c0_75], %153 {strides = array<i32>} : memref<8x128xf32, #tpu.memory_space<vmem>>, vector<8x128xf32>,
    %c0_76 = arith.constant 0 : index
    %c0_77 = arith.constant 0 : index
    %158 = vector.load %arg5[%c0_76, %c0_77] : memref<8x128xbf16, #tpu.memory_space<vmem>>, vector<8x128xbf16>
    tpu.vector_store %arg5[%c0_76, %c0_77], %156 {strides = array<i32>} : memref<8x128xbf16, #tpu.memory_space<vmem>>, vector<8x128xbf16>,
    %159 = arith.index_cast %c4_i32 : i32 to index
    %c0_78 = arith.constant 0 : index
    %c0_79 = arith.constant 0 : index
    %160 = vector.load %arg4[%159, %c0_78, %c0_79] : memref<8x8x128xbf16, #tpu.memory_space<vmem>>, vector<1x8x128xbf16>
    %161 = vector.shape_cast %160 : vector<1x8x128xbf16> to vector<8x128xbf16>
    %162 = vector.shape_cast %156 : vector<8x128xbf16> to vector<1x8x128xbf16>
    tpu.vector_store %arg4[%159, %c0_78, %c0_79], %162 {strides = array<i32>} : memref<8x8x128xbf16, #tpu.memory_space<vmem>>, vector<1x8x128xbf16>,
    %c5_i32 = arith.constant 5 : i32
    %163 = arith.index_cast %c5_i32 : i32 to index
    %c0_80 = arith.constant 0 : index
    %c0_81 = arith.constant 0 : index
    %164 = vector.load %arg2[%163, %c0_80, %c0_81] : memref<8x8x512xbf16, #tpu.memory_space<vmem>>, vector<1x8x512xbf16>
    %165 = vector.shape_cast %164 : vector<1x8x512xbf16> to vector<8x512xbf16>
    %166 = arith.extf %165 : vector<8x512xbf16> to vector<8x512xf32>
    %c0_82 = arith.constant 0 : index
    %c0_83 = arith.constant 0 : index
    %167 = vector.load %arg5[%c0_82, %c0_83] : memref<8x128xbf16, #tpu.memory_space<vmem>>, vector<8x128xbf16>
    %c0_84 = arith.constant 0 : index
    %c0_85 = arith.constant 0 : index
    %168 = vector.load %arg3[%c0_84, %c0_85] : memref<128x512xbf16, #tpu.memory_space<vmem>>, vector<128x512xbf16>
    %cst_86 = arith.constant dense<0.000000e+00> : vector<8x512xf32>
    %169 = tpu.matmul %167, %168, %cst_86 {dimension_numbers = #tpu.dot_dimension_numbers<[1], [0], [0], [1], [0, 0, 1, 1], [], []>} : vector<8x128xbf16>, vector<128x512xbf16>, vector<8x512xf32> -> vector<8x512xf32>
    %170 = arith.addf %166, %169 : vector<8x512xf32>
    %171 = vector.extract_strided_slice %170 {offsets = [0, 0], sizes = [8, 384], strides = [1, 1]} : vector<8x512xf32> to vector<8x384xf32>
    %172 = arith.negf %171 : vector<8x384xf32>
    %173 = math.exp %172 : vector<8x384xf32>
    %cst_87 = arith.constant 1.000000e+00 : f32
    %174 = vector.broadcast %cst_87 : f32 to vector<8x384xf32>
    %175 = arith.addf %174, %173 : vector<8x384xf32>
    %176 = arith.divf %174, %175 : vector<8x384xf32>
    %177 = vector.extract_strided_slice %176 {offsets = [0, 0], sizes = [8, 128], strides = [1, 1]} : vector<8x384xf32> to vector<8x128xf32>
    %178 = vector.extract_strided_slice %176 {offsets = [0, 128], sizes = [8, 128], strides = [1, 1]} : vector<8x384xf32> to vector<8x128xf32>
    %179 = vector.extract_strided_slice %176 {offsets = [0, 256], sizes = [8, 128], strides = [1, 1]} : vector<8x384xf32> to vector<8x128xf32>
    %180 = vector.extract_strided_slice %170 {offsets = [0, 384], sizes = [8, 128], strides = [1, 1]} : vector<8x512xf32> to vector<8x128xf32>
    %181 = math.tanh %180 : vector<8x128xf32>
    %c0_88 = arith.constant 0 : index
    %c0_89 = arith.constant 0 : index
    %182 = vector.load %arg6[%c0_88, %c0_89] : memref<8x128xf32, #tpu.memory_space<vmem>>, vector<8x128xf32>
    %183 = arith.mulf %178, %182 : vector<8x128xf32>
    %184 = arith.mulf %177, %181 : vector<8x128xf32>
    %185 = arith.addf %183, %184 : vector<8x128xf32>
    %186 = math.tanh %185 : vector<8x128xf32>
    %187 = arith.mulf %179, %186 : vector<8x128xf32>
    %188 = arith.truncf %187 : vector<8x128xf32> to vector<8x128xbf16>
    %c0_90 = arith.constant 0 : index
    %c0_91 = arith.constant 0 : index
    %189 = vector.load %arg6[%c0_90, %c0_91] : memref<8x128xf32, #tpu.memory_space<vmem>>, vector<8x128xf32>
    tpu.vector_store %arg6[%c0_90, %c0_91], %185 {strides = array<i32>} : memref<8x128xf32, #tpu.memory_space<vmem>>, vector<8x128xf32>,
    %c0_92 = arith.constant 0 : index
    %c0_93 = arith.constant 0 : index
    %190 = vector.load %arg5[%c0_92, %c0_93] : memref<8x128xbf16, #tpu.memory_space<vmem>>, vector<8x128xbf16>
    tpu.vector_store %arg5[%c0_92, %c0_93], %188 {strides = array<i32>} : memref<8x128xbf16, #tpu.memory_space<vmem>>, vector<8x128xbf16>,
    %191 = arith.index_cast %c5_i32 : i32 to index
    %c0_94 = arith.constant 0 : index
    %c0_95 = arith.constant 0 : index
    %192 = vector.load %arg4[%191, %c0_94, %c0_95] : memref<8x8x128xbf16, #tpu.memory_space<vmem>>, vector<1x8x128xbf16>
    %193 = vector.shape_cast %192 : vector<1x8x128xbf16> to vector<8x128xbf16>
    %194 = vector.shape_cast %188 : vector<8x128xbf16> to vector<1x8x128xbf16>
    tpu.vector_store %arg4[%191, %c0_94, %c0_95], %194 {strides = array<i32>} : memref<8x8x128xbf16, #tpu.memory_space<vmem>>, vector<1x8x128xbf16>,
    %c6_i32 = arith.constant 6 : i32
    %195 = arith.index_cast %c6_i32 : i32 to index
    %c0_96 = arith.constant 0 : index
    %c0_97 = arith.constant 0 : index
    %196 = vector.load %arg2[%195, %c0_96, %c0_97] : memref<8x8x512xbf16, #tpu.memory_space<vmem>>, vector<1x8x512xbf16>
    %197 = vector.shape_cast %196 : vector<1x8x512xbf16> to vector<8x512xbf16>
    %198 = arith.extf %197 : vector<8x512xbf16> to vector<8x512xf32>
    %c0_98 = arith.constant 0 : index
    %c0_99 = arith.constant 0 : index
    %199 = vector.load %arg5[%c0_98, %c0_99] : memref<8x128xbf16, #tpu.memory_space<vmem>>, vector<8x128xbf16>
    %c0_100 = arith.constant 0 : index
    %c0_101 = arith.constant 0 : index
    %200 = vector.load %arg3[%c0_100, %c0_101] : memref<128x512xbf16, #tpu.memory_space<vmem>>, vector<128x512xbf16>
    %cst_102 = arith.constant dense<0.000000e+00> : vector<8x512xf32>
    %201 = tpu.matmul %199, %200, %cst_102 {dimension_numbers = #tpu.dot_dimension_numbers<[1], [0], [0], [1], [0, 0, 1, 1], [], []>} : vector<8x128xbf16>, vector<128x512xbf16>, vector<8x512xf32> -> vector<8x512xf32>
    %202 = arith.addf %198, %201 : vector<8x512xf32>
    %203 = vector.extract_strided_slice %202 {offsets = [0, 0], sizes = [8, 384], strides = [1, 1]} : vector<8x512xf32> to vector<8x384xf32>
    %204 = arith.negf %203 : vector<8x384xf32>
    %205 = math.exp %204 : vector<8x384xf32>
    %cst_103 = arith.constant 1.000000e+00 : f32
    %206 = vector.broadcast %cst_103 : f32 to vector<8x384xf32>
    %207 = arith.addf %206, %205 : vector<8x384xf32>
    %208 = arith.divf %206, %207 : vector<8x384xf32>
    %209 = vector.extract_strided_slice %208 {offsets = [0, 0], sizes = [8, 128], strides = [1, 1]} : vector<8x384xf32> to vector<8x128xf32>
    %210 = vector.extract_strided_slice %208 {offsets = [0, 128], sizes = [8, 128], strides = [1, 1]} : vector<8x384xf32> to vector<8x128xf32>
    %211 = vector.extract_strided_slice %208 {offsets = [0, 256], sizes = [8, 128], strides = [1, 1]} : vector<8x384xf32> to vector<8x128xf32>
    %212 = vector.extract_strided_slice %202 {offsets = [0, 384], sizes = [8, 128], strides = [1, 1]} : vector<8x512xf32> to vector<8x128xf32>
    %213 = math.tanh %212 : vector<8x128xf32>
    %c0_104 = arith.constant 0 : index
    %c0_105 = arith.constant 0 : index
    %214 = vector.load %arg6[%c0_104, %c0_105] : memref<8x128xf32, #tpu.memory_space<vmem>>, vector<8x128xf32>
    %215 = arith.mulf %210, %214 : vector<8x128xf32>
    %216 = arith.mulf %209, %213 : vector<8x128xf32>
    %217 = arith.addf %215, %216 : vector<8x128xf32>
    %218 = math.tanh %217 : vector<8x128xf32>
    %219 = arith.mulf %211, %218 : vector<8x128xf32>
    %220 = arith.truncf %219 : vector<8x128xf32> to vector<8x128xbf16>
    %c0_106 = arith.constant 0 : index
    %c0_107 = arith.constant 0 : index
    %221 = vector.load %arg6[%c0_106, %c0_107] : memref<8x128xf32, #tpu.memory_space<vmem>>, vector<8x128xf32>
    tpu.vector_store %arg6[%c0_106, %c0_107], %217 {strides = array<i32>} : memref<8x128xf32, #tpu.memory_space<vmem>>, vector<8x128xf32>,
    %c0_108 = arith.constant 0 : index
    %c0_109 = arith.constant 0 : index
    %222 = vector.load %arg5[%c0_108, %c0_109] : memref<8x128xbf16, #tpu.memory_space<vmem>>, vector<8x128xbf16>
    tpu.vector_store %arg5[%c0_108, %c0_109], %220 {strides = array<i32>} : memref<8x128xbf16, #tpu.memory_space<vmem>>, vector<8x128xbf16>,
    %223 = arith.index_cast %c6_i32 : i32 to index
    %c0_110 = arith.constant 0 : index
    %c0_111 = arith.constant 0 : index
    %224 = vector.load %arg4[%223, %c0_110, %c0_111] : memref<8x8x128xbf16, #tpu.memory_space<vmem>>, vector<1x8x128xbf16>
    %225 = vector.shape_cast %224 : vector<1x8x128xbf16> to vector<8x128xbf16>
    %226 = vector.shape_cast %220 : vector<8x128xbf16> to vector<1x8x128xbf16>
    tpu.vector_store %arg4[%223, %c0_110, %c0_111], %226 {strides = array<i32>} : memref<8x8x128xbf16, #tpu.memory_space<vmem>>, vector<1x8x128xbf16>,
    %c7_i32 = arith.constant 7 : i32
    %227 = arith.index_cast %c7_i32 : i32 to index
    %c0_112 = arith.constant 0 : index
    %c0_113 = arith.constant 0 : index
    %228 = vector.load %arg2[%227, %c0_112, %c0_113] : memref<8x8x512xbf16, #tpu.memory_space<vmem>>, vector<1x8x512xbf16>
    %229 = vector.shape_cast %228 : vector<1x8x512xbf16> to vector<8x512xbf16>
    %230 = arith.extf %229 : vector<8x512xbf16> to vector<8x512xf32>
    %c0_114 = arith.constant 0 : index
    %c0_115 = arith.constant 0 : index
    %231 = vector.load %arg5[%c0_114, %c0_115] : memref<8x128xbf16, #tpu.memory_space<vmem>>, vector<8x128xbf16>
    %c0_116 = arith.constant 0 : index
    %c0_117 = arith.constant 0 : index
    %232 = vector.load %arg3[%c0_116, %c0_117] : memref<128x512xbf16, #tpu.memory_space<vmem>>, vector<128x512xbf16>
    %cst_118 = arith.constant dense<0.000000e+00> : vector<8x512xf32>
    %233 = tpu.matmul %231, %232, %cst_118 {dimension_numbers = #tpu.dot_dimension_numbers<[1], [0], [0], [1], [0, 0, 1, 1], [], []>} : vector<8x128xbf16>, vector<128x512xbf16>, vector<8x512xf32> -> vector<8x512xf32>
    %234 = arith.addf %230, %233 : vector<8x512xf32>
    %235 = vector.extract_strided_slice %234 {offsets = [0, 0], sizes = [8, 384], strides = [1, 1]} : vector<8x512xf32> to vector<8x384xf32>
    %236 = arith.negf %235 : vector<8x384xf32>
    %237 = math.exp %236 : vector<8x384xf32>
    %cst_119 = arith.constant 1.000000e+00 : f32
    %238 = vector.broadcast %cst_119 : f32 to vector<8x384xf32>
    %239 = arith.addf %238, %237 : vector<8x384xf32>
    %240 = arith.divf %238, %239 : vector<8x384xf32>
    %241 = vector.extract_strided_slice %240 {offsets = [0, 0], sizes = [8, 128], strides = [1, 1]} : vector<8x384xf32> to vector<8x128xf32>
    %242 = vector.extract_strided_slice %240 {offsets = [0, 128], sizes = [8, 128], strides = [1, 1]} : vector<8x384xf32> to vector<8x128xf32>
    %243 = vector.extract_strided_slice %240 {offsets = [0, 256], sizes = [8, 128], strides = [1, 1]} : vector<8x384xf32> to vector<8x128xf32>
    %244 = vector.extract_strided_slice %234 {offsets = [0, 384], sizes = [8, 128], strides = [1, 1]} : vector<8x512xf32> to vector<8x128xf32>
    %245 = math.tanh %244 : vector<8x128xf32>
    %c0_120 = arith.constant 0 : index
    %c0_121 = arith.constant 0 : index
    %246 = vector.load %arg6[%c0_120, %c0_121] : memref<8x128xf32, #tpu.memory_space<vmem>>, vector<8x128xf32>
    %247 = arith.mulf %242, %246 : vector<8x128xf32>
    %248 = arith.mulf %241, %245 : vector<8x128xf32>
    %249 = arith.addf %247, %248 : vector<8x128xf32>
    %250 = math.tanh %249 : vector<8x128xf32>
    %251 = arith.mulf %243, %250 : vector<8x128xf32>
    %252 = arith.truncf %251 : vector<8x128xf32> to vector<8x128xbf16>
    %c0_122 = arith.constant 0 : index
    %c0_123 = arith.constant 0 : index
    %253 = vector.load %arg6[%c0_122, %c0_123] : memref<8x128xf32, #tpu.memory_space<vmem>>, vector<8x128xf32>
    tpu.vector_store %arg6[%c0_122, %c0_123], %249 {strides = array<i32>} : memref<8x128xf32, #tpu.memory_space<vmem>>, vector<8x128xf32>,
    %c0_124 = arith.constant 0 : index
    %c0_125 = arith.constant 0 : index
    %254 = vector.load %arg5[%c0_124, %c0_125] : memref<8x128xbf16, #tpu.memory_space<vmem>>, vector<8x128xbf16>
    tpu.vector_store %arg5[%c0_124, %c0_125], %252 {strides = array<i32>} : memref<8x128xbf16, #tpu.memory_space<vmem>>, vector<8x128xbf16>,
    %255 = arith.index_cast %c7_i32 : i32 to index
    %c0_126 = arith.constant 0 : index
    %c0_127 = arith.constant 0 : index
    %256 = vector.load %arg4[%255, %c0_126, %c0_127] : memref<8x8x128xbf16, #tpu.memory_space<vmem>>, vector<1x8x128xbf16>
    %257 = vector.shape_cast %256 : vector<1x8x128xbf16> to vector<8x128xbf16>
    %258 = vector.shape_cast %252 : vector<8x128xbf16> to vector<1x8x128xbf16>
    tpu.vector_store %arg4[%255, %c0_126, %c0_127], %258 {strides = array<i32>} : memref<8x8x128xbf16, #tpu.memory_space<vmem>>, vector<1x8x128xbf16>,
    %c8_i32 = arith.constant 8 : i32
    return
  }
  func.func @transform_0(%arg0: i32, %arg1: i32) -> (i32, i32, i32) {
    %c0_i32 = arith.constant 0 : i32
    %c0_i32_0 = arith.constant 0 : i32
    return %arg1, %arg0, %c0_i32 : i32, i32, i32
  }
  func.func @transform_1(%arg0: i32, %arg1: i32) -> (i32, i32) {
    %c0_i32 = arith.constant 0 : i32
    %c0_i32_0 = arith.constant 0 : i32
    %c0_i32_1 = arith.constant 0 : i32
    return %c0_i32, %c0_i32_0 : i32, i32
  }
  func.func @transform_2(%arg0: i32, %arg1: i32) -> (i32, i32, i32) {
    %c0_i32 = arith.constant 0 : i32
    %c0_i32_0 = arith.constant 0 : i32
    return %arg1, %arg0, %c0_i32 : i32, i32, i32
  }
}

module attributes {stable_mosaic.version = 11 : i64} {
  func.func @_matmul_bias_kernel(%arg0: i32, %arg1: i32, %arg2: memref<64x128xbf16, #tpu.memory_space<vmem>>, %arg3: memref<128x512xbf16, #tpu.memory_space<vmem>>, %arg4: memref<1x512xf32, #tpu.memory_space<vmem>>, %arg5: memref<64x512xbf16, #tpu.memory_space<vmem>>) attributes {dimension_semantics = [#tpu.dimension_semantics<parallel>, #tpu.dimension_semantics<parallel>], iteration_bounds = array<i64: 1, 1>, scalar_prefetch = 0 : i64, scratch_operands = 0 : i64, tpu.core_type = #tpu.core_type<tc>, window_params = [{transform_indices = @transform_0, window_bounds = array<i64: 64, 128>}, {pipeline_mode = #tpu.pipeline_mode<synchronous>, transform_indices = @transform_1, window_bounds = array<i64: 128, 512>}, {pipeline_mode = #tpu.pipeline_mode<synchronous>, transform_indices = @transform_2, window_bounds = array<i64: 1, 512>}, {transform_indices = @transform_3, window_bounds = array<i64: 64, 512>}]} {
    %c0 = arith.constant 0 : index
    %c0_0 = arith.constant 0 : index
    %0 = vector.load %arg2[%c0, %c0_0] : memref<64x128xbf16, #tpu.memory_space<vmem>>, vector<64x128xbf16>
    %c0_1 = arith.constant 0 : index
    %c0_2 = arith.constant 0 : index
    %1 = vector.load %arg3[%c0_1, %c0_2] : memref<128x512xbf16, #tpu.memory_space<vmem>>, vector<128x512xbf16>
    %cst = arith.constant dense<0.000000e+00> : vector<64x512xf32>
    %2 = tpu.matmul %0, %1, %cst {dimension_numbers = #tpu.dot_dimension_numbers<[1], [0], [0], [1], [0, 0, 1, 1], [], []>} : vector<64x128xbf16>, vector<128x512xbf16>, vector<64x512xf32> -> vector<64x512xf32>
    %c0_3 = arith.constant 0 : index
    %c0_4 = arith.constant 0 : index
    %3 = vector.load %arg4[%c0_3, %c0_4] : memref<1x512xf32, #tpu.memory_space<vmem>>, vector<1x512xf32>
    %4 = vector.broadcast %3 : vector<1x512xf32> to vector<64x512xf32>
    %5 = arith.addf %2, %4 : vector<64x512xf32>
    %6 = arith.truncf %5 : vector<64x512xf32> to vector<64x512xbf16>
    %c0_5 = arith.constant 0 : index
    %c0_6 = arith.constant 0 : index
    %7 = vector.load %arg5[%c0_5, %c0_6] : memref<64x512xbf16, #tpu.memory_space<vmem>>, vector<64x512xbf16>
    tpu.vector_store %arg5[%c0_5, %c0_6], %6 {strides = array<i32>} : memref<64x512xbf16, #tpu.memory_space<vmem>>, vector<64x512xbf16>,
    return
  }
  func.func @transform_0(%arg0: i32, %arg1: i32) -> (i32, i32) {
    %c0_i32 = arith.constant 0 : i32
    %c0_i32_0 = arith.constant 0 : i32
    return %arg1, %c0_i32 : i32, i32
  }
  func.func @transform_1(%arg0: i32, %arg1: i32) -> (i32, i32) {
    %c0_i32 = arith.constant 0 : i32
    %c0_i32_0 = arith.constant 0 : i32
    return %c0_i32, %arg0 : i32, i32
  }
  func.func @transform_2(%arg0: i32, %arg1: i32) -> (i32, i32) {
    %c0_i32 = arith.constant 0 : i32
    %c0_i32_0 = arith.constant 0 : i32
    return %c0_i32, %arg0 : i32, i32
  }
  func.func @transform_3(%arg0: i32, %arg1: i32) -> (i32, i32) {
    %c0_i32 = arith.constant 0 : i32
    return %arg1, %arg0 : i32, i32
  }
}

module attributes {stable_mosaic.version = 11 : i64} {
  func.func @_matmul_bias_kernel(%arg0: i32, %arg1: i32, %arg2: memref<64x128xbf16, #tpu.memory_space<vmem>>, %arg3: memref<128x128xbf16, #tpu.memory_space<vmem>>, %arg4: memref<1x128xf32, #tpu.memory_space<vmem>>, %arg5: memref<64x128xf32, #tpu.memory_space<vmem>>) attributes {dimension_semantics = [#tpu.dimension_semantics<parallel>, #tpu.dimension_semantics<parallel>], iteration_bounds = array<i64: 1, 1>, scalar_prefetch = 0 : i64, scratch_operands = 0 : i64, tpu.core_type = #tpu.core_type<tc>, window_params = [{transform_indices = @transform_0, window_bounds = array<i64: 64, 128>}, {pipeline_mode = #tpu.pipeline_mode<synchronous>, transform_indices = @transform_1, window_bounds = array<i64: 128, 128>}, {pipeline_mode = #tpu.pipeline_mode<synchronous>, transform_indices = @transform_2, window_bounds = array<i64: 1, 128>}, {transform_indices = @transform_3, window_bounds = array<i64: 64, 128>}]} {
    %c0 = arith.constant 0 : index
    %c0_0 = arith.constant 0 : index
    %0 = vector.load %arg2[%c0, %c0_0] : memref<64x128xbf16, #tpu.memory_space<vmem>>, vector<64x128xbf16>
    %c0_1 = arith.constant 0 : index
    %c0_2 = arith.constant 0 : index
    %1 = vector.load %arg3[%c0_1, %c0_2] : memref<128x128xbf16, #tpu.memory_space<vmem>>, vector<128x128xbf16>
    %cst = arith.constant dense<0.000000e+00> : vector<64x128xf32>
    %2 = tpu.matmul %0, %1, %cst {dimension_numbers = #tpu.dot_dimension_numbers<[1], [0], [0], [1], [0, 0, 1, 1], [], []>} : vector<64x128xbf16>, vector<128x128xbf16>, vector<64x128xf32> -> vector<64x128xf32>
    %c0_3 = arith.constant 0 : index
    %c0_4 = arith.constant 0 : index
    %3 = vector.load %arg4[%c0_3, %c0_4] : memref<1x128xf32, #tpu.memory_space<vmem>>, vector<1x128xf32>
    %4 = vector.broadcast %3 : vector<1x128xf32> to vector<64x128xf32>
    %5 = arith.addf %2, %4 : vector<64x128xf32>
    %c0_5 = arith.constant 0 : index
    %c0_6 = arith.constant 0 : index
    %6 = vector.load %arg5[%c0_5, %c0_6] : memref<64x128xf32, #tpu.memory_space<vmem>>, vector<64x128xf32>
    tpu.vector_store %arg5[%c0_5, %c0_6], %5 {strides = array<i32>} : memref<64x128xf32, #tpu.memory_space<vmem>>, vector<64x128xf32>,
    return
  }
  func.func @transform_0(%arg0: i32, %arg1: i32) -> (i32, i32) {
    %c0_i32 = arith.constant 0 : i32
    %c0_i32_0 = arith.constant 0 : i32
    return %arg1, %c0_i32 : i32, i32
  }
  func.func @transform_1(%arg0: i32, %arg1: i32) -> (i32, i32) {
    %c0_i32 = arith.constant 0 : i32
    %c0_i32_0 = arith.constant 0 : i32
    return %c0_i32, %arg0 : i32, i32
  }
  func.func @transform_2(%arg0: i32, %arg1: i32) -> (i32, i32) {
    %c0_i32 = arith.constant 0 : i32
    %c0_i32_0 = arith.constant 0 : i32
    return %c0_i32, %arg0 : i32, i32
  }
  func.func @transform_3(%arg0: i32, %arg1: i32) -> (i32, i32) {
    %c0_i32 = arith.constant 0 : i32
    return %arg1, %arg0 : i32, i32
  }
}

</mosaic_0001>

<llo_original>
// kernel: rnn_seq_note_forward.9
$region0: #{rnn_seq_note_forward.9}
  #allocation0 [shape = 'u32[]', space=smem, size = 0x4, offset = 0x4, fixed_abs, tag = 'smem constant byte address 0x4 - core index']
  #allocation1 [shape = 'u32[144,128]{1,0:T(1,128)}', space=vmem, size = 0x12000, scoped, tag = 'internal scratch']
  %s0 = inlined_call_operand.vmem [shape: bf16[64,128], index: 0, kind: input, shape index: {}]
  %s1 = inlined_call_operand.vmem [shape: bf16[128,128], index: 1, kind: input, shape index: {}]
  %s2 = inlined_call_operand.vmem [shape: f32[1,128], index: 2, kind: input, shape index: {}]
  %s3 = inlined_call_operand.vmem [shape: f32[64,128], index: 3, kind: output, shape index: {}]
  %s4 = sld [smem:[#allocation0]]
  $region22: #{rnn_seq_note_forward.9} parent=0
    _
  %s6 = ssub.s32 1, %s4
  %s7 = scalar_select 0, %s6, %s4
  // Predicated region
  $region2: #{rnn_seq_note_forward.9} parent=0 // pred_check
    _
  $region3: #{rnn_seq_note_forward.9} parent=0 // pred_check_branch
    %9 = sbr.rel (0) target = $region5
  $region4: #{rnn_seq_note_forward.9} parent=0 // pred_region
    _
  $region5: #{rnn_seq_note_forward.9} parent=0 // pred_fallthru
    _
  // Predicated region
  $region6: #{rnn_seq_note_forward.9} parent=0 // pred_check
    _
  $region7: #{rnn_seq_note_forward.9} parent=0 // pred_check_branch
    %11 = sbr.rel (0) target = $region9
  $region8: #{rnn_seq_note_forward.9} parent=0 // pred_region
    _
  $region9: #{rnn_seq_note_forward.9} parent=0 // pred_fallthru
    _
  // Predicated region
  $region10: #{rnn_seq_note_forward.9} parent=0 // pred_check
    _
  $region11: #{rnn_seq_note_forward.9} parent=0 // pred_check_branch
    %13 = sbr.rel (0) target = $region13
  $region12: #{rnn_seq_note_forward.9} parent=0 // pred_region
    _
  $region13: #{rnn_seq_note_forward.9} parent=0 // pred_fallthru
    _
  %v15 = vld [vmem:[%s0] sm:$0xf]
  %v16 = vld [vmem:[%s0 + $0x4] sm:$0xf]
  %v17 = vld [vmem:[%s0 + $0x8] sm:$0xf]
  %v18 = vld [vmem:[%s0 + $0xc] sm:$0xf]
  %v19 = vld [vmem:[%s0 + $0x10] sm:$0xf]
  %v20 = vld [vmem:[%s0 + $0x14] sm:$0xf]
  %v21 = vld [vmem:[%s0 + $0x18] sm:$0xf]
  %v22 = vld [vmem:[%s0 + $0x1c] sm:$0xf]
  %v23 = vld [vmem:[%s1] sm:$0xf]
  %v24 = vld [vmem:[%s1 + $0x4] sm:$0xf]
  %v25 = vld [vmem:[%s1 + $0x8] sm:$0xf]
  %v26 = vld [vmem:[%s1 + $0xc] sm:$0xf]
  %v27 = vld [vmem:[%s1 + $0x10] sm:$0xf]
  %v28 = vld [vmem:[%s1 + $0x14] sm:$0xf]
  %v29 = vld [vmem:[%s1 + $0x18] sm:$0xf]
  %v30 = vld [vmem:[%s1 + $0x1c] sm:$0xf]
  %v31 = vld [vmem:[%s1 + $0x20] sm:$0xf]
  %v32 = vld [vmem:[%s1 + $0x24] sm:$0xf]
  %v33 = vld [vmem:[%s1 + $0x28] sm:$0xf]
  %v34 = vld [vmem:[%s1 + $0x2c] sm:$0xf]
  %v35 = vld [vmem:[%s1 + $0x30] sm:$0xf]
  %v36 = vld [vmem:[%s1 + $0x34] sm:$0xf]
  %v37 = vld [vmem:[%s1 + $0x38] sm:$0xf]
  %v38 = vld [vmem:[%s1 + $0x3c] sm:$0xf]
  %v39 = vld [vmem:[%s2] sm:$0x1]
  %v41 = vlaneseq
  %v42 = vshrl.u32 %v41, 7
  %v43 = vsub.s32 0, %v42
  %v44 = vrot.slane %v39, %v43
  %v54 = vunpack.c.l.b16 %v15
  %v55 = vunpack.c.l.b16 %v16
  %v56 = vunpack.c.l.b16 %v17
  %v57 = vunpack.c.l.b16 %v18
  %v58 = vunpack.c.l.b16 %v19
  %v59 = vunpack.c.l.b16 %v20
  %v60 = vunpack.c.l.b16 %v21
  %v61 = vunpack.c.l.b16 %v22
  %v62 = vpack.c.b16 %v55, %v54
  %v63 = vpack.c.b16 %v57, %v56
  %v64 = vpack.c.b16 %v59, %v58
  %v65 = vpack.c.b16 %v61, %v60
  %v86 = vunpack.c.l.b16 %v23
  %v87 = vunpack.c.l.b16 %v24
  %v88 = vunpack.c.l.b16 %v25
  %v89 = vunpack.c.l.b16 %v26
  %v90 = vunpack.c.l.b16 %v27
  %v91 = vunpack.c.l.b16 %v28
  %v92 = vunpack.c.l.b16 %v29
  %v93 = vunpack.c.l.b16 %v30
  %v94 = vunpack.c.l.b16 %v31
  %v95 = vunpack.c.l.b16 %v32
  %v96 = vunpack.c.l.b16 %v33
  %v97 = vunpack.c.l.b16 %v34
  %v98 = vunpack.c.l.b16 %v35
  %v99 = vunpack.c.l.b16 %v36
  %v100 = vunpack.c.l.b16 %v37
  %v101 = vunpack.c.l.b16 %v38
  %v102 = vpack.c.b16 %v87, %v86
  %v103 = vpack.c.b16 %v89, %v88
  %v104 = vpack.c.b16 %v91, %v90
  %v105 = vpack.c.b16 %v93, %v92
  %v106 = vpack.c.b16 %v95, %v94
  %v107 = vpack.c.b16 %v97, %v96
  %v108 = vpack.c.b16 %v99, %v98
  %v109 = vpack.c.b16 %v101, %v100
  %118 = vmatprep.subr.bf16.mxu0 0
  %119 = vmatpush1.bf16.msra.mxu0 %v109
  %120 = vmatprep.subr.bf16.mxu0 0
  %121 = vmatpush1.bf16.msra.mxu0 %v108
  %122 = vmatprep.subr.bf16.mxu0 0
  %123 = vmatpush1.bf16.msra.mxu0 %v107
  %124 = vmatprep.subr.bf16.mxu0 0
  %125 = vmatpush1.bf16.msra.mxu0 %v106
  %126 = vmatprep.subr.bf16.mxu0 0
  %127 = vmatpush1.bf16.msra.mxu0 %v105
  %128 = vmatprep.subr.bf16.mxu0 0
  %129 = vmatpush1.bf16.msra.mxu0 %v104
  %130 = vmatprep.subr.bf16.mxu0 0
  %131 = vmatpush1.bf16.msra.mxu0 %v103
  %132 = vmatprep.subr.bf16.mxu0 0
  %133 = vmatpush1.bf16.msra.mxu0 %v102
  %134 = vmatprep.subr.bf16.mxu0 0
  %135 = vmatpush2.bf16.msra.mxu0 0
  %136 = vmatprep.subr.bf16.mxu0 0
  %137 = vmatpush2.bf16.msra.mxu0 0
  %138 = vmatprep.subr.bf16.mxu0 0
  %139 = vmatpush2.bf16.msra.mxu0 0
  %140 = vmatprep.subr.bf16.mxu0 0
  %141 = vmatpush2.bf16.msra.mxu0 0
  %142 = vmatprep.subr.bf16.mxu0 0
  %143 = vmatpush2.bf16.msra.mxu0 0
  %144 = vmatprep.subr.bf16.mxu0 0
  %145 = vmatpush2.bf16.msra.mxu0 0
  %146 = vmatprep.subr.bf16.mxu0 0
  %147 = vmatpush2.bf16.msra.mxu0 0
  %148 = vmatprep.subr.bf16.mxu0 0
  %149 = vmatpush2.bf16.msra.mxu0 0
  %150 = vmatprep.mubr.bf16.mxu0 0
  %151 = vmatmul.mubr.bf16.gmra.mxu0 %v62
  %v152 = vpop.f32.mrf.mxu0
  %v153 = vadd.f32 %v44, %v152
  %v154 = vpop.f32.mrf.mxu0
  %v155 = vpop.f32.mrf.mxu0
  %v156 = vadd.f32 %v44, %v155
  %v157 = vpop.f32.mrf.mxu0
  %158 = vmatprep.mubr.bf16.mxu0 0
  %159 = vmatmul.mubr.bf16.gmra.mxu0 %v63
  %v160 = vpop.f32.mrf.mxu0
  %v161 = vadd.f32 %v44, %v160
  %v162 = vpop.f32.mrf.mxu0
  %v163 = vpop.f32.mrf.mxu0
  %v164 = vadd.f32 %v44, %v163
  %v165 = vpop.f32.mrf.mxu0
  %166 = vmatprep.mubr.bf16.mxu0 0
  %167 = vmatmul.mubr.bf16.gmra.mxu0 %v64
  %v168 = vpop.f32.mrf.mxu0
  %v169 = vadd.f32 %v44, %v168
  %v170 = vpop.f32.mrf.mxu0
  %v171 = vpop.f32.mrf.mxu0
  %v172 = vadd.f32 %v44, %v171
  %v173 = vpop.f32.mrf.mxu0
  %174 = vmatprep.mubr.bf16.mxu0 0
  %175 = vmatmul.mubr.bf16.gmra.mxu0 %v65
  %v176 = vpop.f32.mrf.mxu0
  %v177 = vadd.f32 %v44, %v176
  %v178 = vpop.f32.mrf.mxu0
  %v179 = vpop.f32.mrf.mxu0
  %v180 = vadd.f32 %v44, %v179
  %v181 = vpop.f32.mrf.mxu0
  %182 = vdwg.mxu0
  %183 = vst [vmem:[%s3] sm:$0xff] %v153
  %184 = vst [vmem:[%s3 + $0x8] sm:$0xff] %v156
  %185 = vst [vmem:[%s3 + $0x10] sm:$0xff] %v161
  %186 = vst [vmem:[%s3 + $0x18] sm:$0xff] %v164
  %187 = vst [vmem:[%s3 + $0x20] sm:$0xff] %v169
  %188 = vst [vmem:[%s3 + $0x28] sm:$0xff] %v172
  %189 = vst [vmem:[%s3 + $0x30] sm:$0xff] %v177
  %190 = vst [vmem:[%s3 + $0x38] sm:$0xff] %v180
  // Predicated region
  $region14: #{rnn_seq_note_forward.9} parent=0 // pred_check
    _
  $region15: #{rnn_seq_note_forward.9} parent=0 // pred_check_branch
    %192 = sbr.rel (0) target = $region17
  $region16: #{rnn_seq_note_forward.9} parent=0 // pred_region
    _
  $region17: #{rnn_seq_note_forward.9} parent=0 // pred_fallthru
    _
  // Predicated region
  $region18: #{rnn_seq_note_forward.9} parent=0 // pred_check
    _
  $region19: #{rnn_seq_note_forward.9} parent=0 // pred_check_branch
    %194 = sbr.rel (0) target = $region21
  $region20: #{rnn_seq_note_forward.9} parent=0 // pred_region
    _
  $region21: #{rnn_seq_note_forward.9} parent=0 // pred_fallthru
    _

// kernel: rnn_seq_note_forward.5
$region0: #{rnn_seq_note_forward.5}
  #allocation0 [shape = 'u32[]', space=smem, size = 0x4, offset = 0x4, fixed_abs, tag = 'smem constant byte address 0x4 - core index']
  #allocation1 [shape = 'u32[144,128]{1,0:T(1,128)}', space=vmem, size = 0x12000, scoped, tag = 'internal scratch']
  %s0 = inlined_call_operand.vmem [shape: bf16[64,128], index: 0, kind: input, shape index: {}]
  %s1 = inlined_call_operand.hbm [shape: bf16[128,512], index: 1, kind: input, shape index: {}]
  %s2 = inlined_call_operand.vmem [shape: f32[1,512], index: 2, kind: input, shape index: {}]
  %s3 = inlined_call_operand.vmem [shape: bf16[64,512], index: 3, kind: output, shape index: {}]
  %s4 = sld [smem:[#allocation0]]
  $region26: #{rnn_seq_note_forward.5} parent=0
    _
  %s6 = ssub.s32 1, %s4
  %s7 = scalar_select 0, %s6, %s4
  $region1: #{rnn_seq_note_forward.5} parent=0
    #allocation2 [shape = 'u8[131072]{0}', space=vmem, size = 0x20000, scoped, tag = 'input window, operand 1, single buffered']
    #allocation3 [shape = 's32[1]{0}', space=sflag, size = 0x4, scoped, tag = 'scoped memory for rnn_seq_note_forward.5']
    %8 = vsyncpa [#allocation3], 0
    // Predicated region
    $region2: #{rnn_seq_note_forward.5} parent=1 // pred_check
      _
    $region3: #{rnn_seq_note_forward.5} parent=1 // pred_check_branch
      %10 = sbr.rel (0) target = $region5
    $region4: #{rnn_seq_note_forward.5} parent=1 // pred_region
      _
    $region5: #{rnn_seq_note_forward.5} parent=1 // pred_fallthru
      _
    // Predicated region
    $region6: #{rnn_seq_note_forward.5} parent=1 // pred_check
      _
    $region7: #{rnn_seq_note_forward.5} parent=1 // pred_check_branch
      %12 = sbr.rel (0) target = $region9
    $region8: #{rnn_seq_note_forward.5} parent=1 // pred_region
      %s14 = ssub.s32 4096, 4096
      %15 = vsyncadd [#allocation3], %s14
      %s16 = sshll.u32 [#allocation2], 4
      %s17 = int_to_ptr.vmem [resolvable:$true] %s16
      %22 = dma.hbm_to_vmem [thread:$0]  %s1, 4096, %s17, [#allocation3], 256, 256, 16
    $region9: #{rnn_seq_note_forward.5} parent=1 // pred_fallthru
      _
    // Predicated region
    $region10: #{rnn_seq_note_forward.5} parent=1 // pred_check
      _
    $region11: #{rnn_seq_note_forward.5} parent=1 // pred_check_branch
      %24 = sbr.rel (0) target = $region13
    $region12: #{rnn_seq_note_forward.5} parent=1 // pred_region
      _
    $region13: #{rnn_seq_note_forward.5} parent=1 // pred_fallthru
      _
    // Predicated region
    $region14: #{rnn_seq_note_forward.5} parent=1 // pred_check
      _
    $region15: #{rnn_seq_note_forward.5} parent=1 // pred_check_branch
      %26 = sbr.rel (0) target = $region17
    $region16: #{rnn_seq_note_forward.5} parent=1 // pred_region
      %27 = dma.done [#allocation3], 4096
    $region17: #{rnn_seq_note_forward.5} parent=1 // pred_fallthru
      _
    %v29 = vld [vmem:[%s0] sm:$0xf]
    %v30 = vld [vmem:[%s0 + $0x4] sm:$0xf]
    %v31 = vld [vmem:[%s0 + $0x8] sm:$0xf]
    %v32 = vld [vmem:[%s0 + $0xc] sm:$0xf]
    %v33 = vld [vmem:[%s0 + $0x10] sm:$0xf]
    %v34 = vld [vmem:[%s0 + $0x14] sm:$0xf]
    %v35 = vld [vmem:[%s0 + $0x18] sm:$0xf]
    %v36 = vld [vmem:[%s0 + $0x1c] sm:$0xf]
    %v37 = vld [vmem:[#allocation2] sm:$0xff]
    %v38 = vld [vmem:[#allocation2 + $0x8] sm:$0xff]
    %v39 = vld [vmem:[#allocation2 + $0x10] sm:$0xff]
    %v40 = vld [vmem:[#allocation2 + $0x18] sm:$0xff]
    %v41 = vld [vmem:[#allocation2 + $0x20] sm:$0xff]
    %v42 = vld [vmem:[#allocation2 + $0x28] sm:$0xff]
    %v43 = vld [vmem:[#allocation2 + $0x30] sm:$0xff]
    %v44 = vld [vmem:[#allocation2 + $0x38] sm:$0xff]
    %v45 = vld [vmem:[#allocation2 + $0x40] sm:$0xff]
    %v46 = vld [vmem:[#allocation2 + $0x48] sm:$0xff]
    %v47 = vld [vmem:[#allocation2 + $0x50] sm:$0xff]
    %v48 = vld [vmem:[#allocation2 + $0x58] sm:$0xff]
    %v49 = vld [vmem:[#allocation2 + $0x60] sm:$0xff]
    %v50 = vld [vmem:[#allocation2 + $0x68] sm:$0xff]
    %v51 = vld [vmem:[#allocation2 + $0x70] sm:$0xff]
    %v52 = vld [vmem:[#allocation2 + $0x78] sm:$0xff]
    %v53 = vld [vmem:[#allocation2 + $0x80] sm:$0xff]
    %v54 = vld [vmem:[#allocation2 + $0x88] sm:$0xff]
    %v55 = vld [vmem:[#allocation2 + $0x90] sm:$0xff]
    %v56 = vld [vmem:[#allocation2 + $0x98] sm:$0xff]
    %v57 = vld [vmem:[#allocation2 + $0xa0] sm:$0xff]
    %v58 = vld [vmem:[#allocation2 + $0xa8] sm:$0xff]
    %v59 = vld [vmem:[#allocation2 + $0xb0] sm:$0xff]
    %v60 = vld [vmem:[#allocation2 + $0xb8] sm:$0xff]
    %v61 = vld [vmem:[#allocation2 + $0xc0] sm:$0xff]
    %v62 = vld [vmem:[#allocation2 + $0xc8] sm:$0xff]
    %v63 = vld [vmem:[#allocation2 + $0xd0] sm:$0xff]
    %v64 = vld [vmem:[#allocation2 + $0xd8] sm:$0xff]
    %v65 = vld [vmem:[#allocation2 + $0xe0] sm:$0xff]
    %v66 = vld [vmem:[#allocation2 + $0xe8] sm:$0xff]
    %v67 = vld [vmem:[#allocation2 + $0xf0] sm:$0xff]
    %v68 = vld [vmem:[#allocation2 + $0xf8] sm:$0xff]
    %v69 = vld [vmem:[%s2] sm:$0xf]
    %v71 = vlaneseq
    %v72 = vshrl.u32 %v71, 7
    %v73 = vsub.s32 0, %v72
    %v74 = vrot.slane %v69, %v73
    %v75 = vlaneseq
    %v76 = vshrl.u32 %v75, 7
    %v77 = vsub.s32 1, %v76
    %v78 = vrot.slane %v69, %v77
    %v79 = vlaneseq
    %v80 = vshrl.u32 %v79, 7
    %v81 = vsub.s32 2, %v80
    %v82 = vrot.slane %v69, %v81
    %v83 = vlaneseq
    %v84 = vshrl.u32 %v83, 7
    %v85 = vsub.s32 3, %v84
    %v86 = vrot.slane %v69, %v85
    %v99 = vunpack.c.l.b16 %v29
    %v100 = vunpack.c.l.b16 %v30
    %v101 = vunpack.c.l.b16 %v31
    %v102 = vunpack.c.l.b16 %v32
    %v103 = vunpack.c.l.b16 %v33
    %v104 = vunpack.c.l.b16 %v34
    %v105 = vunpack.c.l.b16 %v35
    %v106 = vunpack.c.l.b16 %v36
    %v107 = vpack.c.b16 %v100, %v99
    %v108 = vpack.c.b16 %v102, %v101
    %v109 = vpack.c.b16 %v104, %v103
    %v110 = vpack.c.b16 %v106, %v105
    %v147 = vunpack.c.l.b16 %v37
    %v148 = vunpack.c.h.b16 %v37
    %v149 = vunpack.c.l.b16 %v38
    %v150 = vunpack.c.h.b16 %v38
    %v151 = vunpack.c.l.b16 %v39
    %v152 = vunpack.c.h.b16 %v39
    %v153 = vunpack.c.l.b16 %v40
    %v154 = vunpack.c.h.b16 %v40
    %v155 = vunpack.c.l.b16 %v41
    %v156 = vunpack.c.h.b16 %v41
    %v157 = vunpack.c.l.b16 %v42
    %v158 = vunpack.c.h.b16 %v42
    %v159 = vunpack.c.l.b16 %v43
    %v160 = vunpack.c.h.b16 %v43
    %v161 = vunpack.c.l.b16 %v44
    %v162 = vunpack.c.h.b16 %v44
    %v163 = vunpack.c.l.b16 %v45
    %v164 = vunpack.c.h.b16 %v45
    %v165 = vunpack.c.l.b16 %v46
    %v166 = vunpack.c.h.b16 %v46
    %v167 = vunpack.c.l.b16 %v47
    %v168 = vunpack.c.h.b16 %v47
    %v169 = vunpack.c.l.b16 %v48
    %v170 = vunpack.c.h.b16 %v48
    %v171 = vunpack.c.l.b16 %v49
    %v172 = vunpack.c.h.b16 %v49
    %v173 = vunpack.c.l.b16 %v50
    %v174 = vunpack.c.h.b16 %v50
    %v175 = vunpack.c.l.b16 %v51
    %v176 = vunpack.c.h.b16 %v51
    %v177 = vunpack.c.l.b16 %v52
    %v178 = vunpack.c.h.b16 %v52
    %v179 = vunpack.c.l.b16 %v53
    %v180 = vunpack.c.h.b16 %v53
    %v181 = vunpack.c.l.b16 %v54
    %v182 = vunpack.c.h.b16 %v54
    %v183 = vunpack.c.l.b16 %v55
    %v184 = vunpack.c.h.b16 %v55
    %v185 = vunpack.c.l.b16 %v56
    %v186 = vunpack.c.h.b16 %v56
    %v187 = vunpack.c.l.b16 %v57
    %v188 = vunpack.c.h.b16 %v57
    %v189 = vunpack.c.l.b16 %v58
    %v190 = vunpack.c.h.b16 %v58
    %v191 = vunpack.c.l.b16 %v59
    %v192 = vunpack.c.h.b16 %v59
    %v193 = vunpack.c.l.b16 %v60
    %v194 = vunpack.c.h.b16 %v60
    %v195 = vunpack.c.l.b16 %v61
    %v196 = vunpack.c.h.b16 %v61
    %v197 = vunpack.c.l.b16 %v62
    %v198 = vunpack.c.h.b16 %v62
    %v199 = vunpack.c.l.b16 %v63
    %v200 = vunpack.c.h.b16 %v63
    %v201 = vunpack.c.l.b16 %v64
    %v202 = vunpack.c.h.b16 %v64
    %v203 = vunpack.c.l.b16 %v65
    %v204 = vunpack.c.h.b16 %v65
    %v205 = vunpack.c.l.b16 %v66
    %v206 = vunpack.c.h.b16 %v66
    %v207 = vunpack.c.l.b16 %v67
    %v208 = vunpack.c.h.b16 %v67
    %v209 = vunpack.c.l.b16 %v68
    %v210 = vunpack.c.h.b16 %v68
    %v211 = vpack.c.b16 %v151, %v147
    %v212 = vpack.c.b16 %v152, %v148
    %v213 = vpack.c.b16 %v153, %v149
    %v214 = vpack.c.b16 %v154, %v150
    %v215 = vpack.c.b16 %v159, %v155
    %v216 = vpack.c.b16 %v160, %v156
    %v217 = vpack.c.b16 %v161, %v157
    %v218 = vpack.c.b16 %v162, %v158
    %v219 = vpack.c.b16 %v167, %v163
    %v220 = vpack.c.b16 %v168, %v164
    %v221 = vpack.c.b16 %v169, %v165
    %v222 = vpack.c.b16 %v170, %v166
    %v223 = vpack.c.b16 %v175, %v171
    %v224 = vpack.c.b16 %v176, %v172
    %v225 = vpack.c.b16 %v177, %v173
    %v226 = vpack.c.b16 %v178, %v174
    %v227 = vpack.c.b16 %v183, %v179
    %v228 = vpack.c.b16 %v184, %v180
    %v229 = vpack.c.b16 %v185, %v181
    %v230 = vpack.c.b16 %v186, %v182
    %v231 = vpack.c.b16 %v191, %v187
    %v232 = vpack.c.b16 %v192, %v188
    %v233 = vpack.c.b16 %v193, %v189
    %v234 = vpack.c.b16 %v194, %v190
    %v235 = vpack.c.b16 %v199, %v195
    %v236 = vpack.c.b16 %v200, %v196
    %v237 = vpack.c.b16 %v201, %v197
    %v238 = vpack.c.b16 %v202, %v198
    %v239 = vpack.c.b16 %v207, %v203
    %v240 = vpack.c.b16 %v208, %v204
    %v241 = vpack.c.b16 %v209, %v205
    %v242 = vpack.c.b16 %v210, %v206
    %275 = vmatprep.subr.bf16.mxu0 %v240
    %276 = vmatpush1.bf16.msra.mxu0 %v239
    %277 = vmatprep.subr.bf16.mxu0 %v236
    %278 = vmatpush1.bf16.msra.mxu0 %v235
    %279 = vmatprep.subr.bf16.mxu0 %v232
    %280 = vmatpush1.bf16.msra.mxu0 %v231
    %281 = vmatprep.subr.bf16.mxu0 %v228
    %282 = vmatpush1.bf16.msra.mxu0 %v227
    %283 = vmatprep.subr.bf16.mxu0 %v224
    %284 = vmatpush1.bf16.msra.mxu0 %v223
    %285 = vmatprep.subr.bf16.mxu0 %v220
    %286 = vmatpush1.bf16.msra.mxu0 %v219
    %287 = vmatprep.subr.bf16.mxu0 %v216
    %288 = vmatpush1.bf16.msra.mxu0 %v215
    %289 = vmatprep.subr.bf16.mxu0 %v212
    %290 = vmatpush1.bf16.msra.mxu0 %v211
    %291 = vmatprep.subr.bf16.mxu0 0
    %292 = vmatpush2.bf16.msra.mxu0 0
    %293 = vmatprep.subr.bf16.mxu0 0
    %294 = vmatpush2.bf16.msra.mxu0 0
    %295 = vmatprep.subr.bf16.mxu0 0
    %296 = vmatpush2.bf16.msra.mxu0 0
    %297 = vmatprep.subr.bf16.mxu0 0
    %298 = vmatpush2.bf16.msra.mxu0 0
    %299 = vmatprep.subr.bf16.mxu0 0
    %300 = vmatpush2.bf16.msra.mxu0 0
    %301 = vmatprep.subr.bf16.mxu0 0
    %302 = vmatpush2.bf16.msra.mxu0 0
    %303 = vmatprep.subr.bf16.mxu0 0
    %304 = vmatpush2.bf16.msra.mxu0 0
    %305 = vmatprep.subr.bf16.mxu0 0
    %306 = vmatpush2.bf16.msra.mxu0 0
    %307 = vmatprep.mubr.bf16.mxu0 0
    %308 = vmatmul.mubr.bf16.gmra.mxu0 %v107
    %v309 = vpop.f32.mrf.mxu0
    %v310 = vadd.f32 %v74, %v309
    %v311 = vpop.f32.mrf.mxu0
    %v312 = vadd.f32 %v78, %v311
    %v313 = vpop.f32.mrf.mxu0
    %v314 = vadd.f32 %v74, %v313
    %v315 = vpop.f32.mrf.mxu0
    %v316 = vadd.f32 %v78, %v315
    %317 = vmatprep.mubr.bf16.mxu0 0
    %318 = vmatmul.mubr.bf16.gmra.mxu0 %v108
    %v319 = vpop.f32.mrf.mxu0
    %v320 = vadd.f32 %v74, %v319
    %v321 = vpop.f32.mrf.mxu0
    %v322 = vadd.f32 %v78, %v321
    %v323 = vpop.f32.mrf.mxu0
    %v324 = vadd.f32 %v74, %v323
    %v325 = vpop.f32.mrf.mxu0
    %v326 = vadd.f32 %v78, %v325
    %327 = vmatprep.mubr.bf16.mxu0 0
    %328 = vmatmul.mubr.bf16.gmra.mxu0 %v109
    %v329 = vpop.f32.mrf.mxu0
    %v330 = vadd.f32 %v74, %v329
    %v331 = vpop.f32.mrf.mxu0
    %v332 = vadd.f32 %v78, %v331
    %v333 = vpop.f32.mrf.mxu0
    %v334 = vadd.f32 %v74, %v333
    %v335 = vpop.f32.mrf.mxu0
    %v336 = vadd.f32 %v78, %v335
    %337 = vmatprep.mubr.bf16.mxu0 0
    %338 = vmatmul.mubr.bf16.gmra.mxu0 %v110
    %v339 = vpop.f32.mrf.mxu0
    %v340 = vadd.f32 %v74, %v339
    %v341 = vpop.f32.mrf.mxu0
    %v342 = vadd.f32 %v78, %v341
    %v343 = vpop.f32.mrf.mxu0
    %v344 = vadd.f32 %v74, %v343
    %v345 = vpop.f32.mrf.mxu0
    %v346 = vadd.f32 %v78, %v345
    %347 = vdwg.mxu0
    %348 = vmatprep.subr.bf16.mxu0 %v242
    %349 = vmatpush1.bf16.msra.mxu0 %v241
    %350 = vmatprep.subr.bf16.mxu0 %v238
    %351 = vmatpush1.bf16.msra.mxu0 %v237
    %352 = vmatprep.subr.bf16.mxu0 %v234
    %353 = vmatpush1.bf16.msra.mxu0 %v233
    %354 = vmatprep.subr.bf16.mxu0 %v230
    %355 = vmatpush1.bf16.msra.mxu0 %v229
    %356 = vmatprep.subr.bf16.mxu0 %v226
    %357 = vmatpush1.bf16.msra.mxu0 %v225
    %358 = vmatprep.subr.bf16.mxu0 %v222
    %359 = vmatpush1.bf16.msra.mxu0 %v221
    %360 = vmatprep.subr.bf16.mxu0 %v218
    %361 = vmatpush1.bf16.msra.mxu0 %v217
    %362 = vmatprep.subr.bf16.mxu0 %v214
    %363 = vmatpush1.bf16.msra.mxu0 %v213
    %364 = vmatprep.subr.bf16.mxu0 0
    %365 = vmatpush2.bf16.msra.mxu0 0
    %366 = vmatprep.subr.bf16.mxu0 0
    %367 = vmatpush2.bf16.msra.mxu0 0
    %368 = vmatprep.subr.bf16.mxu0 0
    %369 = vmatpush2.bf16.msra.mxu0 0
    %370 = vmatprep.subr.bf16.mxu0 0
    %371 = vmatpush2.bf16.msra.mxu0 0
    %372 = vmatprep.subr.bf16.mxu0 0
    %373 = vmatpush2.bf16.msra.mxu0 0
    %374 = vmatprep.subr.bf16.mxu0 0
    %375 = vmatpush2.bf16.msra.mxu0 0
    %376 = vmatprep.subr.bf16.mxu0 0
    %377 = vmatpush2.bf16.msra.mxu0 0
    %378 = vmatprep.subr.bf16.mxu0 0
    %379 = vmatpush2.bf16.msra.mxu0 0
    %380 = vmatprep.mubr.bf16.mxu0 0
    %381 = vmatmul.mubr.bf16.gmra.mxu0 %v107
    %v382 = vpop.f32.mrf.mxu0
    %v383 = vadd.f32 %v82, %v382
    %v384 = vpop.f32.mrf.mxu0
    %v385 = vadd.f32 %v86, %v384
    %v386 = vpop.f32.mrf.mxu0
    %v387 = vadd.f32 %v82, %v386
    %v388 = vpop.f32.mrf.mxu0
    %v389 = vadd.f32 %v86, %v388
    %390 = vmatprep.mubr.bf16.mxu0 0
    %391 = vmatmul.mubr.bf16.gmra.mxu0 %v108
    %v392 = vpop.f32.mrf.mxu0
    %v393 = vadd.f32 %v82, %v392
    %v394 = vpop.f32.mrf.mxu0
    %v395 = vadd.f32 %v86, %v394
    %v396 = vpop.f32.mrf.mxu0
    %v397 = vadd.f32 %v82, %v396
    %v398 = vpop.f32.mrf.mxu0
    %v399 = vadd.f32 %v86, %v398
    %400 = vmatprep.mubr.bf16.mxu0 0
    %401 = vmatmul.mubr.bf16.gmra.mxu0 %v109
    %v402 = vpop.f32.mrf.mxu0
    %v403 = vadd.f32 %v82, %v402
    %v404 = vpop.f32.mrf.mxu0
    %v405 = vadd.f32 %v86, %v404
    %v406 = vpop.f32.mrf.mxu0
    %v407 = vadd.f32 %v82, %v406
    %v408 = vpop.f32.mrf.mxu0
    %v409 = vadd.f32 %v86, %v408
    %410 = vmatprep.mubr.bf16.mxu0 0
    %411 = vmatmul.mubr.bf16.gmra.mxu0 %v110
    %v412 = vpop.f32.mrf.mxu0
    %v413 = vadd.f32 %v82, %v412
    %v414 = vpop.f32.mrf.mxu0
    %v415 = vadd.f32 %v86, %v414
    %v416 = vpop.f32.mrf.mxu0
    %v417 = vadd.f32 %v82, %v416
    %v418 = vpop.f32.mrf.mxu0
    %v419 = vadd.f32 %v86, %v418
    %420 = vdwg.mxu0
    %v421 = vpack.c.bf16 %v314, %v310
    %v422 = vpack.c.bf16 %v316, %v312
    %v423 = vpack.c.bf16 %v387, %v383
    %v424 = vpack.c.bf16 %v389, %v385
    %v425 = vpack.c.bf16 %v324, %v320
    %v426 = vpack.c.bf16 %v326, %v322
    %v427 = vpack.c.bf16 %v397, %v393
    %v428 = vpack.c.bf16 %v399, %v395
    %v429 = vpack.c.bf16 %v334, %v330
    %v430 = vpack.c.bf16 %v336, %v332
    %v431 = vpack.c.bf16 %v407, %v403
    %v432 = vpack.c.bf16 %v409, %v405
    %v433 = vpack.c.bf16 %v344, %v340
    %v434 = vpack.c.bf16 %v346, %v342
    %v435 = vpack.c.bf16 %v417, %v413
    %v436 = vpack.c.bf16 %v419, %v415
    %v453 = vunpack.c.l.b16 %v421
    %v454 = vunpack.c.l.b16 %v422
    %v455 = vunpack.c.l.b16 %v423
    %v456 = vunpack.c.l.b16 %v424
    %v457 = vunpack.c.h.b16 %v421
    %v458 = vunpack.c.h.b16 %v422
    %v459 = vunpack.c.h.b16 %v423
    %v460 = vunpack.c.h.b16 %v424
    %v461 = vunpack.c.l.b16 %v425
    %v462 = vunpack.c.l.b16 %v426
    %v463 = vunpack.c.l.b16 %v427
    %v464 = vunpack.c.l.b16 %v428
    %v465 = vunpack.c.h.b16 %v425
    %v466 = vunpack.c.h.b16 %v426
    %v467 = vunpack.c.h.b16 %v427
    %v468 = vunpack.c.h.b16 %v428
    %v469 = vunpack.c.l.b16 %v429
    %v470 = vunpack.c.l.b16 %v430
    %v471 = vunpack.c.l.b16 %v431
    %v472 = vunpack.c.l.b16 %v432
    %v473 = vunpack.c.h.b16 %v429
    %v474 = vunpack.c.h.b16 %v430
    %v475 = vunpack.c.h.b16 %v431
    %v476 = vunpack.c.h.b16 %v432
    %v477 = vunpack.c.l.b16 %v433
    %v478 = vunpack.c.l.b16 %v434
    %v479 = vunpack.c.l.b16 %v435
    %v480 = vunpack.c.l.b16 %v436
    %v481 = vunpack.c.h.b16 %v433
    %v482 = vunpack.c.h.b16 %v434
    %v483 = vunpack.c.h.b16 %v435
    %v484 = vunpack.c.h.b16 %v436
    %v485 = vpack.c.b16 %v454, %v453
    %v486 = vpack.c.b16 %v456, %v455
    %v487 = vpack.c.b16 %v458, %v457
    %v488 = vpack.c.b16 %v460, %v459
    %v489 = vpack.c.b16 %v462, %v461
    %v490 = vpack.c.b16 %v464, %v463
    %v491 = vpack.c.b16 %v466, %v465
    %v492 = vpack.c.b16 %v468, %v467
    %v493 = vpack.c.b16 %v470, %v469
    %v494 = vpack.c.b16 %v472, %v471
    %v495 = vpack.c.b16 %v474, %v473
    %v496 = vpack.c.b16 %v476, %v475
    %v497 = vpack.c.b16 %v478, %v477
    %v498 = vpack.c.b16 %v480, %v479
    %v499 = vpack.c.b16 %v482, %v481
    %v500 = vpack.c.b16 %v484, %v483
    %517 = vst [vmem:[%s3] sm:$0xff] %v485
    %518 = vst [vmem:[%s3 + $0x8] sm:$0xff] %v486
    %519 = vst [vmem:[%s3 + $0x10] sm:$0xff] %v487
    %520 = vst [vmem:[%s3 + $0x18] sm:$0xff] %v488
    %521 = vst [vmem:[%s3 + $0x20] sm:$0xff] %v489
    %522 = vst [vmem:[%s3 + $0x28] sm:$0xff] %v490
    %523 = vst [vmem:[%s3 + $0x30] sm:$0xff] %v491
    %524 = vst [vmem:[%s3 + $0x38] sm:$0xff] %v492
    %525 = vst [vmem:[%s3 + $0x40] sm:$0xff] %v493
    %526 = vst [vmem:[%s3 + $0x48] sm:$0xff] %v494
    %527 = vst [vmem:[%s3 + $0x50] sm:$0xff] %v495
    %528 = vst [vmem:[%s3 + $0x58] sm:$0xff] %v496
    %529 = vst [vmem:[%s3 + $0x60] sm:$0xff] %v497
    %530 = vst [vmem:[%s3 + $0x68] sm:$0xff] %v498
    %531 = vst [vmem:[%s3 + $0x70] sm:$0xff] %v499
    %532 = vst [vmem:[%s3 + $0x78] sm:$0xff] %v500
    // Predicated region
    $region18: #{rnn_seq_note_forward.5} parent=1 // pred_check
      _
    $region19: #{rnn_seq_note_forward.5} parent=1 // pred_check_branch
      %534 = sbr.rel (0) target = $region21
    $region20: #{rnn_seq_note_forward.5} parent=1 // pred_region
      _
    $region21: #{rnn_seq_note_forward.5} parent=1 // pred_fallthru
      _
    // Predicated region
    $region22: #{rnn_seq_note_forward.5} parent=1 // pred_check
      _
    $region23: #{rnn_seq_note_forward.5} parent=1 // pred_check_branch
      %536 = sbr.rel (0) target = $region25
    $region24: #{rnn_seq_note_forward.5} parent=1 // pred_region
      _
    $region25: #{rnn_seq_note_forward.5} parent=1 // pred_fallthru
      _
    %537 = vsyncpa [#allocation3], 1

// kernel: rnn_seq_note_forward.7
$region0: #{rnn_seq_note_forward.7}
  #allocation0 [shape = 'u32[]', space=smem, size = 0x4, offset = 0x4, fixed_abs, tag = 'smem constant byte address 0x4 - core index']
  #allocation1 [shape = 'u32[144,128]{1,0:T(1,128)}', space=vmem, size = 0x12000, scoped, tag = 'internal scratch']
  %s0 = inlined_call_operand.vmem [shape: bf16[64,128], index: 0, kind: input, shape index: {}]
  %s1 = inlined_call_operand.vmem [shape: bf16[128,512], index: 1, kind: input, shape index: {}]
  %s2 = inlined_call_operand.vmem [shape: f32[1,512], index: 2, kind: input, shape index: {}]
  %s3 = inlined_call_operand.vmem [shape: bf16[64,512], index: 3, kind: output, shape index: {}]
  %s4 = sld [smem:[#allocation0]]
  $region22: #{rnn_seq_note_forward.7} parent=0
    _
  %s6 = ssub.s32 1, %s4
  %s7 = scalar_select 0, %s6, %s4
  // Predicated region
  $region2: #{rnn_seq_note_forward.7} parent=0 // pred_check
    _
  $region3: #{rnn_seq_note_forward.7} parent=0 // pred_check_branch
    %9 = sbr.rel (0) target = $region5
  $region4: #{rnn_seq_note_forward.7} parent=0 // pred_region
    _
  $region5: #{rnn_seq_note_forward.7} parent=0 // pred_fallthru
    _
  // Predicated region
  $region6: #{rnn_seq_note_forward.7} parent=0 // pred_check
    _
  $region7: #{rnn_seq_note_forward.7} parent=0 // pred_check_branch
    %11 = sbr.rel (0) target = $region9
  $region8: #{rnn_seq_note_forward.7} parent=0 // pred_region
    _
  $region9: #{rnn_seq_note_forward.7} parent=0 // pred_fallthru
    _
  // Predicated region
  $region10: #{rnn_seq_note_forward.7} parent=0 // pred_check
    _
  $region11: #{rnn_seq_note_forward.7} parent=0 // pred_check_branch
    %13 = sbr.rel (0) target = $region13
  $region12: #{rnn_seq_note_forward.7} parent=0 // pred_region
    _
  $region13: #{rnn_seq_note_forward.7} parent=0 // pred_fallthru
    _
  %v15 = vld [vmem:[%s0] sm:$0xf]
  %v16 = vld [vmem:[%s0 + $0x4] sm:$0xf]
  %v17 = vld [vmem:[%s0 + $0x8] sm:$0xf]
  %v18 = vld [vmem:[%s0 + $0xc] sm:$0xf]
  %v19 = vld [vmem:[%s0 + $0x10] sm:$0xf]
  %v20 = vld [vmem:[%s0 + $0x14] sm:$0xf]
  %v21 = vld [vmem:[%s0 + $0x18] sm:$0xf]
  %v22 = vld [vmem:[%s0 + $0x1c] sm:$0xf]
  %v23 = vld [vmem:[%s1] sm:$0xff]
  %v24 = vld [vmem:[%s1 + $0x8] sm:$0xff]
  %v25 = vld [vmem:[%s1 + $0x10] sm:$0xff]
  %v26 = vld [vmem:[%s1 + $0x18] sm:$0xff]
  %v27 = vld [vmem:[%s1 + $0x20] sm:$0xff]
  %v28 = vld [vmem:[%s1 + $0x28] sm:$0xff]
  %v29 = vld [vmem:[%s1 + $0x30] sm:$0xff]
  %v30 = vld [vmem:[%s1 + $0x38] sm:$0xff]
  %v31 = vld [vmem:[%s1 + $0x40] sm:$0xff]
  %v32 = vld [vmem:[%s1 + $0x48] sm:$0xff]
  %v33 = vld [vmem:[%s1 + $0x50] sm:$0xff]
  %v34 = vld [vmem:[%s1 + $0x58] sm:$0xff]
  %v35 = vld [vmem:[%s1 + $0x60] sm:$0xff]
  %v36 = vld [vmem:[%s1 + $0x68] sm:$0xff]
  %v37 = vld [vmem:[%s1 + $0x70] sm:$0xff]
  %v38 = vld [vmem:[%s1 + $0x78] sm:$0xff]
  %v39 = vld [vmem:[%s1 + $0x80] sm:$0xff]
  %v40 = vld [vmem:[%s1 + $0x88] sm:$0xff]
  %v41 = vld [vmem:[%s1 + $0x90] sm:$0xff]
  %v42 = vld [vmem:[%s1 + $0x98] sm:$0xff]
  %v43 = vld [vmem:[%s1 + $0xa0] sm:$0xff]
  %v44 = vld [vmem:[%s1 + $0xa8] sm:$0xff]
  %v45 = vld [vmem:[%s1 + $0xb0] sm:$0xff]
  %v46 = vld [vmem:[%s1 + $0xb8] sm:$0xff]
  %v47 = vld [vmem:[%s1 + $0xc0] sm:$0xff]
  %v48 = vld [vmem:[%s1 + $0xc8] sm:$0xff]
  %v49 = vld [vmem:[%s1 + $0xd0] sm:$0xff]
  %v50 = vld [vmem:[%s1 + $0xd8] sm:$0xff]
  %v51 = vld [vmem:[%s1 + $0xe0] sm:$0xff]
  %v52 = vld [vmem:[%s1 + $0xe8] sm:$0xff]
  %v53 = vld [vmem:[%s1 + $0xf0] sm:$0xff]
  %v54 = vld [vmem:[%s1 + $0xf8] sm:$0xff]
  %v55 = vld [vmem:[%s2] sm:$0xf]
  %v57 = vlaneseq
  %v58 = vshrl.u32 %v57, 7
  %v59 = vsub.s32 0, %v58
  %v60 = vrot.slane %v55, %v59
  %v61 = vlaneseq
  %v62 = vshrl.u32 %v61, 7
  %v63 = vsub.s32 1, %v62
  %v64 = vrot.slane %v55, %v63
  %v65 = vlaneseq
  %v66 = vshrl.u32 %v65, 7
  %v67 = vsub.s32 2, %v66
  %v68 = vrot.slane %v55, %v67
  %v69 = vlaneseq
  %v70 = vshrl.u32 %v69, 7
  %v71 = vsub.s32 3, %v70
  %v72 = vrot.slane %v55, %v71
  %v85 = vunpack.c.l.b16 %v15
  %v86 = vunpack.c.l.b16 %v16
  %v87 = vunpack.c.l.b16 %v17
  %v88 = vunpack.c.l.b16 %v18
  %v89 = vunpack.c.l.b16 %v19
  %v90 = vunpack.c.l.b16 %v20
  %v91 = vunpack.c.l.b16 %v21
  %v92 = vunpack.c.l.b16 %v22
  %v93 = vpack.c.b16 %v86, %v85
  %v94 = vpack.c.b16 %v88, %v87
  %v95 = vpack.c.b16 %v90, %v89
  %v96 = vpack.c.b16 %v92, %v91
  %v133 = vunpack.c.l.b16 %v23
  %v134 = vunpack.c.h.b16 %v23
  %v135 = vunpack.c.l.b16 %v24
  %v136 = vunpack.c.h.b16 %v24
  %v137 = vunpack.c.l.b16 %v25
  %v138 = vunpack.c.h.b16 %v25
  %v139 = vunpack.c.l.b16 %v26
  %v140 = vunpack.c.h.b16 %v26
  %v141 = vunpack.c.l.b16 %v27
  %v142 = vunpack.c.h.b16 %v27
  %v143 = vunpack.c.l.b16 %v28
  %v144 = vunpack.c.h.b16 %v28
  %v145 = vunpack.c.l.b16 %v29
  %v146 = vunpack.c.h.b16 %v29
  %v147 = vunpack.c.l.b16 %v30
  %v148 = vunpack.c.h.b16 %v30
  %v149 = vunpack.c.l.b16 %v31
  %v150 = vunpack.c.h.b16 %v31
  %v151 = vunpack.c.l.b16 %v32
  %v152 = vunpack.c.h.b16 %v32
  %v153 = vunpack.c.l.b16 %v33
  %v154 = vunpack.c.h.b16 %v33
  %v155 = vunpack.c.l.b16 %v34
  %v156 = vunpack.c.h.b16 %v34
  %v157 = vunpack.c.l.b16 %v35
  %v158 = vunpack.c.h.b16 %v35
  %v159 = vunpack.c.l.b16 %v36
  %v160 = vunpack.c.h.b16 %v36
  %v161 = vunpack.c.l.b16 %v37
  %v162 = vunpack.c.h.b16 %v37
  %v163 = vunpack.c.l.b16 %v38
  %v164 = vunpack.c.h.b16 %v38
  %v165 = vunpack.c.l.b16 %v39
  %v166 = vunpack.c.h.b16 %v39
  %v167 = vunpack.c.l.b16 %v40
  %v168 = vunpack.c.h.b16 %v40
  %v169 = vunpack.c.l.b16 %v41
  %v170 = vunpack.c.h.b16 %v41
  %v171 = vunpack.c.l.b16 %v42
  %v172 = vunpack.c.h.b16 %v42
  %v173 = vunpack.c.l.b16 %v43
  %v174 = vunpack.c.h.b16 %v43
  %v175 = vunpack.c.l.b16 %v44
  %v176 = vunpack.c.h.b16 %v44
  %v177 = vunpack.c.l.b16 %v45
  %v178 = vunpack.c.h.b16 %v45
  %v179 = vunpack.c.l.b16 %v46
  %v180 = vunpack.c.h.b16 %v46
  %v181 = vunpack.c.l.b16 %v47
  %v182 = vunpack.c.h.b16 %v47
  %v183 = vunpack.c.l.b16 %v48
  %v184 = vunpack.c.h.b16 %v48
  %v185 = vunpack.c.l.b16 %v49
  %v186 = vunpack.c.h.b16 %v49
  %v187 = vunpack.c.l.b16 %v50
  %v188 = vunpack.c.h.b16 %v50
  %v189 = vunpack.c.l.b16 %v51
  %v190 = vunpack.c.h.b16 %v51
  %v191 = vunpack.c.l.b16 %v52
  %v192 = vunpack.c.h.b16 %v52
  %v193 = vunpack.c.l.b16 %v53
  %v194 = vunpack.c.h.b16 %v53
  %v195 = vunpack.c.l.b16 %v54
  %v196 = vunpack.c.h.b16 %v54
  %v197 = vpack.c.b16 %v137, %v133
  %v198 = vpack.c.b16 %v138, %v134
  %v199 = vpack.c.b16 %v139, %v135
  %v200 = vpack.c.b16 %v140, %v136
  %v201 = vpack.c.b16 %v145, %v141
  %v202 = vpack.c.b16 %v146, %v142
  %v203 = vpack.c.b16 %v147, %v143
  %v204 = vpack.c.b16 %v148, %v144
  %v205 = vpack.c.b16 %v153, %v149
  %v206 = vpack.c.b16 %v154, %v150
  %v207 = vpack.c.b16 %v155, %v151
  %v208 = vpack.c.b16 %v156, %v152
  %v209 = vpack.c.b16 %v161, %v157
  %v210 = vpack.c.b16 %v162, %v158
  %v211 = vpack.c.b16 %v163, %v159
  %v212 = vpack.c.b16 %v164, %v160
  %v213 = vpack.c.b16 %v169, %v165
  %v214 = vpack.c.b16 %v170, %v166
  %v215 = vpack.c.b16 %v171, %v167
  %v216 = vpack.c.b16 %v172, %v168
  %v217 = vpack.c.b16 %v177, %v173
  %v218 = vpack.c.b16 %v178, %v174
  %v219 = vpack.c.b16 %v179, %v175
  %v220 = vpack.c.b16 %v180, %v176
  %v221 = vpack.c.b16 %v185, %v181
  %v222 = vpack.c.b16 %v186, %v182
  %v223 = vpack.c.b16 %v187, %v183
  %v224 = vpack.c.b16 %v188, %v184
  %v225 = vpack.c.b16 %v193, %v189
  %v226 = vpack.c.b16 %v194, %v190
  %v227 = vpack.c.b16 %v195, %v191
  %v228 = vpack.c.b16 %v196, %v192
  %261 = vmatprep.subr.bf16.mxu0 %v226
  %262 = vmatpush1.bf16.msra.mxu0 %v225
  %263 = vmatprep.subr.bf16.mxu0 %v222
  %264 = vmatpush1.bf16.msra.mxu0 %v221
  %265 = vmatprep.subr.bf16.mxu0 %v218
  %266 = vmatpush1.bf16.msra.mxu0 %v217
  %267 = vmatprep.subr.bf16.mxu0 %v214
  %268 = vmatpush1.bf16.msra.mxu0 %v213
  %269 = vmatprep.subr.bf16.mxu0 %v210
  %270 = vmatpush1.bf16.msra.mxu0 %v209
  %271 = vmatprep.subr.bf16.mxu0 %v206
  %272 = vmatpush1.bf16.msra.mxu0 %v205
  %273 = vmatprep.subr.bf16.mxu0 %v202
  %274 = vmatpush1.bf16.msra.mxu0 %v201
  %275 = vmatprep.subr.bf16.mxu0 %v198
  %276 = vmatpush1.bf16.msra.mxu0 %v197
  %277 = vmatprep.subr.bf16.mxu0 0
  %278 = vmatpush2.bf16.msra.mxu0 0
  %279 = vmatprep.subr.bf16.mxu0 0
  %280 = vmatpush2.bf16.msra.mxu0 0
  %281 = vmatprep.subr.bf16.mxu0 0
  %282 = vmatpush2.bf16.msra.mxu0 0
  %283 = vmatprep.subr.bf16.mxu0 0
  %284 = vmatpush2.bf16.msra.mxu0 0
  %285 = vmatprep.subr.bf16.mxu0 0
  %286 = vmatpush2.bf16.msra.mxu0 0
  %287 = vmatprep.subr.bf16.mxu0 0
  %288 = vmatpush2.bf16.msra.mxu0 0
  %289 = vmatprep.subr.bf16.mxu0 0
  %290 = vmatpush2.bf16.msra.mxu0 0
  %291 = vmatprep.subr.bf16.mxu0 0
  %292 = vmatpush2.bf16.msra.mxu0 0
  %293 = vmatprep.mubr.bf16.mxu0 0
  %294 = vmatmul.mubr.bf16.gmra.mxu0 %v93
  %v295 = vpop.f32.mrf.mxu0
  %v296 = vadd.f32 %v60, %v295
  %v297 = vpop.f32.mrf.mxu0
  %v298 = vadd.f32 %v64, %v297
  %v299 = vpop.f32.mrf.mxu0
  %v300 = vadd.f32 %v60, %v299
  %v301 = vpop.f32.mrf.mxu0
  %v302 = vadd.f32 %v64, %v301
  %303 = vmatprep.mubr.bf16.mxu0 0
  %304 = vmatmul.mubr.bf16.gmra.mxu0 %v94
  %v305 = vpop.f32.mrf.mxu0
  %v306 = vadd.f32 %v60, %v305
  %v307 = vpop.f32.mrf.mxu0
  %v308 = vadd.f32 %v64, %v307
  %v309 = vpop.f32.mrf.mxu0
  %v310 = vadd.f32 %v60, %v309
  %v311 = vpop.f32.mrf.mxu0
  %v312 = vadd.f32 %v64, %v311
  %313 = vmatprep.mubr.bf16.mxu0 0
  %314 = vmatmul.mubr.bf16.gmra.mxu0 %v95
  %v315 = vpop.f32.mrf.mxu0
  %v316 = vadd.f32 %v60, %v315
  %v317 = vpop.f32.mrf.mxu0
  %v318 = vadd.f32 %v64, %v317
  %v319 = vpop.f32.mrf.mxu0
  %v320 = vadd.f32 %v60, %v319
  %v321 = vpop.f32.mrf.mxu0
  %v322 = vadd.f32 %v64, %v321
  %323 = vmatprep.mubr.bf16.mxu0 0
  %324 = vmatmul.mubr.bf16.gmra.mxu0 %v96
  %v325 = vpop.f32.mrf.mxu0
  %v326 = vadd.f32 %v60, %v325
  %v327 = vpop.f32.mrf.mxu0
  %v328 = vadd.f32 %v64, %v327
  %v329 = vpop.f32.mrf.mxu0
  %v330 = vadd.f32 %v60, %v329
  %v331 = vpop.f32.mrf.mxu0
  %v332 = vadd.f32 %v64, %v331
  %333 = vdwg.mxu0
  %334 = vmatprep.subr.bf16.mxu0 %v228
  %335 = vmatpush1.bf16.msra.mxu0 %v227
  %336 = vmatprep.subr.bf16.mxu0 %v224
  %337 = vmatpush1.bf16.msra.mxu0 %v223
  %338 = vmatprep.subr.bf16.mxu0 %v220
  %339 = vmatpush1.bf16.msra.mxu0 %v219
  %340 = vmatprep.subr.bf16.mxu0 %v216
  %341 = vmatpush1.bf16.msra.mxu0 %v215
  %342 = vmatprep.subr.bf16.mxu0 %v212
  %343 = vmatpush1.bf16.msra.mxu0 %v211
  %344 = vmatprep.subr.bf16.mxu0 %v208
  %345 = vmatpush1.bf16.msra.mxu0 %v207
  %346 = vmatprep.subr.bf16.mxu0 %v204
  %347 = vmatpush1.bf16.msra.mxu0 %v203
  %348 = vmatprep.subr.bf16.mxu0 %v200
  %349 = vmatpush1.bf16.msra.mxu0 %v199
  %350 = vmatprep.subr.bf16.mxu0 0
  %351 = vmatpush2.bf16.msra.mxu0 0
  %352 = vmatprep.subr.bf16.mxu0 0
  %353 = vmatpush2.bf16.msra.mxu0 0
  %354 = vmatprep.subr.bf16.mxu0 0
  %355 = vmatpush2.bf16.msra.mxu0 0
  %356 = vmatprep.subr.bf16.mxu0 0
  %357 = vmatpush2.bf16.msra.mxu0 0
  %358 = vmatprep.subr.bf16.mxu0 0
  %359 = vmatpush2.bf16.msra.mxu0 0
  %360 = vmatprep.subr.bf16.mxu0 0
  %361 = vmatpush2.bf16.msra.mxu0 0
  %362 = vmatprep.subr.bf16.mxu0 0
  %363 = vmatpush2.bf16.msra.mxu0 0
  %364 = vmatprep.subr.bf16.mxu0 0
  %365 = vmatpush2.bf16.msra.mxu0 0
  %366 = vmatprep.mubr.bf16.mxu0 0
  %367 = vmatmul.mubr.bf16.gmra.mxu0 %v93
  %v368 = vpop.f32.mrf.mxu0
  %v369 = vadd.f32 %v68, %v368
  %v370 = vpop.f32.mrf.mxu0
  %v371 = vadd.f32 %v72, %v370
  %v372 = vpop.f32.mrf.mxu0
  %v373 = vadd.f32 %v68, %v372
  %v374 = vpop.f32.mrf.mxu0
  %v375 = vadd.f32 %v72, %v374
  %376 = vmatprep.mubr.bf16.mxu0 0
  %377 = vmatmul.mubr.bf16.gmra.mxu0 %v94
  %v378 = vpop.f32.mrf.mxu0
  %v379 = vadd.f32 %v68, %v378
  %v380 = vpop.f32.mrf.mxu0
  %v381 = vadd.f32 %v72, %v380
  %v382 = vpop.f32.mrf.mxu0
  %v383 = vadd.f32 %v68, %v382
  %v384 = vpop.f32.mrf.mxu0
  %v385 = vadd.f32 %v72, %v384
  %386 = vmatprep.mubr.bf16.mxu0 0
  %387 = vmatmul.mubr.bf16.gmra.mxu0 %v95
  %v388 = vpop.f32.mrf.mxu0
  %v389 = vadd.f32 %v68, %v388
  %v390 = vpop.f32.mrf.mxu0
  %v391 = vadd.f32 %v72, %v390
  %v392 = vpop.f32.mrf.mxu0
  %v393 = vadd.f32 %v68, %v392
  %v394 = vpop.f32.mrf.mxu0
  %v395 = vadd.f32 %v72, %v394
  %396 = vmatprep.mubr.bf16.mxu0 0
  %397 = vmatmul.mubr.bf16.gmra.mxu0 %v96
  %v398 = vpop.f32.mrf.mxu0
  %v399 = vadd.f32 %v68, %v398
  %v400 = vpop.f32.mrf.mxu0
  %v401 = vadd.f32 %v72, %v400
  %v402 = vpop.f32.mrf.mxu0
  %v403 = vadd.f32 %v68, %v402
  %v404 = vpop.f32.mrf.mxu0
  %v405 = vadd.f32 %v72, %v404
  %406 = vdwg.mxu0
  %v407 = vpack.c.bf16 %v300, %v296
  %v408 = vpack.c.bf16 %v302, %v298
  %v409 = vpack.c.bf16 %v373, %v369
  %v410 = vpack.c.bf16 %v375, %v371
  %v411 = vpack.c.bf16 %v310, %v306
  %v412 = vpack.c.bf16 %v312, %v308
  %v413 = vpack.c.bf16 %v383, %v379
  %v414 = vpack.c.bf16 %v385, %v381
  %v415 = vpack.c.bf16 %v320, %v316
  %v416 = vpack.c.bf16 %v322, %v318
  %v417 = vpack.c.bf16 %v393, %v389
  %v418 = vpack.c.bf16 %v395, %v391
  %v419 = vpack.c.bf16 %v330, %v326
  %v420 = vpack.c.bf16 %v332, %v328
  %v421 = vpack.c.bf16 %v403, %v399
  %v422 = vpack.c.bf16 %v405, %v401
  %v439 = vunpack.c.l.b16 %v407
  %v440 = vunpack.c.l.b16 %v408
  %v441 = vunpack.c.l.b16 %v409
  %v442 = vunpack.c.l.b16 %v410
  %v443 = vunpack.c.h.b16 %v407
  %v444 = vunpack.c.h.b16 %v408
  %v445 = vunpack.c.h.b16 %v409
  %v446 = vunpack.c.h.b16 %v410
  %v447 = vunpack.c.l.b16 %v411
  %v448 = vunpack.c.l.b16 %v412
  %v449 = vunpack.c.l.b16 %v413
  %v450 = vunpack.c.l.b16 %v414
  %v451 = vunpack.c.h.b16 %v411
  %v452 = vunpack.c.h.b16 %v412
  %v453 = vunpack.c.h.b16 %v413
  %v454 = vunpack.c.h.b16 %v414
  %v455 = vunpack.c.l.b16 %v415
  %v456 = vunpack.c.l.b16 %v416
  %v457 = vunpack.c.l.b16 %v417
  %v458 = vunpack.c.l.b16 %v418
  %v459 = vunpack.c.h.b16 %v415
  %v460 = vunpack.c.h.b16 %v416
  %v461 = vunpack.c.h.b16 %v417
  %v462 = vunpack.c.h.b16 %v418
  %v463 = vunpack.c.l.b16 %v419
  %v464 = vunpack.c.l.b16 %v420
  %v465 = vunpack.c.l.b16 %v421
  %v466 = vunpack.c.l.b16 %v422
  %v467 = vunpack.c.h.b16 %v419
  %v468 = vunpack.c.h.b16 %v420
  %v469 = vunpack.c.h.b16 %v421
  %v470 = vunpack.c.h.b16 %v422
  %v471 = vpack.c.b16 %v440, %v439
  %v472 = vpack.c.b16 %v442, %v441
  %v473 = vpack.c.b16 %v444, %v443
  %v474 = vpack.c.b16 %v446, %v445
  %v475 = vpack.c.b16 %v448, %v447
  %v476 = vpack.c.b16 %v450, %v449
  %v477 = vpack.c.b16 %v452, %v451
  %v478 = vpack.c.b16 %v454, %v453
  %v479 = vpack.c.b16 %v456, %v455
  %v480 = vpack.c.b16 %v458, %v457
  %v481 = vpack.c.b16 %v460, %v459
  %v482 = vpack.c.b16 %v462, %v461
  %v483 = vpack.c.b16 %v464, %v463
  %v484 = vpack.c.b16 %v466, %v465
  %v485 = vpack.c.b16 %v468, %v467
  %v486 = vpack.c.b16 %v470, %v469
  %503 = vst [vmem:[%s3] sm:$0xff] %v471
  %504 = vst [vmem:[%s3 + $0x8] sm:$0xff] %v472
  %505 = vst [vmem:[%s3 + $0x10] sm:$0xff] %v473
  %506 = vst [vmem:[%s3 + $0x18] sm:$0xff] %v474
  %507 = vst [vmem:[%s3 + $0x20] sm:$0xff] %v475
  %508 = vst [vmem:[%s3 + $0x28] sm:$0xff] %v476
  %509 = vst [vmem:[%s3 + $0x30] sm:$0xff] %v477
  %510 = vst [vmem:[%s3 + $0x38] sm:$0xff] %v478
  %511 = vst [vmem:[%s3 + $0x40] sm:$0xff] %v479
  %512 = vst [vmem:[%s3 + $0x48] sm:$0xff] %v480
  %513 = vst [vmem:[%s3 + $0x50] sm:$0xff] %v481
  %514 = vst [vmem:[%s3 + $0x58] sm:$0xff] %v482
  %515 = vst [vmem:[%s3 + $0x60] sm:$0xff] %v483
  %516 = vst [vmem:[%s3 + $0x68] sm:$0xff] %v484
  %517 = vst [vmem:[%s3 + $0x70] sm:$0xff] %v485
  %518 = vst [vmem:[%s3 + $0x78] sm:$0xff] %v486
  // Predicated region
  $region14: #{rnn_seq_note_forward.7} parent=0 // pred_check
    _
  $region15: #{rnn_seq_note_forward.7} parent=0 // pred_check_branch
    %520 = sbr.rel (0) target = $region17
  $region16: #{rnn_seq_note_forward.7} parent=0 // pred_region
    _
  $region17: #{rnn_seq_note_forward.7} parent=0 // pred_fallthru
    _
  // Predicated region
  $region18: #{rnn_seq_note_forward.7} parent=0 // pred_check
    _
  $region19: #{rnn_seq_note_forward.7} parent=0 // pred_check_branch
    %522 = sbr.rel (0) target = $region21
  $region20: #{rnn_seq_note_forward.7} parent=0 // pred_region
    _
  $region21: #{rnn_seq_note_forward.7} parent=0 // pred_fallthru
    _

// kernel: rnn_seq_note_forward.6
$region0: #{rnn_seq_note_forward.6}
  #allocation0 [shape = 'u32[]', space=smem, size = 0x4, offset = 0x4, fixed_abs, tag = 'smem constant byte address 0x4 - core index']
  #allocation1 [shape = 'u32[144,128]{1,0:T(1,128)}', space=vmem, size = 0x12000, scoped, tag = 'internal scratch']
  #allocation2 [shape = 'bf16[8,128]{1,0:T(8,128)(2,1)}', space=vmem, size = 0x800, scoped, tag = 'scratch operand']
  #allocation3 [shape = 'f32[8,128]{1,0:T(8,128)}', space=vmem, size = 0x1000, scoped, tag = 'scratch operand']
  %s0 = inlined_call_operand.vmem [shape: bf16[8,8,512], index: 0, kind: input, shape index: {}]
  %s1 = inlined_call_operand.vmem [shape: bf16[128,512], index: 1, kind: input, shape index: {}]
  %s2 = inlined_call_operand.vmem [shape: bf16[8,8,128], index: 2, kind: output, shape index: {}]
  %s3 = sld [smem:[#allocation0]]
  $region22: #{rnn_seq_note_forward.6} parent=0
    _
  %s5 = ssub.s32 1, %s3
  %s6 = scalar_select 0, %s5, %s3
  // Predicated region
  $region2: #{rnn_seq_note_forward.6} parent=0 // pred_check
    _
  $region3: #{rnn_seq_note_forward.6} parent=0 // pred_check_branch
    %8 = sbr.rel (0) target = $region5
  $region4: #{rnn_seq_note_forward.6} parent=0 // pred_region
    _
  $region5: #{rnn_seq_note_forward.6} parent=0 // pred_fallthru
    _
  // Predicated region
  $region6: #{rnn_seq_note_forward.6} parent=0 // pred_check
    _
  $region7: #{rnn_seq_note_forward.6} parent=0 // pred_check_branch
    %10 = sbr.rel (0) target = $region9
  $region8: #{rnn_seq_note_forward.6} parent=0 // pred_region
    _
  $region9: #{rnn_seq_note_forward.6} parent=0 // pred_fallthru
    _
  %p12 = scmp.eq.s32.totalorder 0, 0
  // Predicated region
  $region10: #{rnn_seq_note_forward.6} parent=0 // pred_check
    %p13 = pneg %p12
  $region11: #{rnn_seq_note_forward.6} parent=0 // pred_check_branch
    %15 = sbr.rel (%p13) target = $region13
  $region12: #{rnn_seq_note_forward.6} parent=0 // pred_region
    %16 = vst [vmem:[#allocation2] sm:$0xf] 0
    %17 = vst [vmem:[#allocation3] sm:$0xff] 0.0
  $region13: #{rnn_seq_note_forward.6} parent=0 // pred_fallthru
    _
  %v18 = vld [vmem:[%s0] sm:$0xff]
  %v19 = vld [vmem:[%s0 + $0x8] sm:$0xff]
  %v20 = vunpack.c.l.bf16 %v18
  %v21 = vunpack.c.h.bf16 %v18
  %v22 = vunpack.c.l.bf16 %v19
  %v23 = vunpack.c.h.bf16 %v19
  %v24 = vld [vmem:[#allocation2] sm:$0xf]
  %v25 = vld [vmem:[%s1] sm:$0xff]
  %v26 = vld [vmem:[%s1 + $0x8] sm:$0xff]
  %v27 = vld [vmem:[%s1 + $0x10] sm:$0xff]
  %v28 = vld [vmem:[%s1 + $0x18] sm:$0xff]
  %v29 = vld [vmem:[%s1 + $0x20] sm:$0xff]
  %v30 = vld [vmem:[%s1 + $0x28] sm:$0xff]
  %v31 = vld [vmem:[%s1 + $0x30] sm:$0xff]
  %v32 = vld [vmem:[%s1 + $0x38] sm:$0xff]
  %v33 = vld [vmem:[%s1 + $0x40] sm:$0xff]
  %v34 = vld [vmem:[%s1 + $0x48] sm:$0xff]
  %v35 = vld [vmem:[%s1 + $0x50] sm:$0xff]
  %v36 = vld [vmem:[%s1 + $0x58] sm:$0xff]
  %v37 = vld [vmem:[%s1 + $0x60] sm:$0xff]
  %v38 = vld [vmem:[%s1 + $0x68] sm:$0xff]
  %v39 = vld [vmem:[%s1 + $0x70] sm:$0xff]
  %v40 = vld [vmem:[%s1 + $0x78] sm:$0xff]
  %v41 = vld [vmem:[%s1 + $0x80] sm:$0xff]
  %v42 = vld [vmem:[%s1 + $0x88] sm:$0xff]
  %v43 = vld [vmem:[%s1 + $0x90] sm:$0xff]
  %v44 = vld [vmem:[%s1 + $0x98] sm:$0xff]
  %v45 = vld [vmem:[%s1 + $0xa0] sm:$0xff]
  %v46 = vld [vmem:[%s1 + $0xa8] sm:$0xff]
  %v47 = vld [vmem:[%s1 + $0xb0] sm:$0xff]
  %v48 = vld [vmem:[%s1 + $0xb8] sm:$0xff]
  %v49 = vld [vmem:[%s1 + $0xc0] sm:$0xff]
  %v50 = vld [vmem:[%s1 + $0xc8] sm:$0xff]
  %v51 = vld [vmem:[%s1 + $0xd0] sm:$0xff]
  %v52 = vld [vmem:[%s1 + $0xd8] sm:$0xff]
  %v53 = vld [vmem:[%s1 + $0xe0] sm:$0xff]
  %v54 = vld [vmem:[%s1 + $0xe8] sm:$0xff]
  %v55 = vld [vmem:[%s1 + $0xf0] sm:$0xff]
  %v56 = vld [vmem:[%s1 + $0xf8] sm:$0xff]
  %v89 = vunpack.c.l.b16 %v25
  %v90 = vunpack.c.h.b16 %v25
  %v91 = vunpack.c.l.b16 %v26
  %v92 = vunpack.c.h.b16 %v26
  %v93 = vunpack.c.l.b16 %v27
  %v94 = vunpack.c.h.b16 %v27
  %v95 = vunpack.c.l.b16 %v28
  %v96 = vunpack.c.h.b16 %v28
  %v97 = vunpack.c.l.b16 %v29
  %v98 = vunpack.c.h.b16 %v29
  %v99 = vunpack.c.l.b16 %v30
  %v100 = vunpack.c.h.b16 %v30
  %v101 = vunpack.c.l.b16 %v31
  %v102 = vunpack.c.h.b16 %v31
  %v103 = vunpack.c.l.b16 %v32
  %v104 = vunpack.c.h.b16 %v32
  %v105 = vunpack.c.l.b16 %v33
  %v106 = vunpack.c.h.b16 %v33
  %v107 = vunpack.c.l.b16 %v34
  %v108 = vunpack.c.h.b16 %v34
  %v109 = vunpack.c.l.b16 %v35
  %v110 = vunpack.c.h.b16 %v35
  %v111 = vunpack.c.l.b16 %v36
  %v112 = vunpack.c.h.b16 %v36
  %v113 = vunpack.c.l.b16 %v37
  %v114 = vunpack.c.h.b16 %v37
  %v115 = vunpack.c.l.b16 %v38
  %v116 = vunpack.c.h.b16 %v38
  %v117 = vunpack.c.l.b16 %v39
  %v118 = vunpack.c.h.b16 %v39
  %v119 = vunpack.c.l.b16 %v40
  %v120 = vunpack.c.h.b16 %v40
  %v121 = vunpack.c.l.b16 %v41
  %v122 = vunpack.c.h.b16 %v41
  %v123 = vunpack.c.l.b16 %v42
  %v124 = vunpack.c.h.b16 %v42
  %v125 = vunpack.c.l.b16 %v43
  %v126 = vunpack.c.h.b16 %v43
  %v127 = vunpack.c.l.b16 %v44
  %v128 = vunpack.c.h.b16 %v44
  %v129 = vunpack.c.l.b16 %v45
  %v130 = vunpack.c.h.b16 %v45
  %v131 = vunpack.c.l.b16 %v46
  %v132 = vunpack.c.h.b16 %v46
  %v133 = vunpack.c.l.b16 %v47
  %v134 = vunpack.c.h.b16 %v47
  %v135 = vunpack.c.l.b16 %v48
  %v136 = vunpack.c.h.b16 %v48
  %v137 = vunpack.c.l.b16 %v49
  %v138 = vunpack.c.h.b16 %v49
  %v139 = vunpack.c.l.b16 %v50
  %v140 = vunpack.c.h.b16 %v50
  %v141 = vunpack.c.l.b16 %v51
  %v142 = vunpack.c.h.b16 %v51
  %v143 = vunpack.c.l.b16 %v52
  %v144 = vunpack.c.h.b16 %v52
  %v145 = vunpack.c.l.b16 %v53
  %v146 = vunpack.c.h.b16 %v53
  %v147 = vunpack.c.l.b16 %v54
  %v148 = vunpack.c.h.b16 %v54
  %v149 = vunpack.c.l.b16 %v55
  %v150 = vunpack.c.h.b16 %v55
  %v151 = vunpack.c.l.b16 %v56
  %v152 = vunpack.c.h.b16 %v56
  %v153 = vpack.c.b16 %v93, %v89
  %v154 = vpack.c.b16 %v94, %v90
  %v155 = vpack.c.b16 %v95, %v91
  %v156 = vpack.c.b16 %v96, %v92
  %v157 = vpack.c.b16 %v101, %v97
  %v158 = vpack.c.b16 %v102, %v98
  %v159 = vpack.c.b16 %v103, %v99
  %v160 = vpack.c.b16 %v104, %v100
  %v161 = vpack.c.b16 %v109, %v105
  %v162 = vpack.c.b16 %v110, %v106
  %v163 = vpack.c.b16 %v111, %v107
  %v164 = vpack.c.b16 %v112, %v108
  %v165 = vpack.c.b16 %v117, %v113
  %v166 = vpack.c.b16 %v118, %v114
  %v167 = vpack.c.b16 %v119, %v115
  %v168 = vpack.c.b16 %v120, %v116
  %v169 = vpack.c.b16 %v125, %v121
  %v170 = vpack.c.b16 %v126, %v122
  %v171 = vpack.c.b16 %v127, %v123
  %v172 = vpack.c.b16 %v128, %v124
  %v173 = vpack.c.b16 %v133, %v129
  %v174 = vpack.c.b16 %v134, %v130
  %v175 = vpack.c.b16 %v135, %v131
  %v176 = vpack.c.b16 %v136, %v132
  %v177 = vpack.c.b16 %v141, %v137
  %v178 = vpack.c.b16 %v142, %v138
  %v179 = vpack.c.b16 %v143, %v139
  %v180 = vpack.c.b16 %v144, %v140
  %v181 = vpack.c.b16 %v149, %v145
  %v182 = vpack.c.b16 %v150, %v146
  %v183 = vpack.c.b16 %v151, %v147
  %v184 = vpack.c.b16 %v152, %v148
  %217 = vmatprep.subr.bf16.mxu0 %v182
  %218 = vmatpush1.bf16.msra.mxu0 %v181
  %219 = vmatprep.subr.bf16.mxu0 %v178
  %220 = vmatpush1.bf16.msra.mxu0 %v177
  %221 = vmatprep.subr.bf16.mxu0 %v174
  %222 = vmatpush1.bf16.msra.mxu0 %v173
  %223 = vmatprep.subr.bf16.mxu0 %v170
  %224 = vmatpush1.bf16.msra.mxu0 %v169
  %225 = vmatprep.subr.bf16.mxu0 %v166
  %226 = vmatpush1.bf16.msra.mxu0 %v165
  %227 = vmatprep.subr.bf16.mxu0 %v162
  %228 = vmatpush1.bf16.msra.mxu0 %v161
  %229 = vmatprep.subr.bf16.mxu0 %v158
  %230 = vmatpush1.bf16.msra.mxu0 %v157
  %231 = vmatprep.subr.bf16.mxu0 %v154
  %232 = vmatpush1.bf16.msra.mxu0 %v153
  %233 = vmatprep.subr.bf16.mxu0 0
  %234 = vmatpush2.bf16.msra.mxu0 0
  %235 = vmatprep.subr.bf16.mxu0 0
  %236 = vmatpush2.bf16.msra.mxu0 0
  %237 = vmatprep.subr.bf16.mxu0 0
  %238 = vmatpush2.bf16.msra.mxu0 0
  %239 = vmatprep.subr.bf16.mxu0 0
  %240 = vmatpush2.bf16.msra.mxu0 0
  %241 = vmatprep.subr.bf16.mxu0 0
  %242 = vmatpush2.bf16.msra.mxu0 0
  %243 = vmatprep.subr.bf16.mxu0 0
  %244 = vmatpush2.bf16.msra.mxu0 0
  %245 = vmatprep.subr.bf16.mxu0 0
  %246 = vmatpush2.bf16.msra.mxu0 0
  %247 = vmatprep.subr.bf16.mxu0 0
  %248 = vmatpush2.bf16.msra.mxu0 0
  %249 = vmatprep.mubr.bf16.mxu0 0
  %250 = vmatmul.mubr.bf16.gmra.mxu0 %v24
  %v251 = vpop.f32.mrf.mxu0
  %v252 = vadd.f32 0.0, %v251
  %v253 = vpop.f32.mrf.mxu0
  %v254 = vadd.f32 0.0, %v253
  %v255 = vpop.f32.mrf.mxu0
  %v256 = vpop.f32.mrf.mxu0
  %257 = vdwg.mxu0
  %258 = vmatprep.subr.bf16.mxu0 %v184
  %259 = vmatpush1.bf16.msra.mxu0 %v183
  %260 = vmatprep.subr.bf16.mxu0 %v180
  %261 = vmatpush1.bf16.msra.mxu0 %v179
  %262 = vmatprep.subr.bf16.mxu0 %v176
  %263 = vmatpush1.bf16.msra.mxu0 %v175
  %264 = vmatprep.subr.bf16.mxu0 %v172
  %265 = vmatpush1.bf16.msra.mxu0 %v171
  %266 = vmatprep.subr.bf16.mxu0 %v168
  %267 = vmatpush1.bf16.msra.mxu0 %v167
  %268 = vmatprep.subr.bf16.mxu0 %v164
  %269 = vmatpush1.bf16.msra.mxu0 %v163
  %270 = vmatprep.subr.bf16.mxu0 %v160
  %271 = vmatpush1.bf16.msra.mxu0 %v159
  %272 = vmatprep.subr.bf16.mxu0 %v156
  %273 = vmatpush1.bf16.msra.mxu0 %v155
  %274 = vmatprep.subr.bf16.mxu0 0
  %275 = vmatpush2.bf16.msra.mxu0 0
  %276 = vmatprep.subr.bf16.mxu0 0
  %277 = vmatpush2.bf16.msra.mxu0 0
  %278 = vmatprep.subr.bf16.mxu0 0
  %279 = vmatpush2.bf16.msra.mxu0 0
  %280 = vmatprep.subr.bf16.mxu0 0
  %281 = vmatpush2.bf16.msra.mxu0 0
  %282 = vmatprep.subr.bf16.mxu0 0
  %283 = vmatpush2.bf16.msra.mxu0 0
  %284 = vmatprep.subr.bf16.mxu0 0
  %285 = vmatpush2.bf16.msra.mxu0 0
  %286 = vmatprep.subr.bf16.mxu0 0
  %287 = vmatpush2.bf16.msra.mxu0 0
  %288 = vmatprep.subr.bf16.mxu0 0
  %289 = vmatpush2.bf16.msra.mxu0 0
  %290 = vmatprep.mubr.bf16.mxu0 0
  %291 = vmatmul.mubr.bf16.gmra.mxu0 %v24
  %v292 = vpop.f32.mrf.mxu0
  %v293 = vadd.f32 0.0, %v292
  %v294 = vpop.f32.mrf.mxu0
  %v295 = vadd.f32 0.0, %v294
  %v296 = vpop.f32.mrf.mxu0
  %v297 = vpop.f32.mrf.mxu0
  %298 = vdwg.mxu0
  %v299 = vadd.f32 %v20, %v252
  %v300 = vadd.f32 %v21, %v254
  %v301 = vadd.f32 %v22, %v293
  %v302 = vadd.f32 %v23, %v295
  %v303 = vxor.u32 %v299, 2147483648
  %v304 = vxor.u32 %v300, 2147483648
  %v305 = vxor.u32 %v301, 2147483648
  %v306 = vmul.f32 %v303, 1.442695
  %v307 = vpow.pop %v306
  %v308 = vmul.f32 %v304, 1.442695
  %v309 = vpow.pop %v308
  %v310 = vmul.f32 %v305, 1.442695
  %v311 = vpow.pop %v310
  %v312 = vadd.f32 %v307, 1.0
  %v313 = vadd.f32 %v309, 1.0
  %v314 = vadd.f32 %v311, 1.0
  %v315 = vrcp.pop %v312
  %v316 = vmul.f32 1.0, %v315
  %v317 = vrcp.pop %v313
  %v318 = vmul.f32 1.0, %v317
  %v319 = vrcp.pop %v314
  %v320 = vmul.f32 1.0, %v319
  %v321 = vtanh.pop %v302
  %v322 = vld [vmem:[#allocation3] sm:$0xff]
  %v323 = vmul.f32 %v318, %v322
  %v324 = vmul.f32 %v316, %v321
  %v325 = vadd.f32 %v323, %v324
  %v326 = vtanh.pop %v325
  %v327 = vmul.f32 %v320, %v326
  %v328 = vpack.c.bf16 %v327, %v327
  %329 = vst [vmem:[#allocation3] sm:$0xff] %v325
  %330 = vst [vmem:[#allocation2] sm:$0xf] %v328
  %331 = vst [vmem:[%s2] sm:$0xf] %v328
  %s332 = scalar_lea.vmem %s0, 16
  %v333 = vld [vmem:[%s332] sm:$0xff]
  %v334 = vld [vmem:[%s332 + $0x8] sm:$0xff]
  %v335 = vunpack.c.l.bf16 %v333
  %v336 = vunpack.c.h.bf16 %v333
  %v337 = vunpack.c.l.bf16 %v334
  %v338 = vunpack.c.h.bf16 %v334
  %v339 = vld [vmem:[#allocation2] sm:$0xf]
  %v340 = vld [vmem:[%s1] sm:$0xff]
  %v341 = vld [vmem:[%s1 + $0x8] sm:$0xff]
  %v342 = vld [vmem:[%s1 + $0x10] sm:$0xff]
  %v343 = vld [vmem:[%s1 + $0x18] sm:$0xff]
  %v344 = vld [vmem:[%s1 + $0x20] sm:$0xff]
  %v345 = vld [vmem:[%s1 + $0x28] sm:$0xff]
  %v346 = vld [vmem:[%s1 + $0x30] sm:$0xff]
  %v347 = vld [vmem:[%s1 + $0x38] sm:$0xff]
  %v348 = vld [vmem:[%s1 + $0x40] sm:$0xff]
  %v349 = vld [vmem:[%s1 + $0x48] sm:$0xff]
  %v350 = vld [vmem:[%s1 + $0x50] sm:$0xff]
  %v351 = vld [vmem:[%s1 + $0x58] sm:$0xff]
  %v352 = vld [vmem:[%s1 + $0x60] sm:$0xff]
  %v353 = vld [vmem:[%s1 + $0x68] sm:$0xff]
  %v354 = vld [vmem:[%s1 + $0x70] sm:$0xff]
  %v355 = vld [vmem:[%s1 + $0x78] sm:$0xff]
  %v356 = vld [vmem:[%s1 + $0x80] sm:$0xff]
  %v357 = vld [vmem:[%s1 + $0x88] sm:$0xff]
  %v358 = vld [vmem:[%s1 + $0x90] sm:$0xff]
  %v359 = vld [vmem:[%s1 + $0x98] sm:$0xff]
  %v360 = vld [vmem:[%s1 + $0xa0] sm:$0xff]
  %v361 = vld [vmem:[%s1 + $0xa8] sm:$0xff]
  %v362 = vld [vmem:[%s1 + $0xb0] sm:$0xff]
  %v363 = vld [vmem:[%s1 + $0xb8] sm:$0xff]
  %v364 = vld [vmem:[%s1 + $0xc0] sm:$0xff]
  %v365 = vld [vmem:[%s1 + $0xc8] sm:$0xff]
  %v366 = vld [vmem:[%s1 + $0xd0] sm:$0xff]
  %v367 = vld [vmem:[%s1 + $0xd8] sm:$0xff]
  %v368 = vld [vmem:[%s1 + $0xe0] sm:$0xff]
  %v369 = vld [vmem:[%s1 + $0xe8] sm:$0xff]
  %v370 = vld [vmem:[%s1 + $0xf0] sm:$0xff]
  %v371 = vld [vmem:[%s1 + $0xf8] sm:$0xff]
  %v404 = vunpack.c.l.b16 %v340
  %v405 = vunpack.c.h.b16 %v340
  %v406 = vunpack.c.l.b16 %v341
  %v407 = vunpack.c.h.b16 %v341
  %v408 = vunpack.c.l.b16 %v342
  %v409 = vunpack.c.h.b16 %v342
  %v410 = vunpack.c.l.b16 %v343
  %v411 = vunpack.c.h.b16 %v343
  %v412 = vunpack.c.l.b16 %v344
  %v413 = vunpack.c.h.b16 %v344
  %v414 = vunpack.c.l.b16 %v345
  %v415 = vunpack.c.h.b16 %v345
  %v416 = vunpack.c.l.b16 %v346
  %v417 = vunpack.c.h.b16 %v346
  %v418 = vunpack.c.l.b16 %v347
  %v419 = vunpack.c.h.b16 %v347
  %v420 = vunpack.c.l.b16 %v348
  %v421 = vunpack.c.h.b16 %v348
  %v422 = vunpack.c.l.b16 %v349
  %v423 = vunpack.c.h.b16 %v349
  %v424 = vunpack.c.l.b16 %v350
  %v425 = vunpack.c.h.b16 %v350
  %v426 = vunpack.c.l.b16 %v351
  %v427 = vunpack.c.h.b16 %v351
  %v428 = vunpack.c.l.b16 %v352
  %v429 = vunpack.c.h.b16 %v352
  %v430 = vunpack.c.l.b16 %v353
  %v431 = vunpack.c.h.b16 %v353
  %v432 = vunpack.c.l.b16 %v354
  %v433 = vunpack.c.h.b16 %v354
  %v434 = vunpack.c.l.b16 %v355
  %v435 = vunpack.c.h.b16 %v355
  %v436 = vunpack.c.l.b16 %v356
  %v437 = vunpack.c.h.b16 %v356
  %v438 = vunpack.c.l.b16 %v357
  %v439 = vunpack.c.h.b16 %v357
  %v440 = vunpack.c.l.b16 %v358
  %v441 = vunpack.c.h.b16 %v358
  %v442 = vunpack.c.l.b16 %v359
  %v443 = vunpack.c.h.b16 %v359
  %v444 = vunpack.c.l.b16 %v360
  %v445 = vunpack.c.h.b16 %v360
  %v446 = vunpack.c.l.b16 %v361
  %v447 = vunpack.c.h.b16 %v361
  %v448 = vunpack.c.l.b16 %v362
  %v449 = vunpack.c.h.b16 %v362
  %v450 = vunpack.c.l.b16 %v363
  %v451 = vunpack.c.h.b16 %v363
  %v452 = vunpack.c.l.b16 %v364
  %v453 = vunpack.c.h.b16 %v364
  %v454 = vunpack.c.l.b16 %v365
  %v455 = vunpack.c.h.b16 %v365
  %v456 = vunpack.c.l.b16 %v366
  %v457 = vunpack.c.h.b16 %v366
  %v458 = vunpack.c.l.b16 %v367
  %v459 = vunpack.c.h.b16 %v367
  %v460 = vunpack.c.l.b16 %v368
  %v461 = vunpack.c.h.b16 %v368
  %v462 = vunpack.c.l.b16 %v369
  %v463 = vunpack.c.h.b16 %v369
  %v464 = vunpack.c.l.b16 %v370
  %v465 = vunpack.c.h.b16 %v370
  %v466 = vunpack.c.l.b16 %v371
  %v467 = vunpack.c.h.b16 %v371
  %v468 = vpack.c.b16 %v408, %v404
  %v469 = vpack.c.b16 %v409, %v405
  %v470 = vpack.c.b16 %v410, %v406
  %v471 = vpack.c.b16 %v411, %v407
  %v472 = vpack.c.b16 %v416, %v412
  %v473 = vpack.c.b16 %v417, %v413
  %v474 = vpack.c.b16 %v418, %v414
  %v475 = vpack.c.b16 %v419, %v415
  %v476 = vpack.c.b16 %v424, %v420
  %v477 = vpack.c.b16 %v425, %v421
  %v478 = vpack.c.b16 %v426, %v422
  %v479 = vpack.c.b16 %v427, %v423
  %v480 = vpack.c.b16 %v432, %v428
  %v481 = vpack.c.b16 %v433, %v429
  %v482 = vpack.c.b16 %v434, %v430
  %v483 = vpack.c.b16 %v435, %v431
  %v484 = vpack.c.b16 %v440, %v436
  %v485 = vpack.c.b16 %v441, %v437
  %v486 = vpack.c.b16 %v442, %v438
  %v487 = vpack.c.b16 %v443, %v439
  %v488 = vpack.c.b16 %v448, %v444
  %v489 = vpack.c.b16 %v449, %v445
  %v490 = vpack.c.b16 %v450, %v446
  %v491 = vpack.c.b16 %v451, %v447
  %v492 = vpack.c.b16 %v456, %v452
  %v493 = vpack.c.b16 %v457, %v453
  %v494 = vpack.c.b16 %v458, %v454
  %v495 = vpack.c.b16 %v459, %v455
  %v496 = vpack.c.b16 %v464, %v460
  %v497 = vpack.c.b16 %v465, %v461
  %v498 = vpack.c.b16 %v466, %v462
  %v499 = vpack.c.b16 %v467, %v463
  %532 = vmatprep.subr.bf16.mxu0 %v497
  %533 = vmatpush1.bf16.msra.mxu0 %v496
  %534 = vmatprep.subr.bf16.mxu0 %v493
  %535 = vmatpush1.bf16.msra.mxu0 %v492
  %536 = vmatprep.subr.bf16.mxu0 %v489
  %537 = vmatpush1.bf16.msra.mxu0 %v488
  %538 = vmatprep.subr.bf16.mxu0 %v485
  %539 = vmatpush1.bf16.msra.mxu0 %v484
  %540 = vmatprep.subr.bf16.mxu0 %v481
  %541 = vmatpush1.bf16.msra.mxu0 %v480
  %542 = vmatprep.subr.bf16.mxu0 %v477
  %543 = vmatpush1.bf16.msra.mxu0 %v476
  %544 = vmatprep.subr.bf16.mxu0 %v473
  %545 = vmatpush1.bf16.msra.mxu0 %v472
  %546 = vmatprep.subr.bf16.mxu0 %v469
  %547 = vmatpush1.bf16.msra.mxu0 %v468
  %548 = vmatprep.subr.bf16.mxu0 0
  %549 = vmatpush2.bf16.msra.mxu0 0
  %550 = vmatprep.subr.bf16.mxu0 0
  %551 = vmatpush2.bf16.msra.mxu0 0
  %552 = vmatprep.subr.bf16.mxu0 0
  %553 = vmatpush2.bf16.msra.mxu0 0
  %554 = vmatprep.subr.bf16.mxu0 0
  %555 = vmatpush2.bf16.msra.mxu0 0
  %556 = vmatprep.subr.bf16.mxu0 0
  %557 = vmatpush2.bf16.msra.mxu0 0
  %558 = vmatprep.subr.bf16.mxu0 0
  %559 = vmatpush2.bf16.msra.mxu0 0
  %560 = vmatprep.subr.bf16.mxu0 0
  %561 = vmatpush2.bf16.msra.mxu0 0
  %562 = vmatprep.subr.bf16.mxu0 0
  %563 = vmatpush2.bf16.msra.mxu0 0
  %564 = vmatprep.mubr.bf16.mxu0 0
  %565 = vmatmul.mubr.bf16.gmra.mxu0 %v339
  %v566 = vpop.f32.mrf.mxu0
  %v567 = vadd.f32 0.0, %v566
  %v568 = vpop.f32.mrf.mxu0
  %v569 = vadd.f32 0.0, %v568
  %v570 = vpop.f32.mrf.mxu0
  %v571 = vpop.f32.mrf.mxu0
  %572 = vdwg.mxu0
  %573 = vmatprep.subr.bf16.mxu0 %v499
  %574 = vmatpush1.bf16.msra.mxu0 %v498
  %575 = vmatprep.subr.bf16.mxu0 %v495
  %576 = vmatpush1.bf16.msra.mxu0 %v494
  %577 = vmatprep.subr.bf16.mxu0 %v491
  %578 = vmatpush1.bf16.msra.mxu0 %v490
  %579 = vmatprep.subr.bf16.mxu0 %v487
  %580 = vmatpush1.bf16.msra.mxu0 %v486
  %581 = vmatprep.subr.bf16.mxu0 %v483
  %582 = vmatpush1.bf16.msra.mxu0 %v482
  %583 = vmatprep.subr.bf16.mxu0 %v479
  %584 = vmatpush1.bf16.msra.mxu0 %v478
  %585 = vmatprep.subr.bf16.mxu0 %v475
  %586 = vmatpush1.bf16.msra.mxu0 %v474
  %587 = vmatprep.subr.bf16.mxu0 %v471
  %588 = vmatpush1.bf16.msra.mxu0 %v470
  %589 = vmatprep.subr.bf16.mxu0 0
  %590 = vmatpush2.bf16.msra.mxu0 0
  %591 = vmatprep.subr.bf16.mxu0 0
  %592 = vmatpush2.bf16.msra.mxu0 0
  %593 = vmatprep.subr.bf16.mxu0 0
  %594 = vmatpush2.bf16.msra.mxu0 0
  %595 = vmatprep.subr.bf16.mxu0 0
  %596 = vmatpush2.bf16.msra.mxu0 0
  %597 = vmatprep.subr.bf16.mxu0 0
  %598 = vmatpush2.bf16.msra.mxu0 0
  %599 = vmatprep.subr.bf16.mxu0 0
  %600 = vmatpush2.bf16.msra.mxu0 0
  %601 = vmatprep.subr.bf16.mxu0 0
  %602 = vmatpush2.bf16.msra.mxu0 0
  %603 = vmatprep.subr.bf16.mxu0 0
  %604 = vmatpush2.bf16.msra.mxu0 0
  %605 = vmatprep.mubr.bf16.mxu0 0
  %606 = vmatmul.mubr.bf16.gmra.mxu0 %v339
  %v607 = vpop.f32.mrf.mxu0
  %v608 = vadd.f32 0.0, %v607
  %v609 = vpop.f32.mrf.mxu0
  %v610 = vadd.f32 0.0, %v609
  %v611 = vpop.f32.mrf.mxu0
  %v612 = vpop.f32.mrf.mxu0
  %613 = vdwg.mxu0
  %v614 = vadd.f32 %v335, %v567
  %v615 = vadd.f32 %v336, %v569
  %v616 = vadd.f32 %v337, %v608
  %v617 = vadd.f32 %v338, %v610
  %v618 = vxor.u32 %v614, 2147483648
  %v619 = vxor.u32 %v615, 2147483648
  %v620 = vxor.u32 %v616, 2147483648
  %v621 = vmul.f32 %v618, 1.442695
  %v622 = vpow.pop %v621
  %v623 = vmul.f32 %v619, 1.442695
  %v624 = vpow.pop %v623
  %v625 = vmul.f32 %v620, 1.442695
  %v626 = vpow.pop %v625
  %v627 = vadd.f32 %v622, 1.0
  %v628 = vadd.f32 %v624, 1.0
  %v629 = vadd.f32 %v626, 1.0
  %v630 = vrcp.pop %v627
  %v631 = vmul.f32 1.0, %v630
  %v632 = vrcp.pop %v628
  %v633 = vmul.f32 1.0, %v632
  %v634 = vrcp.pop %v629
  %v635 = vmul.f32 1.0, %v634
  %v636 = vtanh.pop %v617
  %v637 = vld [vmem:[#allocation3] sm:$0xff]
  %v638 = vmul.f32 %v633, %v637
  %v639 = vmul.f32 %v631, %v636
  %v640 = vadd.f32 %v638, %v639
  %v641 = vtanh.pop %v640
  %v642 = vmul.f32 %v635, %v641
  %v643 = vpack.c.bf16 %v642, %v642
  %644 = vst [vmem:[#allocation3] sm:$0xff] %v640
  %645 = vst [vmem:[#allocation2] sm:$0xf] %v643
  %s646 = scalar_lea.vmem %s2, 4
  %647 = vst [vmem:[%s646] sm:$0xf] %v643
  %s648 = scalar_lea.vmem %s0, 32
  %v649 = vld [vmem:[%s648] sm:$0xff]
  %v650 = vld [vmem:[%s648 + $0x8] sm:$0xff]
  %v651 = vunpack.c.l.bf16 %v649
  %v652 = vunpack.c.h.bf16 %v649
  %v653 = vunpack.c.l.bf16 %v650
  %v654 = vunpack.c.h.bf16 %v650
  %v655 = vld [vmem:[#allocation2] sm:$0xf]
  %v656 = vld [vmem:[%s1] sm:$0xff]
  %v657 = vld [vmem:[%s1 + $0x8] sm:$0xff]
  %v658 = vld [vmem:[%s1 + $0x10] sm:$0xff]
  %v659 = vld [vmem:[%s1 + $0x18] sm:$0xff]
  %v660 = vld [vmem:[%s1 + $0x20] sm:$0xff]
  %v661 = vld [vmem:[%s1 + $0x28] sm:$0xff]
  %v662 = vld [vmem:[%s1 + $0x30] sm:$0xff]
  %v663 = vld [vmem:[%s1 + $0x38] sm:$0xff]
  %v664 = vld [vmem:[%s1 + $0x40] sm:$0xff]
  %v665 = vld [vmem:[%s1 + $0x48] sm:$0xff]
  %v666 = vld [vmem:[%s1 + $0x50] sm:$0xff]
  %v667 = vld [vmem:[%s1 + $0x58] sm:$0xff]
  %v668 = vld [vmem:[%s1 + $0x60] sm:$0xff]
  %v669 = vld [vmem:[%s1 + $0x68] sm:$0xff]
  %v670 = vld [vmem:[%s1 + $0x70] sm:$0xff]
  %v671 = vld [vmem:[%s1 + $0x78] sm:$0xff]
  %v672 = vld [vmem:[%s1 + $0x80] sm:$0xff]
  %v673 = vld [vmem:[%s1 + $0x88] sm:$0xff]
  %v674 = vld [vmem:[%s1 + $0x90] sm:$0xff]
  %v675 = vld [vmem:[%s1 + $0x98] sm:$0xff]
  %v676 = vld [vmem:[%s1 + $0xa0] sm:$0xff]
  %v677 = vld [vmem:[%s1 + $0xa8] sm:$0xff]
  %v678 = vld [vmem:[%s1 + $0xb0] sm:$0xff]
  %v679 = vld [vmem:[%s1 + $0xb8] sm:$0xff]
  %v680 = vld [vmem:[%s1 + $0xc0] sm:$0xff]
  %v681 = vld [vmem:[%s1 + $0xc8] sm:$0xff]
  %v682 = vld [vmem:[%s1 + $0xd0] sm:$0xff]
  %v683 = vld [vmem:[%s1 + $0xd8] sm:$0xff]
  %v684 = vld [vmem:[%s1 + $0xe0] sm:$0xff]
  %v685 = vld [vmem:[%s1 + $0xe8] sm:$0xff]
  %v686 = vld [vmem:[%s1 + $0xf0] sm:$0xff]
  %v687 = vld [vmem:[%s1 + $0xf8] sm:$0xff]
  %v720 = vunpack.c.l.b16 %v656
  %v721 = vunpack.c.h.b16 %v656
  %v722 = vunpack.c.l.b16 %v657
  %v723 = vunpack.c.h.b16 %v657
  %v724 = vunpack.c.l.b16 %v658
  %v725 = vunpack.c.h.b16 %v658
  %v726 = vunpack.c.l.b16 %v659
  %v727 = vunpack.c.h.b16 %v659
  %v728 = vunpack.c.l.b16 %v660
  %v729 = vunpack.c.h.b16 %v660
  %v730 = vunpack.c.l.b16 %v661
  %v731 = vunpack.c.h.b16 %v661
  %v732 = vunpack.c.l.b16 %v662
  %v733 = vunpack.c.h.b16 %v662
  %v734 = vunpack.c.l.b16 %v663
  %v735 = vunpack.c.h.b16 %v663
  %v736 = vunpack.c.l.b16 %v664
  %v737 = vunpack.c.h.b16 %v664
  %v738 = vunpack.c.l.b16 %v665
  %v739 = vunpack.c.h.b16 %v665
  %v740 = vunpack.c.l.b16 %v666
  %v741 = vunpack.c.h.b16 %v666
  %v742 = vunpack.c.l.b16 %v667
  %v743 = vunpack.c.h.b16 %v667
  %v744 = vunpack.c.l.b16 %v668
  %v745 = vunpack.c.h.b16 %v668
  %v746 = vunpack.c.l.b16 %v669
  %v747 = vunpack.c.h.b16 %v669
  %v748 = vunpack.c.l.b16 %v670
  %v749 = vunpack.c.h.b16 %v670
  %v750 = vunpack.c.l.b16 %v671
  %v751 = vunpack.c.h.b16 %v671
  %v752 = vunpack.c.l.b16 %v672
  %v753 = vunpack.c.h.b16 %v672
  %v754 = vunpack.c.l.b16 %v673
  %v755 = vunpack.c.h.b16 %v673
  %v756 = vunpack.c.l.b16 %v674
  %v757 = vunpack.c.h.b16 %v674
  %v758 = vunpack.c.l.b16 %v675
  %v759 = vunpack.c.h.b16 %v675
  %v760 = vunpack.c.l.b16 %v676
  %v761 = vunpack.c.h.b16 %v676
  %v762 = vunpack.c.l.b16 %v677
  %v763 = vunpack.c.h.b16 %v677
  %v764 = vunpack.c.l.b16 %v678
  %v765 = vunpack.c.h.b16 %v678
  %v766 = vunpack.c.l.b16 %v679
  %v767 = vunpack.c.h.b16 %v679
  %v768 = vunpack.c.l.b16 %v680
  %v769 = vunpack.c.h.b16 %v680
  %v770 = vunpack.c.l.b16 %v681
  %v771 = vunpack.c.h.b16 %v681
  %v772 = vunpack.c.l.b16 %v682
  %v773 = vunpack.c.h.b16 %v682
  %v774 = vunpack.c.l.b16 %v683
  %v775 = vunpack.c.h.b16 %v683
  %v776 = vunpack.c.l.b16 %v684
  %v777 = vunpack.c.h.b16 %v684
  %v778 = vunpack.c.l.b16 %v685
  %v779 = vunpack.c.h.b16 %v685
  %v780 = vunpack.c.l.b16 %v686
  %v781 = vunpack.c.h.b16 %v686
  %v782 = vunpack.c.l.b16 %v687
  %v783 = vunpack.c.h.b16 %v687
  %v784 = vpack.c.b16 %v724, %v720
  %v785 = vpack.c.b16 %v725, %v721
  %v786 = vpack.c.b16 %v726, %v722
  %v787 = vpack.c.b16 %v727, %v723
  %v788 = vpack.c.b16 %v732, %v728
  %v789 = vpack.c.b16 %v733, %v729
  %v790 = vpack.c.b16 %v734, %v730
  %v791 = vpack.c.b16 %v735, %v731
  %v792 = vpack.c.b16 %v740, %v736
  %v793 = vpack.c.b16 %v741, %v737
  %v794 = vpack.c.b16 %v742, %v738
  %v795 = vpack.c.b16 %v743, %v739
  %v796 = vpack.c.b16 %v748, %v744
  %v797 = vpack.c.b16 %v749, %v745
  %v798 = vpack.c.b16 %v750, %v746
  %v799 = vpack.c.b16 %v751, %v747
  %v800 = vpack.c.b16 %v756, %v752
  %v801 = vpack.c.b16 %v757, %v753
  %v802 = vpack.c.b16 %v758, %v754
  %v803 = vpack.c.b16 %v759, %v755
  %v804 = vpack.c.b16 %v764, %v760
  %v805 = vpack.c.b16 %v765, %v761
  %v806 = vpack.c.b16 %v766, %v762
  %v807 = vpack.c.b16 %v767, %v763
  %v808 = vpack.c.b16 %v772, %v768
  %v809 = vpack.c.b16 %v773, %v769
  %v810 = vpack.c.b16 %v774, %v770
  %v811 = vpack.c.b16 %v775, %v771
  %v812 = vpack.c.b16 %v780, %v776
  %v813 = vpack.c.b16 %v781, %v777
  %v814 = vpack.c.b16 %v782, %v778
  %v815 = vpack.c.b16 %v783, %v779
  %848 = vmatprep.subr.bf16.mxu0 %v813
  %849 = vmatpush1.bf16.msra.mxu0 %v812
  %850 = vmatprep.subr.bf16.mxu0 %v809
  %851 = vmatpush1.bf16.msra.mxu0 %v808
  %852 = vmatprep.subr.bf16.mxu0 %v805
  %853 = vmatpush1.bf16.msra.mxu0 %v804
  %854 = vmatprep.subr.bf16.mxu0 %v801
  %855 = vmatpush1.bf16.msra.mxu0 %v800
  %856 = vmatprep.subr.bf16.mxu0 %v797
  %857 = vmatpush1.bf16.msra.mxu0 %v796
  %858 = vmatprep.subr.bf16.mxu0 %v793
  %859 = vmatpush1.bf16.msra.mxu0 %v792
  %860 = vmatprep.subr.bf16.mxu0 %v789
  %861 = vmatpush1.bf16.msra.mxu0 %v788
  %862 = vmatprep.subr.bf16.mxu0 %v785
  %863 = vmatpush1.bf16.msra.mxu0 %v784
  %864 = vmatprep.subr.bf16.mxu0 0
  %865 = vmatpush2.bf16.msra.mxu0 0
  %866 = vmatprep.subr.bf16.mxu0 0
  %867 = vmatpush2.bf16.msra.mxu0 0
  %868 = vmatprep.subr.bf16.mxu0 0
  %869 = vmatpush2.bf16.msra.mxu0 0
  %870 = vmatprep.subr.bf16.mxu0 0
  %871 = vmatpush2.bf16.msra.mxu0 0
  %872 = vmatprep.subr.bf16.mxu0 0
  %873 = vmatpush2.bf16.msra.mxu0 0
  %874 = vmatprep.subr.bf16.mxu0 0
  %875 = vmatpush2.bf16.msra.mxu0 0
  %876 = vmatprep.subr.bf16.mxu0 0
  %877 = vmatpush2.bf16.msra.mxu0 0
  %878 = vmatprep.subr.bf16.mxu0 0
  %879 = vmatpush2.bf16.msra.mxu0 0
  %880 = vmatprep.mubr.bf16.mxu0 0
  %881 = vmatmul.mubr.bf16.gmra.mxu0 %v655
  %v882 = vpop.f32.mrf.mxu0
  %v883 = vadd.f32 0.0, %v882
  %v884 = vpop.f32.mrf.mxu0
  %v885 = vadd.f32 0.0, %v884
  %v886 = vpop.f32.mrf.mxu0
  %v887 = vpop.f32.mrf.mxu0
  %888 = vdwg.mxu0
  %889 = vmatprep.subr.bf16.mxu0 %v815
  %890 = vmatpush1.bf16.msra.mxu0 %v814
  %891 = vmatprep.subr.bf16.mxu0 %v811
  %892 = vmatpush1.bf16.msra.mxu0 %v810
  %893 = vmatprep.subr.bf16.mxu0 %v807
  %894 = vmatpush1.bf16.msra.mxu0 %v806
  %895 = vmatprep.subr.bf16.mxu0 %v803
  %896 = vmatpush1.bf16.msra.mxu0 %v802
  %897 = vmatprep.subr.bf16.mxu0 %v799
  %898 = vmatpush1.bf16.msra.mxu0 %v798
  %899 = vmatprep.subr.bf16.mxu0 %v795
  %900 = vmatpush1.bf16.msra.mxu0 %v794
  %901 = vmatprep.subr.bf16.mxu0 %v791
  %902 = vmatpush1.bf16.msra.mxu0 %v790
  %903 = vmatprep.subr.bf16.mxu0 %v787
  %904 = vmatpush1.bf16.msra.mxu0 %v786
  %905 = vmatprep.subr.bf16.mxu0 0
  %906 = vmatpush2.bf16.msra.mxu0 0
  %907 = vmatprep.subr.bf16.mxu0 0
  %908 = vmatpush2.bf16.msra.mxu0 0
  %909 = vmatprep.subr.bf16.mxu0 0
  %910 = vmatpush2.bf16.msra.mxu0 0
  %911 = vmatprep.subr.bf16.mxu0 0
  %912 = vmatpush2.bf16.msra.mxu0 0
  %913 = vmatprep.subr.bf16.mxu0 0
  %914 = vmatpush2.bf16.msra.mxu0 0
  %915 = vmatprep.subr.bf16.mxu0 0
  %916 = vmatpush2.bf16.msra.mxu0 0
  %917 = vmatprep.subr.bf16.mxu0 0
  %918 = vmatpush2.bf16.msra.mxu0 0
  %919 = vmatprep.subr.bf16.mxu0 0
  %920 = vmatpush2.bf16.msra.mxu0 0
  %921 = vmatprep.mubr.bf16.mxu0 0
  %922 = vmatmul.mubr.bf16.gmra.mxu0 %v655
  %v923 = vpop.f32.mrf.mxu0
  %v924 = vadd.f32 0.0, %v923
  %v925 = vpop.f32.mrf.mxu0
  %v926 = vadd.f32 0.0, %v925
  %v927 = vpop.f32.mrf.mxu0
  %v928 = vpop.f32.mrf.mxu0
  %929 = vdwg.mxu0
  %v930 = vadd.f32 %v651, %v883
  %v931 = vadd.f32 %v652, %v885
  %v932 = vadd.f32 %v653, %v924
  %v933 = vadd.f32 %v654, %v926
  %v934 = vxor.u32 %v930, 2147483648
  %v935 = vxor.u32 %v931, 2147483648
  %v936 = vxor.u32 %v932, 2147483648
  %v937 = vmul.f32 %v934, 1.442695
  %v938 = vpow.pop %v937
  %v939 = vmul.f32 %v935, 1.442695
  %v940 = vpow.pop %v939
  %v941 = vmul.f32 %v936, 1.442695
  %v942 = vpow.pop %v941
  %v943 = vadd.f32 %v938, 1.0
  %v944 = vadd.f32 %v940, 1.0
  %v945 = vadd.f32 %v942, 1.0
  %v946 = vrcp.pop %v943
  %v947 = vmul.f32 1.0, %v946
  %v948 = vrcp.pop %v944
  %v949 = vmul.f32 1.0, %v948
  %v950 = vrcp.pop %v945
  %v951 = vmul.f32 1.0, %v950
  %v952 = vtanh.pop %v933
  %v953 = vld [vmem:[#allocation3] sm:$0xff]
  %v954 = vmul.f32 %v949, %v953
  %v955 = vmul.f32 %v947, %v952
  %v956 = vadd.f32 %v954, %v955
  %v957 = vtanh.pop %v956
  %v958 = vmul.f32 %v951, %v957
  %v959 = vpack.c.bf16 %v958, %v958
  %960 = vst [vmem:[#allocation3] sm:$0xff] %v956
  %961 = vst [vmem:[#allocation2] sm:$0xf] %v959
  %s962 = scalar_lea.vmem %s2, 8
  %963 = vst [vmem:[%s962] sm:$0xf] %v959
  %s964 = scalar_lea.vmem %s0, 48
  %v965 = vld [vmem:[%s964] sm:$0xff]
  %v966 = vld [vmem:[%s964 + $0x8] sm:$0xff]
  %v967 = vunpack.c.l.bf16 %v965
  %v968 = vunpack.c.h.bf16 %v965
  %v969 = vunpack.c.l.bf16 %v966
  %v970 = vunpack.c.h.bf16 %v966
  %v971 = vld [vmem:[#allocation2] sm:$0xf]
  %v972 = vld [vmem:[%s1] sm:$0xff]
  %v973 = vld [vmem:[%s1 + $0x8] sm:$0xff]
  %v974 = vld [vmem:[%s1 + $0x10] sm:$0xff]
  %v975 = vld [vmem:[%s1 + $0x18] sm:$0xff]
  %v976 = vld [vmem:[%s1 + $0x20] sm:$0xff]
  %v977 = vld [vmem:[%s1 + $0x28] sm:$0xff]
  %v978 = vld [vmem:[%s1 + $0x30] sm:$0xff]
  %v979 = vld [vmem:[%s1 + $0x38] sm:$0xff]
  %v980 = vld [vmem:[%s1 + $0x40] sm:$0xff]
  %v981 = vld [vmem:[%s1 + $0x48] sm:$0xff]
  %v982 = vld [vmem:[%s1 + $0x50] sm:$0xff]
  %v983 = vld [vmem:[%s1 + $0x58] sm:$0xff]
  %v984 = vld [vmem:[%s1 + $0x60] sm:$0xff]
  %v985 = vld [vmem:[%s1 + $0x68] sm:$0xff]
  %v986 = vld [vmem:[%s1 + $0x70] sm:$0xff]
  %v987 = vld [vmem:[%s1 + $0x78] sm:$0xff]
  %v988 = vld [vmem:[%s1 + $0x80] sm:$0xff]
  %v989 = vld [vmem:[%s1 + $0x88] sm:$0xff]
  %v990 = vld [vmem:[%s1 + $0x90] sm:$0xff]
  %v991 = vld [vmem:[%s1 + $0x98] sm:$0xff]
  %v992 = vld [vmem:[%s1 + $0xa0] sm:$0xff]
  %v993 = vld [vmem:[%s1 + $0xa8] sm:$0xff]
  %v994 = vld [vmem:[%s1 + $0xb0] sm:$0xff]
  %v995 = vld [vmem:[%s1 + $0xb8] sm:$0xff]
  %v996 = vld [vmem:[%s1 + $0xc0] sm:$0xff]
  %v997 = vld [vmem:[%s1 + $0xc8] sm:$0xff]
  %v998 = vld [vmem:[%s1 + $0xd0] sm:$0xff]
  %v999 = vld [vmem:[%s1 + $0xd8] sm:$0xff]
  %v1000 = vld [vmem:[%s1 + $0xe0] sm:$0xff]
  %v1001 = vld [vmem:[%s1 + $0xe8] sm:$0xff]
  %v1002 = vld [vmem:[%s1 + $0xf0] sm:$0xff]
  %v1003 = vld [vmem:[%s1 + $0xf8] sm:$0xff]
  %v1036 = vunpack.c.l.b16 %v972
  %v1037 = vunpack.c.h.b16 %v972
  %v1038 = vunpack.c.l.b16 %v973
  %v1039 = vunpack.c.h.b16 %v973
  %v1040 = vunpack.c.l.b16 %v974
  %v1041 = vunpack.c.h.b16 %v974
  %v1042 = vunpack.c.l.b16 %v975
  %v1043 = vunpack.c.h.b16 %v975
  %v1044 = vunpack.c.l.b16 %v976
  %v1045 = vunpack.c.h.b16 %v976
  %v1046 = vunpack.c.l.b16 %v977
  %v1047 = vunpack.c.h.b16 %v977
  %v1048 = vunpack.c.l.b16 %v978
  %v1049 = vunpack.c.h.b16 %v978
  %v1050 = vunpack.c.l.b16 %v979
  %v1051 = vunpack.c.h.b16 %v979
  %v1052 = vunpack.c.l.b16 %v980
  %v1053 = vunpack.c.h.b16 %v980
  %v1054 = vunpack.c.l.b16 %v981
  %v1055 = vunpack.c.h.b16 %v981
  %v1056 = vunpack.c.l.b16 %v982
  %v1057 = vunpack.c.h.b16 %v982
  %v1058 = vunpack.c.l.b16 %v983
  %v1059 = vunpack.c.h.b16 %v983
  %v1060 = vunpack.c.l.b16 %v984
  %v1061 = vunpack.c.h.b16 %v984
  %v1062 = vunpack.c.l.b16 %v985
  %v1063 = vunpack.c.h.b16 %v985
  %v1064 = vunpack.c.l.b16 %v986
  %v1065 = vunpack.c.h.b16 %v986
  %v1066 = vunpack.c.l.b16 %v987
  %v1067 = vunpack.c.h.b16 %v987
  %v1068 = vunpack.c.l.b16 %v988
  %v1069 = vunpack.c.h.b16 %v988
  %v1070 = vunpack.c.l.b16 %v989
  %v1071 = vunpack.c.h.b16 %v989
  %v1072 = vunpack.c.l.b16 %v990
  %v1073 = vunpack.c.h.b16 %v990
  %v1074 = vunpack.c.l.b16 %v991
  %v1075 = vunpack.c.h.b16 %v991
  %v1076 = vunpack.c.l.b16 %v992
  %v1077 = vunpack.c.h.b16 %v992
  %v1078 = vunpack.c.l.b16 %v993
  %v1079 = vunpack.c.h.b16 %v993
  %v1080 = vunpack.c.l.b16 %v994
  %v1081 = vunpack.c.h.b16 %v994
  %v1082 = vunpack.c.l.b16 %v995
  %v1083 = vunpack.c.h.b16 %v995
  %v1084 = vunpack.c.l.b16 %v996
  %v1085 = vunpack.c.h.b16 %v996
  %v1086 = vunpack.c.l.b16 %v997
  %v1087 = vunpack.c.h.b16 %v997
  %v1088 = vunpack.c.l.b16 %v998
  %v1089 = vunpack.c.h.b16 %v998
  %v1090 = vunpack.c.l.b16 %v999
  %v1091 = vunpack.c.h.b16 %v999
  %v1092 = vunpack.c.l.b16 %v1000
  %v1093 = vunpack.c.h.b16 %v1000
  %v1094 = vunpack.c.l.b16 %v1001
  %v1095 = vunpack.c.h.b16 %v1001
  %v1096 = vunpack.c.l.b16 %v1002
  %v1097 = vunpack.c.h.b16 %v1002
  %v1098 = vunpack.c.l.b16 %v1003
  %v1099 = vunpack.c.h.b16 %v1003
  %v1100 = vpack.c.b16 %v1040, %v1036
  %v1101 = vpack.c.b16 %v1041, %v1037
  %v1102 = vpack.c.b16 %v1042, %v1038
  %v1103 = vpack.c.b16 %v1043, %v1039
  %v1104 = vpack.c.b16 %v1048, %v1044
  %v1105 = vpack.c.b16 %v1049, %v1045
  %v1106 = vpack.c.b16 %v1050, %v1046
  %v1107 = vpack.c.b16 %v1051, %v1047
  %v1108 = vpack.c.b16 %v1056, %v1052
  %v1109 = vpack.c.b16 %v1057, %v1053
  %v1110 = vpack.c.b16 %v1058, %v1054
  %v1111 = vpack.c.b16 %v1059, %v1055
  %v1112 = vpack.c.b16 %v1064, %v1060
  %v1113 = vpack.c.b16 %v1065, %v1061
  %v1114 = vpack.c.b16 %v1066, %v1062
  %v1115 = vpack.c.b16 %v1067, %v1063
  %v1116 = vpack.c.b16 %v1072, %v1068
  %v1117 = vpack.c.b16 %v1073, %v1069
  %v1118 = vpack.c.b16 %v1074, %v1070
  %v1119 = vpack.c.b16 %v1075, %v1071
  %v1120 = vpack.c.b16 %v1080, %v1076
  %v1121 = vpack.c.b16 %v1081, %v1077
  %v1122 = vpack.c.b16 %v1082, %v1078
  %v1123 = vpack.c.b16 %v1083, %v1079
  %v1124 = vpack.c.b16 %v1088, %v1084
  %v1125 = vpack.c.b16 %v1089, %v1085
  %v1126 = vpack.c.b16 %v1090, %v1086
  %v1127 = vpack.c.b16 %v1091, %v1087
  %v1128 = vpack.c.b16 %v1096, %v1092
  %v1129 = vpack.c.b16 %v1097, %v1093
  %v1130 = vpack.c.b16 %v1098, %v1094
  %v1131 = vpack.c.b16 %v1099, %v1095
  %1164 = vmatprep.subr.bf16.mxu0 %v1129
  %1165 = vmatpush1.bf16.msra.mxu0 %v1128
  %1166 = vmatprep.subr.bf16.mxu0 %v1125
  %1167 = vmatpush1.bf16.msra.mxu0 %v1124
  %1168 = vmatprep.subr.bf16.mxu0 %v1121
  %1169 = vmatpush1.bf16.msra.mxu0 %v1120
  %1170 = vmatprep.subr.bf16.mxu0 %v1117
  %1171 = vmatpush1.bf16.msra.mxu0 %v1116
  %1172 = vmatprep.subr.bf16.mxu0 %v1113
  %1173 = vmatpush1.bf16.msra.mxu0 %v1112
  %1174 = vmatprep.subr.bf16.mxu0 %v1109
  %1175 = vmatpush1.bf16.msra.mxu0 %v1108
  %1176 = vmatprep.subr.bf16.mxu0 %v1105
  %1177 = vmatpush1.bf16.msra.mxu0 %v1104
  %1178 = vmatprep.subr.bf16.mxu0 %v1101
  %1179 = vmatpush1.bf16.msra.mxu0 %v1100
  %1180 = vmatprep.subr.bf16.mxu0 0
  %1181 = vmatpush2.bf16.msra.mxu0 0
  %1182 = vmatprep.subr.bf16.mxu0 0
  %1183 = vmatpush2.bf16.msra.mxu0 0
  %1184 = vmatprep.subr.bf16.mxu0 0
  %1185 = vmatpush2.bf16.msra.mxu0 0
  %1186 = vmatprep.subr.bf16.mxu0 0
  %1187 = vmatpush2.bf16.msra.mxu0 0
  %1188 = vmatprep.subr.bf16.mxu0 0
  %1189 = vmatpush2.bf16.msra.mxu0 0
  %1190 = vmatprep.subr.bf16.mxu0 0
  %1191 = vmatpush2.bf16.msra.mxu0 0
  %1192 = vmatprep.subr.bf16.mxu0 0
  %1193 = vmatpush2.bf16.msra.mxu0 0
  %1194 = vmatprep.subr.bf16.mxu0 0
  %1195 = vmatpush2.bf16.msra.mxu0 0
  %1196 = vmatprep.mubr.bf16.mxu0 0
  %1197 = vmatmul.mubr.bf16.gmra.mxu0 %v971
  %v1198 = vpop.f32.mrf.mxu0
  %v1199 = vadd.f32 0.0, %v1198
  %v1200 = vpop.f32.mrf.mxu0
  %v1201 = vadd.f32 0.0, %v1200
  %v1202 = vpop.f32.mrf.mxu0
  %v1203 = vpop.f32.mrf.mxu0
  %1204 = vdwg.mxu0
  %1205 = vmatprep.subr.bf16.mxu0 %v1131
  %1206 = vmatpush1.bf16.msra.mxu0 %v1130
  %1207 = vmatprep.subr.bf16.mxu0 %v1127
  %1208 = vmatpush1.bf16.msra.mxu0 %v1126
  %1209 = vmatprep.subr.bf16.mxu0 %v1123
  %1210 = vmatpush1.bf16.msra.mxu0 %v1122
  %1211 = vmatprep.subr.bf16.mxu0 %v1119
  %1212 = vmatpush1.bf16.msra.mxu0 %v1118
  %1213 = vmatprep.subr.bf16.mxu0 %v1115
  %1214 = vmatpush1.bf16.msra.mxu0 %v1114
  %1215 = vmatprep.subr.bf16.mxu0 %v1111
  %1216 = vmatpush1.bf16.msra.mxu0 %v1110
  %1217 = vmatprep.subr.bf16.mxu0 %v1107
  %1218 = vmatpush1.bf16.msra.mxu0 %v1106
  %1219 = vmatprep.subr.bf16.mxu0 %v1103
  %1220 = vmatpush1.bf16.msra.mxu0 %v1102
  %1221 = vmatprep.subr.bf16.mxu0 0
  %1222 = vmatpush2.bf16.msra.mxu0 0
  %1223 = vmatprep.subr.bf16.mxu0 0
  %1224 = vmatpush2.bf16.msra.mxu0 0
  %1225 = vmatprep.subr.bf16.mxu0 0
  %1226 = vmatpush2.bf16.msra.mxu0 0
  %1227 = vmatprep.subr.bf16.mxu0 0
  %1228 = vmatpush2.bf16.msra.mxu0 0
  %1229 = vmatprep.subr.bf16.mxu0 0
  %1230 = vmatpush2.bf16.msra.mxu0 0
  %1231 = vmatprep.subr.bf16.mxu0 0
  %1232 = vmatpush2.bf16.msra.mxu0 0
  %1233 = vmatprep.subr.bf16.mxu0 0
  %1234 = vmatpush2.bf16.msra.mxu0 0
  %1235 = vmatprep.subr.bf16.mxu0 0
  %1236 = vmatpush2.bf16.msra.mxu0 0
  %1237 = vmatprep.mubr.bf16.mxu0 0
  %1238 = vmatmul.mubr.bf16.gmra.mxu0 %v971
  %v1239 = vpop.f32.mrf.mxu0
  %v1240 = vadd.f32 0.0, %v1239
  %v1241 = vpop.f32.mrf.mxu0
  %v1242 = vadd.f32 0.0, %v1241
  %v1243 = vpop.f32.mrf.mxu0
  %v1244 = vpop.f32.mrf.mxu0
  %1245 = vdwg.mxu0
  %v1246 = vadd.f32 %v967, %v1199
  %v1247 = vadd.f32 %v968, %v1201
  %v1248 = vadd.f32 %v969, %v1240
  %v1249 = vadd.f32 %v970, %v1242
  %v1250 = vxor.u32 %v1246, 2147483648
  %v1251 = vxor.u32 %v1247, 2147483648
  %v1252 = vxor.u32 %v1248, 2147483648
  %v1253 = vmul.f32 %v1250, 1.442695
  %v1254 = vpow.pop %v1253
  %v1255 = vmul.f32 %v1251, 1.442695
  %v1256 = vpow.pop %v1255
  %v1257 = vmul.f32 %v1252, 1.442695
  %v1258 = vpow.pop %v1257
  %v1259 = vadd.f32 %v1254, 1.0
  %v1260 = vadd.f32 %v1256, 1.0
  %v1261 = vadd.f32 %v1258, 1.0
  %v1262 = vrcp.pop %v1259
  %v1263 = vmul.f32 1.0, %v1262
  %v1264 = vrcp.pop %v1260
  %v1265 = vmul.f32 1.0, %v1264
  %v1266 = vrcp.pop %v1261
  %v1267 = vmul.f32 1.0, %v1266
  %v1268 = vtanh.pop %v1249
  %v1269 = vld [vmem:[#allocation3] sm:$0xff]
  %v1270 = vmul.f32 %v1265, %v1269
  %v1271 = vmul.f32 %v1263, %v1268
  %v1272 = vadd.f32 %v1270, %v1271
  %v1273 = vtanh.pop %v1272
  %v1274 = vmul.f32 %v1267, %v1273
  %v1275 = vpack.c.bf16 %v1274, %v1274
  %1276 = vst [vmem:[#allocation3] sm:$0xff] %v1272
  %1277 = vst [vmem:[#allocation2] sm:$0xf] %v1275
  %s1278 = scalar_lea.vmem %s2, 12
  %1279 = vst [vmem:[%s1278] sm:$0xf] %v1275
  %s1280 = scalar_lea.vmem %s0, 64
  %v1281 = vld [vmem:[%s1280] sm:$0xff]
  %v1282 = vld [vmem:[%s1280 + $0x8] sm:$0xff]
  %v1283 = vunpack.c.l.bf16 %v1281
  %v1284 = vunpack.c.h.bf16 %v1281
  %v1285 = vunpack.c.l.bf16 %v1282
  %v1286 = vunpack.c.h.bf16 %v1282
  %v1287 = vld [vmem:[#allocation2] sm:$0xf]
  %v1288 = vld [vmem:[%s1] sm:$0xff]
  %v1289 = vld [vmem:[%s1 + $0x8] sm:$0xff]
  %v1290 = vld [vmem:[%s1 + $0x10] sm:$0xff]
  %v1291 = vld [vmem:[%s1 + $0x18] sm:$0xff]
  %v1292 = vld [vmem:[%s1 + $0x20] sm:$0xff]
  %v1293 = vld [vmem:[%s1 + $0x28] sm:$0xff]
  %v1294 = vld [vmem:[%s1 + $0x30] sm:$0xff]
  %v1295 = vld [vmem:[%s1 + $0x38] sm:$0xff]
  %v1296 = vld [vmem:[%s1 + $0x40] sm:$0xff]
  %v1297 = vld [vmem:[%s1 + $0x48] sm:$0xff]
  %v1298 = vld [vmem:[%s1 + $0x50] sm:$0xff]
  %v1299 = vld [vmem:[%s1 + $0x58] sm:$0xff]
  %v1300 = vld [vmem:[%s1 + $0x60] sm:$0xff]
  %v1301 = vld [vmem:[%s1 + $0x68] sm:$0xff]
  %v1302 = vld [vmem:[%s1 + $0x70] sm:$0xff]
  %v1303 = vld [vmem:[%s1 + $0x78] sm:$0xff]
  %v1304 = vld [vmem:[%s1 + $0x80] sm:$0xff]
  %v1305 = vld [vmem:[%s1 + $0x88] sm:$0xff]
  %v1306 = vld [vmem:[%s1 + $0x90] sm:$0xff]
  %v1307 = vld [vmem:[%s1 + $0x98] sm:$0xff]
  %v1308 = vld [vmem:[%s1 + $0xa0] sm:$0xff]
  %v1309 = vld [vmem:[%s1 + $0xa8] sm:$0xff]
  %v1310 = vld [vmem:[%s1 + $0xb0] sm:$0xff]
  %v1311 = vld [vmem:[%s1 + $0xb8] sm:$0xff]
  %v1312 = vld [vmem:[%s1 + $0xc0] sm:$0xff]
  %v1313 = vld [vmem:[%s1 + $0xc8] sm:$0xff]
  %v1314 = vld [vmem:[%s1 + $0xd0] sm:$0xff]
  %v1315 = vld [vmem:[%s1 + $0xd8] sm:$0xff]
  %v1316 = vld [vmem:[%s1 + $0xe0] sm:$0xff]
  %v1317 = vld [vmem:[%s1 + $0xe8] sm:$0xff]
  %v1318 = vld [vmem:[%s1 + $0xf0] sm:$0xff]
  %v1319 = vld [vmem:[%s1 + $0xf8] sm:$0xff]
  %v1352 = vunpack.c.l.b16 %v1288
  %v1353 = vunpack.c.h.b16 %v1288
  %v1354 = vunpack.c.l.b16 %v1289
  %v1355 = vunpack.c.h.b16 %v1289
  %v1356 = vunpack.c.l.b16 %v1290
  %v1357 = vunpack.c.h.b16 %v1290
  %v1358 = vunpack.c.l.b16 %v1291
  %v1359 = vunpack.c.h.b16 %v1291
  %v1360 = vunpack.c.l.b16 %v1292
  %v1361 = vunpack.c.h.b16 %v1292
  %v1362 = vunpack.c.l.b16 %v1293
  %v1363 = vunpack.c.h.b16 %v1293
  %v1364 = vunpack.c.l.b16 %v1294
  %v1365 = vunpack.c.h.b16 %v1294
  %v1366 = vunpack.c.l.b16 %v1295
  %v1367 = vunpack.c.h.b16 %v1295
  %v1368 = vunpack.c.l.b16 %v1296
  %v1369 = vunpack.c.h.b16 %v1296
  %v1370 = vunpack.c.l.b16 %v1297
  %v1371 = vunpack.c.h.b16 %v1297
  %v1372 = vunpack.c.l.b16 %v1298
  %v1373 = vunpack.c.h.b16 %v1298
  %v1374 = vunpack.c.l.b16 %v1299
  %v1375 = vunpack.c.h.b16 %v1299
  %v1376 = vunpack.c.l.b16 %v1300
  %v1377 = vunpack.c.h.b16 %v1300
  %v1378 = vunpack.c.l.b16 %v1301
  %v1379 = vunpack.c.h.b16 %v1301
  %v1380 = vunpack.c.l.b16 %v1302
  %v1381 = vunpack.c.h.b16 %v1302
  %v1382 = vunpack.c.l.b16 %v1303
  %v1383 = vunpack.c.h.b16 %v1303
  %v1384 = vunpack.c.l.b16 %v1304
  %v1385 = vunpack.c.h.b16 %v1304
  %v1386 = vunpack.c.l.b16 %v1305
  %v1387 = vunpack.c.h.b16 %v1305
  %v1388 = vunpack.c.l.b16 %v1306
  %v1389 = vunpack.c.h.b16 %v1306
  %v1390 = vunpack.c.l.b16 %v1307
  %v1391 = vunpack.c.h.b16 %v1307
  %v1392 = vunpack.c.l.b16 %v1308
  %v1393 = vunpack.c.h.b16 %v1308
  %v1394 = vunpack.c.l.b16 %v1309
  %v1395 = vunpack.c.h.b16 %v1309
  %v1396 = vunpack.c.l.b16 %v1310
  %v1397 = vunpack.c.h.b16 %v1310
  %v1398 = vunpack.c.l.b16 %v1311
  %v1399 = vunpack.c.h.b16 %v1311
  %v1400 = vunpack.c.l.b16 %v1312
  %v1401 = vunpack.c.h.b16 %v1312
  %v1402 = vunpack.c.l.b16 %v1313
  %v1403 = vunpack.c.h.b16 %v1313
  %v1404 = vunpack.c.l.b16 %v1314
  %v1405 = vunpack.c.h.b16 %v1314
  %v1406 = vunpack.c.l.b16 %v1315
  %v1407 = vunpack.c.h.b16 %v1315
  %v1408 = vunpack.c.l.b16 %v1316
  %v1409 = vunpack.c.h.b16 %v1316
  %v1410 = vunpack.c.l.b16 %v1317
  %v1411 = vunpack.c.h.b16 %v1317
  %v1412 = vunpack.c.l.b16 %v1318
  %v1413 = vunpack.c.h.b16 %v1318
  %v1414 = vunpack.c.l.b16 %v1319
  %v1415 = vunpack.c.h.b16 %v1319
  %v1416 = vpack.c.b16 %v1356, %v1352
  %v1417 = vpack.c.b16 %v1357, %v1353
  %v1418 = vpack.c.b16 %v1358, %v1354
  %v1419 = vpack.c.b16 %v1359, %v1355
  %v1420 = vpack.c.b16 %v1364, %v1360
  %v1421 = vpack.c.b16 %v1365, %v1361
  %v1422 = vpack.c.b16 %v1366, %v1362
  %v1423 = vpack.c.b16 %v1367, %v1363
  %v1424 = vpack.c.b16 %v1372, %v1368
  %v1425 = vpack.c.b16 %v1373, %v1369
  %v1426 = vpack.c.b16 %v1374, %v1370
  %v1427 = vpack.c.b16 %v1375, %v1371
  %v1428 = vpack.c.b16 %v1380, %v1376
  %v1429 = vpack.c.b16 %v1381, %v1377
  %v1430 = vpack.c.b16 %v1382, %v1378
  %v1431 = vpack.c.b16 %v1383, %v1379
  %v1432 = vpack.c.b16 %v1388, %v1384
  %v1433 = vpack.c.b16 %v1389, %v1385
  %v1434 = vpack.c.b16 %v1390, %v1386
  %v1435 = vpack.c.b16 %v1391, %v1387
  %v1436 = vpack.c.b16 %v1396, %v1392
  %v1437 = vpack.c.b16 %v1397, %v1393
  %v1438 = vpack.c.b16 %v1398, %v1394
  %v1439 = vpack.c.b16 %v1399, %v1395
  %v1440 = vpack.c.b16 %v1404, %v1400
  %v1441 = vpack.c.b16 %v1405, %v1401
  %v1442 = vpack.c.b16 %v1406, %v1402
  %v1443 = vpack.c.b16 %v1407, %v1403
  %v1444 = vpack.c.b16 %v1412, %v1408
  %v1445 = vpack.c.b16 %v1413, %v1409
  %v1446 = vpack.c.b16 %v1414, %v1410
  %v1447 = vpack.c.b16 %v1415, %v1411
  %1480 = vmatprep.subr.bf16.mxu0 %v1445
  %1481 = vmatpush1.bf16.msra.mxu0 %v1444
  %1482 = vmatprep.subr.bf16.mxu0 %v1441
  %1483 = vmatpush1.bf16.msra.mxu0 %v1440
  %1484 = vmatprep.subr.bf16.mxu0 %v1437
  %1485 = vmatpush1.bf16.msra.mxu0 %v1436
  %1486 = vmatprep.subr.bf16.mxu0 %v1433
  %1487 = vmatpush1.bf16.msra.mxu0 %v1432
  %1488 = vmatprep.subr.bf16.mxu0 %v1429
  %1489 = vmatpush1.bf16.msra.mxu0 %v1428
  %1490 = vmatprep.subr.bf16.mxu0 %v1425
  %1491 = vmatpush1.bf16.msra.mxu0 %v1424
  %1492 = vmatprep.subr.bf16.mxu0 %v1421
  %1493 = vmatpush1.bf16.msra.mxu0 %v1420
  %1494 = vmatprep.subr.bf16.mxu0 %v1417
  %1495 = vmatpush1.bf16.msra.mxu0 %v1416
  %1496 = vmatprep.subr.bf16.mxu0 0
  %1497 = vmatpush2.bf16.msra.mxu0 0
  %1498 = vmatprep.subr.bf16.mxu0 0
  %1499 = vmatpush2.bf16.msra.mxu0 0
  %1500 = vmatprep.subr.bf16.mxu0 0
  %1501 = vmatpush2.bf16.msra.mxu0 0
  %1502 = vmatprep.subr.bf16.mxu0 0
  %1503 = vmatpush2.bf16.msra.mxu0 0
  %1504 = vmatprep.subr.bf16.mxu0 0
  %1505 = vmatpush2.bf16.msra.mxu0 0
  %1506 = vmatprep.subr.bf16.mxu0 0
  %1507 = vmatpush2.bf16.msra.mxu0 0
  %1508 = vmatprep.subr.bf16.mxu0 0
  %1509 = vmatpush2.bf16.msra.mxu0 0
  %1510 = vmatprep.subr.bf16.mxu0 0
  %1511 = vmatpush2.bf16.msra.mxu0 0
  %1512 = vmatprep.mubr.bf16.mxu0 0
  %1513 = vmatmul.mubr.bf16.gmra.mxu0 %v1287
  %v1514 = vpop.f32.mrf.mxu0
  %v1515 = vadd.f32 0.0, %v1514
  %v1516 = vpop.f32.mrf.mxu0
  %v1517 = vadd.f32 0.0, %v1516
  %v1518 = vpop.f32.mrf.mxu0
  %v1519 = vpop.f32.mrf.mxu0
  %1520 = vdwg.mxu0
  %1521 = vmatprep.subr.bf16.mxu0 %v1447
  %1522 = vmatpush1.bf16.msra.mxu0 %v1446
  %1523 = vmatprep.subr.bf16.mxu0 %v1443
  %1524 = vmatpush1.bf16.msra.mxu0 %v1442
  %1525 = vmatprep.subr.bf16.mxu0 %v1439
  %1526 = vmatpush1.bf16.msra.mxu0 %v1438
  %1527 = vmatprep.subr.bf16.mxu0 %v1435
  %1528 = vmatpush1.bf16.msra.mxu0 %v1434
  %1529 = vmatprep.subr.bf16.mxu0 %v1431
  %1530 = vmatpush1.bf16.msra.mxu0 %v1430
  %1531 = vmatprep.subr.bf16.mxu0 %v1427
  %1532 = vmatpush1.bf16.msra.mxu0 %v1426
  %1533 = vmatprep.subr.bf16.mxu0 %v1423
  %1534 = vmatpush1.bf16.msra.mxu0 %v1422
  %1535 = vmatprep.subr.bf16.mxu0 %v1419
  %1536 = vmatpush1.bf16.msra.mxu0 %v1418
  %1537 = vmatprep.subr.bf16.mxu0 0
  %1538 = vmatpush2.bf16.msra.mxu0 0
  %1539 = vmatprep.subr.bf16.mxu0 0
  %1540 = vmatpush2.bf16.msra.mxu0 0
  %1541 = vmatprep.subr.bf16.mxu0 0
  %1542 = vmatpush2.bf16.msra.mxu0 0
  %1543 = vmatprep.subr.bf16.mxu0 0
  %1544 = vmatpush2.bf16.msra.mxu0 0
  %1545 = vmatprep.subr.bf16.mxu0 0
  %1546 = vmatpush2.bf16.msra.mxu0 0
  %1547 = vmatprep.subr.bf16.mxu0 0
  %1548 = vmatpush2.bf16.msra.mxu0 0
  %1549 = vmatprep.subr.bf16.mxu0 0
  %1550 = vmatpush2.bf16.msra.mxu0 0
  %1551 = vmatprep.subr.bf16.mxu0 0
  %1552 = vmatpush2.bf16.msra.mxu0 0
  %1553 = vmatprep.mubr.bf16.mxu0 0
  %1554 = vmatmul.mubr.bf16.gmra.mxu0 %v1287
  %v1555 = vpop.f32.mrf.mxu0
  %v1556 = vadd.f32 0.0, %v1555
  %v1557 = vpop.f32.mrf.mxu0
  %v1558 = vadd.f32 0.0, %v1557
  %v1559 = vpop.f32.mrf.mxu0
  %v1560 = vpop.f32.mrf.mxu0
  %1561 = vdwg.mxu0
  %v1562 = vadd.f32 %v1283, %v1515
  %v1563 = vadd.f32 %v1284, %v1517
  %v1564 = vadd.f32 %v1285, %v1556
  %v1565 = vadd.f32 %v1286, %v1558
  %v1566 = vxor.u32 %v1562, 2147483648
  %v1567 = vxor.u32 %v1563, 2147483648
  %v1568 = vxor.u32 %v1564, 2147483648
  %v1569 = vmul.f32 %v1566, 1.442695
  %v1570 = vpow.pop %v1569
  %v1571 = vmul.f32 %v1567, 1.442695
  %v1572 = vpow.pop %v1571
  %v1573 = vmul.f32 %v1568, 1.442695
  %v1574 = vpow.pop %v1573
  %v1575 = vadd.f32 %v1570, 1.0
  %v1576 = vadd.f32 %v1572, 1.0
  %v1577 = vadd.f32 %v1574, 1.0
  %v1578 = vrcp.pop %v1575
  %v1579 = vmul.f32 1.0, %v1578
  %v1580 = vrcp.pop %v1576
  %v1581 = vmul.f32 1.0, %v1580
  %v1582 = vrcp.pop %v1577
  %v1583 = vmul.f32 1.0, %v1582
  %v1584 = vtanh.pop %v1565
  %v1585 = vld [vmem:[#allocation3] sm:$0xff]
  %v1586 = vmul.f32 %v1581, %v1585
  %v1587 = vmul.f32 %v1579, %v1584
  %v1588 = vadd.f32 %v1586, %v1587
  %v1589 = vtanh.pop %v1588
  %v1590 = vmul.f32 %v1583, %v1589
  %v1591 = vpack.c.bf16 %v1590, %v1590
  %1592 = vst [vmem:[#allocation3] sm:$0xff] %v1588
  %1593 = vst [vmem:[#allocation2] sm:$0xf] %v1591
  %s1594 = scalar_lea.vmem %s2, 16
  %1595 = vst [vmem:[%s1594] sm:$0xf] %v1591
  %s1596 = scalar_lea.vmem %s0, 80
  %v1597 = vld [vmem:[%s1596] sm:$0xff]
  %v1598 = vld [vmem:[%s1596 + $0x8] sm:$0xff]
  %v1599 = vunpack.c.l.bf16 %v1597
  %v1600 = vunpack.c.h.bf16 %v1597
  %v1601 = vunpack.c.l.bf16 %v1598
  %v1602 = vunpack.c.h.bf16 %v1598
  %v1603 = vld [vmem:[#allocation2] sm:$0xf]
  %v1604 = vld [vmem:[%s1] sm:$0xff]
  %v1605 = vld [vmem:[%s1 + $0x8] sm:$0xff]
  %v1606 = vld [vmem:[%s1 + $0x10] sm:$0xff]
  %v1607 = vld [vmem:[%s1 + $0x18] sm:$0xff]
  %v1608 = vld [vmem:[%s1 + $0x20] sm:$0xff]
  %v1609 = vld [vmem:[%s1 + $0x28] sm:$0xff]
  %v1610 = vld [vmem:[%s1 + $0x30] sm:$0xff]
  %v1611 = vld [vmem:[%s1 + $0x38] sm:$0xff]
  %v1612 = vld [vmem:[%s1 + $0x40] sm:$0xff]
  %v1613 = vld [vmem:[%s1 + $0x48] sm:$0xff]
  %v1614 = vld [vmem:[%s1 + $0x50] sm:$0xff]
  %v1615 = vld [vmem:[%s1 + $0x58] sm:$0xff]
  %v1616 = vld [vmem:[%s1 + $0x60] sm:$0xff]
  %v1617 = vld [vmem:[%s1 + $0x68] sm:$0xff]
  %v1618 = vld [vmem:[%s1 + $0x70] sm:$0xff]
  %v1619 = vld [vmem:[%s1 + $0x78] sm:$0xff]
  %v1620 = vld [vmem:[%s1 + $0x80] sm:$0xff]
  %v1621 = vld [vmem:[%s1 + $0x88] sm:$0xff]
  %v1622 = vld [vmem:[%s1 + $0x90] sm:$0xff]
  %v1623 = vld [vmem:[%s1 + $0x98] sm:$0xff]
  %v1624 = vld [vmem:[%s1 + $0xa0] sm:$0xff]
  %v1625 = vld [vmem:[%s1 + $0xa8] sm:$0xff]
  %v1626 = vld [vmem:[%s1 + $0xb0] sm:$0xff]
  %v1627 = vld [vmem:[%s1 + $0xb8] sm:$0xff]
  %v1628 = vld [vmem:[%s1 + $0xc0] sm:$0xff]
  %v1629 = vld [vmem:[%s1 + $0xc8] sm:$0xff]
  %v1630 = vld [vmem:[%s1 + $0xd0] sm:$0xff]
  %v1631 = vld [vmem:[%s1 + $0xd8] sm:$0xff]
  %v1632 = vld [vmem:[%s1 + $0xe0] sm:$0xff]
  %v1633 = vld [vmem:[%s1 + $0xe8] sm:$0xff]
  %v1634 = vld [vmem:[%s1 + $0xf0] sm:$0xff]
  %v1635 = vld [vmem:[%s1 + $0xf8] sm:$0xff]
  %v1668 = vunpack.c.l.b16 %v1604
  %v1669 = vunpack.c.h.b16 %v1604
  %v1670 = vunpack.c.l.b16 %v1605
  %v1671 = vunpack.c.h.b16 %v1605
  %v1672 = vunpack.c.l.b16 %v1606
  %v1673 = vunpack.c.h.b16 %v1606
  %v1674 = vunpack.c.l.b16 %v1607
  %v1675 = vunpack.c.h.b16 %v1607
  %v1676 = vunpack.c.l.b16 %v1608
  %v1677 = vunpack.c.h.b16 %v1608
  %v1678 = vunpack.c.l.b16 %v1609
  %v1679 = vunpack.c.h.b16 %v1609
  %v1680 = vunpack.c.l.b16 %v1610
  %v1681 = vunpack.c.h.b16 %v1610
  %v1682 = vunpack.c.l.b16 %v1611
  %v1683 = vunpack.c.h.b16 %v1611
  %v1684 = vunpack.c.l.b16 %v1612
  %v1685 = vunpack.c.h.b16 %v1612
  %v1686 = vunpack.c.l.b16 %v1613
  %v1687 = vunpack.c.h.b16 %v1613
  %v1688 = vunpack.c.l.b16 %v1614
  %v1689 = vunpack.c.h.b16 %v1614
  %v1690 = vunpack.c.l.b16 %v1615
  %v1691 = vunpack.c.h.b16 %v1615
  %v1692 = vunpack.c.l.b16 %v1616
  %v1693 = vunpack.c.h.b16 %v1616
  %v1694 = vunpack.c.l.b16 %v1617
  %v1695 = vunpack.c.h.b16 %v1617
  %v1696 = vunpack.c.l.b16 %v1618
  %v1697 = vunpack.c.h.b16 %v1618
  %v1698 = vunpack.c.l.b16 %v1619
  %v1699 = vunpack.c.h.b16 %v1619
  %v1700 = vunpack.c.l.b16 %v1620
  %v1701 = vunpack.c.h.b16 %v1620
  %v1702 = vunpack.c.l.b16 %v1621
  %v1703 = vunpack.c.h.b16 %v1621
  %v1704 = vunpack.c.l.b16 %v1622
  %v1705 = vunpack.c.h.b16 %v1622
  %v1706 = vunpack.c.l.b16 %v1623
  %v1707 = vunpack.c.h.b16 %v1623
  %v1708 = vunpack.c.l.b16 %v1624
  %v1709 = vunpack.c.h.b16 %v1624
  %v1710 = vunpack.c.l.b16 %v1625
  %v1711 = vunpack.c.h.b16 %v1625
  %v1712 = vunpack.c.l.b16 %v1626
  %v1713 = vunpack.c.h.b16 %v1626
  %v1714 = vunpack.c.l.b16 %v1627
  %v1715 = vunpack.c.h.b16 %v1627
  %v1716 = vunpack.c.l.b16 %v1628
  %v1717 = vunpack.c.h.b16 %v1628
  %v1718 = vunpack.c.l.b16 %v1629
  %v1719 = vunpack.c.h.b16 %v1629
  %v1720 = vunpack.c.l.b16 %v1630
  %v1721 = vunpack.c.h.b16 %v1630
  %v1722 = vunpack.c.l.b16 %v1631
  %v1723 = vunpack.c.h.b16 %v1631
  %v1724 = vunpack.c.l.b16 %v1632
  %v1725 = vunpack.c.h.b16 %v1632
  %v1726 = vunpack.c.l.b16 %v1633
  %v1727 = vunpack.c.h.b16 %v1633
  %v1728 = vunpack.c.l.b16 %v1634
  %v1729 = vunpack.c.h.b16 %v1634
  %v1730 = vunpack.c.l.b16 %v1635
  %v1731 = vunpack.c.h.b16 %v1635
  %v1732 = vpack.c.b16 %v1672, %v1668
  %v1733 = vpack.c.b16 %v1673, %v1669
  %v1734 = vpack.c.b16 %v1674, %v1670
  %v1735 = vpack.c.b16 %v1675, %v1671
  %v1736 = vpack.c.b16 %v1680, %v1676
  %v1737 = vpack.c.b16 %v1681, %v1677
  %v1738 = vpack.c.b16 %v1682, %v1678
  %v1739 = vpack.c.b16 %v1683, %v1679
  %v1740 = vpack.c.b16 %v1688, %v1684
  %v1741 = vpack.c.b16 %v1689, %v1685
  %v1742 = vpack.c.b16 %v1690, %v1686
  %v1743 = vpack.c.b16 %v1691, %v1687
  %v1744 = vpack.c.b16 %v1696, %v1692
  %v1745 = vpack.c.b16 %v1697, %v1693
  %v1746 = vpack.c.b16 %v1698, %v1694
  %v1747 = vpack.c.b16 %v1699, %v1695
  %v1748 = vpack.c.b16 %v1704, %v1700
  %v1749 = vpack.c.b16 %v1705, %v1701
  %v1750 = vpack.c.b16 %v1706, %v1702
  %v1751 = vpack.c.b16 %v1707, %v1703
  %v1752 = vpack.c.b16 %v1712, %v1708
  %v1753 = vpack.c.b16 %v1713, %v1709
  %v1754 = vpack.c.b16 %v1714, %v1710
  %v1755 = vpack.c.b16 %v1715, %v1711
  %v1756 = vpack.c.b16 %v1720, %v1716
  %v1757 = vpack.c.b16 %v1721, %v1717
  %v1758 = vpack.c.b16 %v1722, %v1718
  %v1759 = vpack.c.b16 %v1723, %v1719
  %v1760 = vpack.c.b16 %v1728, %v1724
  %v1761 = vpack.c.b16 %v1729, %v1725
  %v1762 = vpack.c.b16 %v1730, %v1726
  %v1763 = vpack.c.b16 %v1731, %v1727
  %1796 = vmatprep.subr.bf16.mxu0 %v1761
  %1797 = vmatpush1.bf16.msra.mxu0 %v1760
  %1798 = vmatprep.subr.bf16.mxu0 %v1757
  %1799 = vmatpush1.bf16.msra.mxu0 %v1756
  %1800 = vmatprep.subr.bf16.mxu0 %v1753
  %1801 = vmatpush1.bf16.msra.mxu0 %v1752
  %1802 = vmatprep.subr.bf16.mxu0 %v1749
  %1803 = vmatpush1.bf16.msra.mxu0 %v1748
  %1804 = vmatprep.subr.bf16.mxu0 %v1745
  %1805 = vmatpush1.bf16.msra.mxu0 %v1744
  %1806 = vmatprep.subr.bf16.mxu0 %v1741
  %1807 = vmatpush1.bf16.msra.mxu0 %v1740
  %1808 = vmatprep.subr.bf16.mxu0 %v1737
  %1809 = vmatpush1.bf16.msra.mxu0 %v1736
  %1810 = vmatprep.subr.bf16.mxu0 %v1733
  %1811 = vmatpush1.bf16.msra.mxu0 %v1732
  %1812 = vmatprep.subr.bf16.mxu0 0
  %1813 = vmatpush2.bf16.msra.mxu0 0
  %1814 = vmatprep.subr.bf16.mxu0 0
  %1815 = vmatpush2.bf16.msra.mxu0 0
  %1816 = vmatprep.subr.bf16.mxu0 0
  %1817 = vmatpush2.bf16.msra.mxu0 0
  %1818 = vmatprep.subr.bf16.mxu0 0
  %1819 = vmatpush2.bf16.msra.mxu0 0
  %1820 = vmatprep.subr.bf16.mxu0 0
  %1821 = vmatpush2.bf16.msra.mxu0 0
  %1822 = vmatprep.subr.bf16.mxu0 0
  %1823 = vmatpush2.bf16.msra.mxu0 0
  %1824 = vmatprep.subr.bf16.mxu0 0
  %1825 = vmatpush2.bf16.msra.mxu0 0
  %1826 = vmatprep.subr.bf16.mxu0 0
  %1827 = vmatpush2.bf16.msra.mxu0 0
  %1828 = vmatprep.mubr.bf16.mxu0 0
  %1829 = vmatmul.mubr.bf16.gmra.mxu0 %v1603
  %v1830 = vpop.f32.mrf.mxu0
  %v1831 = vadd.f32 0.0, %v1830
  %v1832 = vpop.f32.mrf.mxu0
  %v1833 = vadd.f32 0.0, %v1832
  %v1834 = vpop.f32.mrf.mxu0
  %v1835 = vpop.f32.mrf.mxu0
  %1836 = vdwg.mxu0
  %1837 = vmatprep.subr.bf16.mxu0 %v1763
  %1838 = vmatpush1.bf16.msra.mxu0 %v1762
  %1839 = vmatprep.subr.bf16.mxu0 %v1759
  %1840 = vmatpush1.bf16.msra.mxu0 %v1758
  %1841 = vmatprep.subr.bf16.mxu0 %v1755
  %1842 = vmatpush1.bf16.msra.mxu0 %v1754
  %1843 = vmatprep.subr.bf16.mxu0 %v1751
  %1844 = vmatpush1.bf16.msra.mxu0 %v1750
  %1845 = vmatprep.subr.bf16.mxu0 %v1747
  %1846 = vmatpush1.bf16.msra.mxu0 %v1746
  %1847 = vmatprep.subr.bf16.mxu0 %v1743
  %1848 = vmatpush1.bf16.msra.mxu0 %v1742
  %1849 = vmatprep.subr.bf16.mxu0 %v1739
  %1850 = vmatpush1.bf16.msra.mxu0 %v1738
  %1851 = vmatprep.subr.bf16.mxu0 %v1735
  %1852 = vmatpush1.bf16.msra.mxu0 %v1734
  %1853 = vmatprep.subr.bf16.mxu0 0
  %1854 = vmatpush2.bf16.msra.mxu0 0
  %1855 = vmatprep.subr.bf16.mxu0 0
  %1856 = vmatpush2.bf16.msra.mxu0 0
  %1857 = vmatprep.subr.bf16.mxu0 0
  %1858 = vmatpush2.bf16.msra.mxu0 0
  %1859 = vmatprep.subr.bf16.mxu0 0
  %1860 = vmatpush2.bf16.msra.mxu0 0
  %1861 = vmatprep.subr.bf16.mxu0 0
  %1862 = vmatpush2.bf16.msra.mxu0 0
  %1863 = vmatprep.subr.bf16.mxu0 0
  %1864 = vmatpush2.bf16.msra.mxu0 0
  %1865 = vmatprep.subr.bf16.mxu0 0
  %1866 = vmatpush2.bf16.msra.mxu0 0
  %1867 = vmatprep.subr.bf16.mxu0 0
  %1868 = vmatpush2.bf16.msra.mxu0 0
  %1869 = vmatprep.mubr.bf16.mxu0 0
  %1870 = vmatmul.mubr.bf16.gmra.mxu0 %v1603
  %v1871 = vpop.f32.mrf.mxu0
  %v1872 = vadd.f32 0.0, %v1871
  %v1873 = vpop.f32.mrf.mxu0
  %v1874 = vadd.f32 0.0, %v1873
  %v1875 = vpop.f32.mrf.mxu0
  %v1876 = vpop.f32.mrf.mxu0
  %1877 = vdwg.mxu0
  %v1878 = vadd.f32 %v1599, %v1831
  %v1879 = vadd.f32 %v1600, %v1833
  %v1880 = vadd.f32 %v1601, %v1872
  %v1881 = vadd.f32 %v1602, %v1874
  %v1882 = vxor.u32 %v1878, 2147483648
  %v1883 = vxor.u32 %v1879, 2147483648
  %v1884 = vxor.u32 %v1880, 2147483648
  %v1885 = vmul.f32 %v1882, 1.442695
  %v1886 = vpow.pop %v1885
  %v1887 = vmul.f32 %v1883, 1.442695
  %v1888 = vpow.pop %v1887
  %v1889 = vmul.f32 %v1884, 1.442695
  %v1890 = vpow.pop %v1889
  %v1891 = vadd.f32 %v1886, 1.0
  %v1892 = vadd.f32 %v1888, 1.0
  %v1893 = vadd.f32 %v1890, 1.0
  %v1894 = vrcp.pop %v1891
  %v1895 = vmul.f32 1.0, %v1894
  %v1896 = vrcp.pop %v1892
  %v1897 = vmul.f32 1.0, %v1896
  %v1898 = vrcp.pop %v1893
  %v1899 = vmul.f32 1.0, %v1898
  %v1900 = vtanh.pop %v1881
  %v1901 = vld [vmem:[#allocation3] sm:$0xff]
  %v1902 = vmul.f32 %v1897, %v1901
  %v1903 = vmul.f32 %v1895, %v1900
  %v1904 = vadd.f32 %v1902, %v1903
  %v1905 = vtanh.pop %v1904
  %v1906 = vmul.f32 %v1899, %v1905
  %v1907 = vpack.c.bf16 %v1906, %v1906
  %1908 = vst [vmem:[#allocation3] sm:$0xff] %v1904
  %1909 = vst [vmem:[#allocation2] sm:$0xf] %v1907
  %s1910 = scalar_lea.vmem %s2, 20
  %1911 = vst [vmem:[%s1910] sm:$0xf] %v1907
  %s1912 = scalar_lea.vmem %s0, 96
  %v1913 = vld [vmem:[%s1912] sm:$0xff]
  %v1914 = vld [vmem:[%s1912 + $0x8] sm:$0xff]
  %v1915 = vunpack.c.l.bf16 %v1913
  %v1916 = vunpack.c.h.bf16 %v1913
  %v1917 = vunpack.c.l.bf16 %v1914
  %v1918 = vunpack.c.h.bf16 %v1914
  %v1919 = vld [vmem:[#allocation2] sm:$0xf]
  %v1920 = vld [vmem:[%s1] sm:$0xff]
  %v1921 = vld [vmem:[%s1 + $0x8] sm:$0xff]
  %v1922 = vld [vmem:[%s1 + $0x10] sm:$0xff]
  %v1923 = vld [vmem:[%s1 + $0x18] sm:$0xff]
  %v1924 = vld [vmem:[%s1 + $0x20] sm:$0xff]
  %v1925 = vld [vmem:[%s1 + $0x28] sm:$0xff]
  %v1926 = vld [vmem:[%s1 + $0x30] sm:$0xff]
  %v1927 = vld [vmem:[%s1 + $0x38] sm:$0xff]
  %v1928 = vld [vmem:[%s1 + $0x40] sm:$0xff]
  %v1929 = vld [vmem:[%s1 + $0x48] sm:$0xff]
  %v1930 = vld [vmem:[%s1 + $0x50] sm:$0xff]
  %v1931 = vld [vmem:[%s1 + $0x58] sm:$0xff]
  %v1932 = vld [vmem:[%s1 + $0x60] sm:$0xff]
  %v1933 = vld [vmem:[%s1 + $0x68] sm:$0xff]
  %v1934 = vld [vmem:[%s1 + $0x70] sm:$0xff]
  %v1935 = vld [vmem:[%s1 + $0x78] sm:$0xff]
  %v1936 = vld [vmem:[%s1 + $0x80] sm:$0xff]
  %v1937 = vld [vmem:[%s1 + $0x88] sm:$0xff]
  %v1938 = vld [vmem:[%s1 + $0x90] sm:$0xff]
  %v1939 = vld [vmem:[%s1 + $0x98] sm:$0xff]
  %v1940 = vld [vmem:[%s1 + $0xa0] sm:$0xff]
  %v1941 = vld [vmem:[%s1 + $0xa8] sm:$0xff]
  %v1942 = vld [vmem:[%s1 + $0xb0] sm:$0xff]
  %v1943 = vld [vmem:[%s1 + $0xb8] sm:$0xff]
  %v1944 = vld [vmem:[%s1 + $0xc0] sm:$0xff]
  %v1945 = vld [vmem:[%s1 + $0xc8] sm:$0xff]
  %v1946 = vld [vmem:[%s1 + $0xd0] sm:$0xff]
  %v1947 = vld [vmem:[%s1 + $0xd8] sm:$0xff]
  %v1948 = vld [vmem:[%s1 + $0xe0] sm:$0xff]
  %v1949 = vld [vmem:[%s1 + $0xe8] sm:$0xff]
  %v1950 = vld [vmem:[%s1 + $0xf0] sm:$0xff]
  %v1951 = vld [vmem:[%s1 + $0xf8] sm:$0xff]
  %v1984 = vunpack.c.l.b16 %v1920
  %v1985 = vunpack.c.h.b16 %v1920
  %v1986 = vunpack.c.l.b16 %v1921
  %v1987 = vunpack.c.h.b16 %v1921
  %v1988 = vunpack.c.l.b16 %v1922
  %v1989 = vunpack.c.h.b16 %v1922
  %v1990 = vunpack.c.l.b16 %v1923
  %v1991 = vunpack.c.h.b16 %v1923
  %v1992 = vunpack.c.l.b16 %v1924
  %v1993 = vunpack.c.h.b16 %v1924
  %v1994 = vunpack.c.l.b16 %v1925
  %v1995 = vunpack.c.h.b16 %v1925
  %v1996 = vunpack.c.l.b16 %v1926
  %v1997 = vunpack.c.h.b16 %v1926
  %v1998 = vunpack.c.l.b16 %v1927
  %v1999 = vunpack.c.h.b16 %v1927
  %v2000 = vunpack.c.l.b16 %v1928
  %v2001 = vunpack.c.h.b16 %v1928
  %v2002 = vunpack.c.l.b16 %v1929
  %v2003 = vunpack.c.h.b16 %v1929
  %v2004 = vunpack.c.l.b16 %v1930
  %v2005 = vunpack.c.h.b16 %v1930
  %v2006 = vunpack.c.l.b16 %v1931
  %v2007 = vunpack.c.h.b16 %v1931
  %v2008 = vunpack.c.l.b16 %v1932
  %v2009 = vunpack.c.h.b16 %v1932
  %v2010 = vunpack.c.l.b16 %v1933
  %v2011 = vunpack.c.h.b16 %v1933
  %v2012 = vunpack.c.l.b16 %v1934
  %v2013 = vunpack.c.h.b16 %v1934
  %v2014 = vunpack.c.l.b16 %v1935
  %v2015 = vunpack.c.h.b16 %v1935
  %v2016 = vunpack.c.l.b16 %v1936
  %v2017 = vunpack.c.h.b16 %v1936
  %v2018 = vunpack.c.l.b16 %v1937
  %v2019 = vunpack.c.h.b16 %v1937
  %v2020 = vunpack.c.l.b16 %v1938
  %v2021 = vunpack.c.h.b16 %v1938
  %v2022 = vunpack.c.l.b16 %v1939
  %v2023 = vunpack.c.h.b16 %v1939
  %v2024 = vunpack.c.l.b16 %v1940
  %v2025 = vunpack.c.h.b16 %v1940
  %v2026 = vunpack.c.l.b16 %v1941
  %v2027 = vunpack.c.h.b16 %v1941
  %v2028 = vunpack.c.l.b16 %v1942
  %v2029 = vunpack.c.h.b16 %v1942
  %v2030 = vunpack.c.l.b16 %v1943
  %v2031 = vunpack.c.h.b16 %v1943
  %v2032 = vunpack.c.l.b16 %v1944
  %v2033 = vunpack.c.h.b16 %v1944
  %v2034 = vunpack.c.l.b16 %v1945
  %v2035 = vunpack.c.h.b16 %v1945
  %v2036 = vunpack.c.l.b16 %v1946
  %v2037 = vunpack.c.h.b16 %v1946
  %v2038 = vunpack.c.l.b16 %v1947
  %v2039 = vunpack.c.h.b16 %v1947
  %v2040 = vunpack.c.l.b16 %v1948
  %v2041 = vunpack.c.h.b16 %v1948
  %v2042 = vunpack.c.l.b16 %v1949
  %v2043 = vunpack.c.h.b16 %v1949
  %v2044 = vunpack.c.l.b16 %v1950
  %v2045 = vunpack.c.h.b16 %v1950
  %v2046 = vunpack.c.l.b16 %v1951
  %v2047 = vunpack.c.h.b16 %v1951
  %v2048 = vpack.c.b16 %v1988, %v1984
  %v2049 = vpack.c.b16 %v1989, %v1985
  %v2050 = vpack.c.b16 %v1990, %v1986
  %v2051 = vpack.c.b16 %v1991, %v1987
  %v2052 = vpack.c.b16 %v1996, %v1992
  %v2053 = vpack.c.b16 %v1997, %v1993
  %v2054 = vpack.c.b16 %v1998, %v1994
  %v2055 = vpack.c.b16 %v1999, %v1995
  %v2056 = vpack.c.b16 %v2004, %v2000
  %v2057 = vpack.c.b16 %v2005, %v2001
  %v2058 = vpack.c.b16 %v2006, %v2002
  %v2059 = vpack.c.b16 %v2007, %v2003
  %v2060 = vpack.c.b16 %v2012, %v2008
  %v2061 = vpack.c.b16 %v2013, %v2009
  %v2062 = vpack.c.b16 %v2014, %v2010
  %v2063 = vpack.c.b16 %v2015, %v2011
  %v2064 = vpack.c.b16 %v2020, %v2016
  %v2065 = vpack.c.b16 %v2021, %v2017
  %v2066 = vpack.c.b16 %v2022, %v2018
  %v2067 = vpack.c.b16 %v2023, %v2019
  %v2068 = vpack.c.b16 %v2028, %v2024
  %v2069 = vpack.c.b16 %v2029, %v2025
  %v2070 = vpack.c.b16 %v2030, %v2026
  %v2071 = vpack.c.b16 %v2031, %v2027
  %v2072 = vpack.c.b16 %v2036, %v2032
  %v2073 = vpack.c.b16 %v2037, %v2033
  %v2074 = vpack.c.b16 %v2038, %v2034
  %v2075 = vpack.c.b16 %v2039, %v2035
  %v2076 = vpack.c.b16 %v2044, %v2040
  %v2077 = vpack.c.b16 %v2045, %v2041
  %v2078 = vpack.c.b16 %v2046, %v2042
  %v2079 = vpack.c.b16 %v2047, %v2043
  %2112 = vmatprep.subr.bf16.mxu0 %v2077
  %2113 = vmatpush1.bf16.msra.mxu0 %v2076
  %2114 = vmatprep.subr.bf16.mxu0 %v2073
  %2115 = vmatpush1.bf16.msra.mxu0 %v2072
  %2116 = vmatprep.subr.bf16.mxu0 %v2069
  %2117 = vmatpush1.bf16.msra.mxu0 %v2068
  %2118 = vmatprep.subr.bf16.mxu0 %v2065
  %2119 = vmatpush1.bf16.msra.mxu0 %v2064
  %2120 = vmatprep.subr.bf16.mxu0 %v2061
  %2121 = vmatpush1.bf16.msra.mxu0 %v2060
  %2122 = vmatprep.subr.bf16.mxu0 %v2057
  %2123 = vmatpush1.bf16.msra.mxu0 %v2056
  %2124 = vmatprep.subr.bf16.mxu0 %v2053
  %2125 = vmatpush1.bf16.msra.mxu0 %v2052
  %2126 = vmatprep.subr.bf16.mxu0 %v2049
  %2127 = vmatpush1.bf16.msra.mxu0 %v2048
  %2128 = vmatprep.subr.bf16.mxu0 0
  %2129 = vmatpush2.bf16.msra.mxu0 0
  %2130 = vmatprep.subr.bf16.mxu0 0
  %2131 = vmatpush2.bf16.msra.mxu0 0
  %2132 = vmatprep.subr.bf16.mxu0 0
  %2133 = vmatpush2.bf16.msra.mxu0 0
  %2134 = vmatprep.subr.bf16.mxu0 0
  %2135 = vmatpush2.bf16.msra.mxu0 0
  %2136 = vmatprep.subr.bf16.mxu0 0
  %2137 = vmatpush2.bf16.msra.mxu0 0
  %2138 = vmatprep.subr.bf16.mxu0 0
  %2139 = vmatpush2.bf16.msra.mxu0 0
  %2140 = vmatprep.subr.bf16.mxu0 0
  %2141 = vmatpush2.bf16.msra.mxu0 0
  %2142 = vmatprep.subr.bf16.mxu0 0
  %2143 = vmatpush2.bf16.msra.mxu0 0
  %2144 = vmatprep.mubr.bf16.mxu0 0
  %2145 = vmatmul.mubr.bf16.gmra.mxu0 %v1919
  %v2146 = vpop.f32.mrf.mxu0
  %v2147 = vadd.f32 0.0, %v2146
  %v2148 = vpop.f32.mrf.mxu0
  %v2149 = vadd.f32 0.0, %v2148
  %v2150 = vpop.f32.mrf.mxu0
  %v2151 = vpop.f32.mrf.mxu0
  %2152 = vdwg.mxu0
  %2153 = vmatprep.subr.bf16.mxu0 %v2079
  %2154 = vmatpush1.bf16.msra.mxu0 %v2078
  %2155 = vmatprep.subr.bf16.mxu0 %v2075
  %2156 = vmatpush1.bf16.msra.mxu0 %v2074
  %2157 = vmatprep.subr.bf16.mxu0 %v2071
  %2158 = vmatpush1.bf16.msra.mxu0 %v2070
  %2159 = vmatprep.subr.bf16.mxu0 %v2067
  %2160 = vmatpush1.bf16.msra.mxu0 %v2066
  %2161 = vmatprep.subr.bf16.mxu0 %v2063
  %2162 = vmatpush1.bf16.msra.mxu0 %v2062
  %2163 = vmatprep.subr.bf16.mxu0 %v2059
  %2164 = vmatpush1.bf16.msra.mxu0 %v2058
  %2165 = vmatprep.subr.bf16.mxu0 %v2055
  %2166 = vmatpush1.bf16.msra.mxu0 %v2054
  %2167 = vmatprep.subr.bf16.mxu0 %v2051
  %2168 = vmatpush1.bf16.msra.mxu0 %v2050
  %2169 = vmatprep.subr.bf16.mxu0 0
  %2170 = vmatpush2.bf16.msra.mxu0 0
  %2171 = vmatprep.subr.bf16.mxu0 0
  %2172 = vmatpush2.bf16.msra.mxu0 0
  %2173 = vmatprep.subr.bf16.mxu0 0
  %2174 = vmatpush2.bf16.msra.mxu0 0
  %2175 = vmatprep.subr.bf16.mxu0 0
  %2176 = vmatpush2.bf16.msra.mxu0 0
  %2177 = vmatprep.subr.bf16.mxu0 0
  %2178 = vmatpush2.bf16.msra.mxu0 0
  %2179 = vmatprep.subr.bf16.mxu0 0
  %2180 = vmatpush2.bf16.msra.mxu0 0
  %2181 = vmatprep.subr.bf16.mxu0 0
  %2182 = vmatpush2.bf16.msra.mxu0 0
  %2183 = vmatprep.subr.bf16.mxu0 0
  %2184 = vmatpush2.bf16.msra.mxu0 0
  %2185 = vmatprep.mubr.bf16.mxu0 0
  %2186 = vmatmul.mubr.bf16.gmra.mxu0 %v1919
  %v2187 = vpop.f32.mrf.mxu0
  %v2188 = vadd.f32 0.0, %v2187
  %v2189 = vpop.f32.mrf.mxu0
  %v2190 = vadd.f32 0.0, %v2189
  %v2191 = vpop.f32.mrf.mxu0
  %v2192 = vpop.f32.mrf.mxu0
  %2193 = vdwg.mxu0
  %v2194 = vadd.f32 %v1915, %v2147
  %v2195 = vadd.f32 %v1916, %v2149
  %v2196 = vadd.f32 %v1917, %v2188
  %v2197 = vadd.f32 %v1918, %v2190
  %v2198 = vxor.u32 %v2194, 2147483648
  %v2199 = vxor.u32 %v2195, 2147483648
  %v2200 = vxor.u32 %v2196, 2147483648
  %v2201 = vmul.f32 %v2198, 1.442695
  %v2202 = vpow.pop %v2201
  %v2203 = vmul.f32 %v2199, 1.442695
  %v2204 = vpow.pop %v2203
  %v2205 = vmul.f32 %v2200, 1.442695
  %v2206 = vpow.pop %v2205
  %v2207 = vadd.f32 %v2202, 1.0
  %v2208 = vadd.f32 %v2204, 1.0
  %v2209 = vadd.f32 %v2206, 1.0
  %v2210 = vrcp.pop %v2207
  %v2211 = vmul.f32 1.0, %v2210
  %v2212 = vrcp.pop %v2208
  %v2213 = vmul.f32 1.0, %v2212
  %v2214 = vrcp.pop %v2209
  %v2215 = vmul.f32 1.0, %v2214
  %v2216 = vtanh.pop %v2197
  %v2217 = vld [vmem:[#allocation3] sm:$0xff]
  %v2218 = vmul.f32 %v2213, %v2217
  %v2219 = vmul.f32 %v2211, %v2216
  %v2220 = vadd.f32 %v2218, %v2219
  %v2221 = vtanh.pop %v2220
  %v2222 = vmul.f32 %v2215, %v2221
  %v2223 = vpack.c.bf16 %v2222, %v2222
  %2224 = vst [vmem:[#allocation3] sm:$0xff] %v2220
  %2225 = vst [vmem:[#allocation2] sm:$0xf] %v2223
  %s2226 = scalar_lea.vmem %s2, 24
  %2227 = vst [vmem:[%s2226] sm:$0xf] %v2223
  %s2228 = scalar_lea.vmem %s0, 112
  %v2229 = vld [vmem:[%s2228] sm:$0xff]
  %v2230 = vld [vmem:[%s2228 + $0x8] sm:$0xff]
  %v2231 = vunpack.c.l.bf16 %v2229
  %v2232 = vunpack.c.h.bf16 %v2229
  %v2233 = vunpack.c.l.bf16 %v2230
  %v2234 = vunpack.c.h.bf16 %v2230
  %v2235 = vld [vmem:[#allocation2] sm:$0xf]
  %v2236 = vld [vmem:[%s1] sm:$0xff]
  %v2237 = vld [vmem:[%s1 + $0x8] sm:$0xff]
  %v2238 = vld [vmem:[%s1 + $0x10] sm:$0xff]
  %v2239 = vld [vmem:[%s1 + $0x18] sm:$0xff]
  %v2240 = vld [vmem:[%s1 + $0x20] sm:$0xff]
  %v2241 = vld [vmem:[%s1 + $0x28] sm:$0xff]
  %v2242 = vld [vmem:[%s1 + $0x30] sm:$0xff]
  %v2243 = vld [vmem:[%s1 + $0x38] sm:$0xff]
  %v2244 = vld [vmem:[%s1 + $0x40] sm:$0xff]
  %v2245 = vld [vmem:[%s1 + $0x48] sm:$0xff]
  %v2246 = vld [vmem:[%s1 + $0x50] sm:$0xff]
  %v2247 = vld [vmem:[%s1 + $0x58] sm:$0xff]
  %v2248 = vld [vmem:[%s1 + $0x60] sm:$0xff]
  %v2249 = vld [vmem:[%s1 + $0x68] sm:$0xff]
  %v2250 = vld [vmem:[%s1 + $0x70] sm:$0xff]
  %v2251 = vld [vmem:[%s1 + $0x78] sm:$0xff]
  %v2252 = vld [vmem:[%s1 + $0x80] sm:$0xff]
  %v2253 = vld [vmem:[%s1 + $0x88] sm:$0xff]
  %v2254 = vld [vmem:[%s1 + $0x90] sm:$0xff]
  %v2255 = vld [vmem:[%s1 + $0x98] sm:$0xff]
  %v2256 = vld [vmem:[%s1 + $0xa0] sm:$0xff]
  %v2257 = vld [vmem:[%s1 + $0xa8] sm:$0xff]
  %v2258 = vld [vmem:[%s1 + $0xb0] sm:$0xff]
  %v2259 = vld [vmem:[%s1 + $0xb8] sm:$0xff]
  %v2260 = vld [vmem:[%s1 + $0xc0] sm:$0xff]
  %v2261 = vld [vmem:[%s1 + $0xc8] sm:$0xff]
  %v2262 = vld [vmem:[%s1 + $0xd0] sm:$0xff]
  %v2263 = vld [vmem:[%s1 + $0xd8] sm:$0xff]
  %v2264 = vld [vmem:[%s1 + $0xe0] sm:$0xff]
  %v2265 = vld [vmem:[%s1 + $0xe8] sm:$0xff]
  %v2266 = vld [vmem:[%s1 + $0xf0] sm:$0xff]
  %v2267 = vld [vmem:[%s1 + $0xf8] sm:$0xff]
  %v2300 = vunpack.c.l.b16 %v2236
  %v2301 = vunpack.c.h.b16 %v2236
  %v2302 = vunpack.c.l.b16 %v2237
  %v2303 = vunpack.c.h.b16 %v2237
  %v2304 = vunpack.c.l.b16 %v2238
  %v2305 = vunpack.c.h.b16 %v2238
  %v2306 = vunpack.c.l.b16 %v2239
  %v2307 = vunpack.c.h.b16 %v2239
  %v2308 = vunpack.c.l.b16 %v2240
  %v2309 = vunpack.c.h.b16 %v2240
  %v2310 = vunpack.c.l.b16 %v2241
  %v2311 = vunpack.c.h.b16 %v2241
  %v2312 = vunpack.c.l.b16 %v2242
  %v2313 = vunpack.c.h.b16 %v2242
  %v2314 = vunpack.c.l.b16 %v2243
  %v2315 = vunpack.c.h.b16 %v2243
  %v2316 = vunpack.c.l.b16 %v2244
  %v2317 = vunpack.c.h.b16 %v2244
  %v2318 = vunpack.c.l.b16 %v2245
  %v2319 = vunpack.c.h.b16 %v2245
  %v2320 = vunpack.c.l.b16 %v2246
  %v2321 = vunpack.c.h.b16 %v2246
  %v2322 = vunpack.c.l.b16 %v2247
  %v2323 = vunpack.c.h.b16 %v2247
  %v2324 = vunpack.c.l.b16 %v2248
  %v2325 = vunpack.c.h.b16 %v2248
  %v2326 = vunpack.c.l.b16 %v2249
  %v2327 = vunpack.c.h.b16 %v2249
  %v2328 = vunpack.c.l.b16 %v2250
  %v2329 = vunpack.c.h.b16 %v2250
  %v2330 = vunpack.c.l.b16 %v2251
  %v2331 = vunpack.c.h.b16 %v2251
  %v2332 = vunpack.c.l.b16 %v2252
  %v2333 = vunpack.c.h.b16 %v2252
  %v2334 = vunpack.c.l.b16 %v2253
  %v2335 = vunpack.c.h.b16 %v2253
  %v2336 = vunpack.c.l.b16 %v2254
  %v2337 = vunpack.c.h.b16 %v2254
  %v2338 = vunpack.c.l.b16 %v2255
  %v2339 = vunpack.c.h.b16 %v2255
  %v2340 = vunpack.c.l.b16 %v2256
  %v2341 = vunpack.c.h.b16 %v2256
  %v2342 = vunpack.c.l.b16 %v2257
  %v2343 = vunpack.c.h.b16 %v2257
  %v2344 = vunpack.c.l.b16 %v2258
  %v2345 = vunpack.c.h.b16 %v2258
  %v2346 = vunpack.c.l.b16 %v2259
  %v2347 = vunpack.c.h.b16 %v2259
  %v2348 = vunpack.c.l.b16 %v2260
  %v2349 = vunpack.c.h.b16 %v2260
  %v2350 = vunpack.c.l.b16 %v2261
  %v2351 = vunpack.c.h.b16 %v2261
  %v2352 = vunpack.c.l.b16 %v2262
  %v2353 = vunpack.c.h.b16 %v2262
  %v2354 = vunpack.c.l.b16 %v2263
  %v2355 = vunpack.c.h.b16 %v2263
  %v2356 = vunpack.c.l.b16 %v2264
  %v2357 = vunpack.c.h.b16 %v2264
  %v2358 = vunpack.c.l.b16 %v2265
  %v2359 = vunpack.c.h.b16 %v2265
  %v2360 = vunpack.c.l.b16 %v2266
  %v2361 = vunpack.c.h.b16 %v2266
  %v2362 = vunpack.c.l.b16 %v2267
  %v2363 = vunpack.c.h.b16 %v2267
  %v2364 = vpack.c.b16 %v2304, %v2300
  %v2365 = vpack.c.b16 %v2305, %v2301
  %v2366 = vpack.c.b16 %v2306, %v2302
  %v2367 = vpack.c.b16 %v2307, %v2303
  %v2368 = vpack.c.b16 %v2312, %v2308
  %v2369 = vpack.c.b16 %v2313, %v2309
  %v2370 = vpack.c.b16 %v2314, %v2310
  %v2371 = vpack.c.b16 %v2315, %v2311
  %v2372 = vpack.c.b16 %v2320, %v2316
  %v2373 = vpack.c.b16 %v2321, %v2317
  %v2374 = vpack.c.b16 %v2322, %v2318
  %v2375 = vpack.c.b16 %v2323, %v2319
  %v2376 = vpack.c.b16 %v2328, %v2324
  %v2377 = vpack.c.b16 %v2329, %v2325
  %v2378 = vpack.c.b16 %v2330, %v2326
  %v2379 = vpack.c.b16 %v2331, %v2327
  %v2380 = vpack.c.b16 %v2336, %v2332
  %v2381 = vpack.c.b16 %v2337, %v2333
  %v2382 = vpack.c.b16 %v2338, %v2334
  %v2383 = vpack.c.b16 %v2339, %v2335
  %v2384 = vpack.c.b16 %v2344, %v2340
  %v2385 = vpack.c.b16 %v2345, %v2341
  %v2386 = vpack.c.b16 %v2346, %v2342
  %v2387 = vpack.c.b16 %v2347, %v2343
  %v2388 = vpack.c.b16 %v2352, %v2348
  %v2389 = vpack.c.b16 %v2353, %v2349
  %v2390 = vpack.c.b16 %v2354, %v2350
  %v2391 = vpack.c.b16 %v2355, %v2351
  %v2392 = vpack.c.b16 %v2360, %v2356
  %v2393 = vpack.c.b16 %v2361, %v2357
  %v2394 = vpack.c.b16 %v2362, %v2358
  %v2395 = vpack.c.b16 %v2363, %v2359
  %2428 = vmatprep.subr.bf16.mxu0 %v2393
  %2429 = vmatpush1.bf16.msra.mxu0 %v2392
  %2430 = vmatprep.subr.bf16.mxu0 %v2389
  %2431 = vmatpush1.bf16.msra.mxu0 %v2388
  %2432 = vmatprep.subr.bf16.mxu0 %v2385
  %2433 = vmatpush1.bf16.msra.mxu0 %v2384
  %2434 = vmatprep.subr.bf16.mxu0 %v2381
  %2435 = vmatpush1.bf16.msra.mxu0 %v2380
  %2436 = vmatprep.subr.bf16.mxu0 %v2377
  %2437 = vmatpush1.bf16.msra.mxu0 %v2376
  %2438 = vmatprep.subr.bf16.mxu0 %v2373
  %2439 = vmatpush1.bf16.msra.mxu0 %v2372
  %2440 = vmatprep.subr.bf16.mxu0 %v2369
  %2441 = vmatpush1.bf16.msra.mxu0 %v2368
  %2442 = vmatprep.subr.bf16.mxu0 %v2365
  %2443 = vmatpush1.bf16.msra.mxu0 %v2364
  %2444 = vmatprep.subr.bf16.mxu0 0
  %2445 = vmatpush2.bf16.msra.mxu0 0
  %2446 = vmatprep.subr.bf16.mxu0 0
  %2447 = vmatpush2.bf16.msra.mxu0 0
  %2448 = vmatprep.subr.bf16.mxu0 0
  %2449 = vmatpush2.bf16.msra.mxu0 0
  %2450 = vmatprep.subr.bf16.mxu0 0
  %2451 = vmatpush2.bf16.msra.mxu0 0
  %2452 = vmatprep.subr.bf16.mxu0 0
  %2453 = vmatpush2.bf16.msra.mxu0 0
  %2454 = vmatprep.subr.bf16.mxu0 0
  %2455 = vmatpush2.bf16.msra.mxu0 0
  %2456 = vmatprep.subr.bf16.mxu0 0
  %2457 = vmatpush2.bf16.msra.mxu0 0
  %2458 = vmatprep.subr.bf16.mxu0 0
  %2459 = vmatpush2.bf16.msra.mxu0 0
  %2460 = vmatprep.mubr.bf16.mxu0 0
  %2461 = vmatmul.mubr.bf16.gmra.mxu0 %v2235
  %v2462 = vpop.f32.mrf.mxu0
  %v2463 = vadd.f32 0.0, %v2462
  %v2464 = vpop.f32.mrf.mxu0
  %v2465 = vadd.f32 0.0, %v2464
  %v2466 = vpop.f32.mrf.mxu0
  %v2467 = vpop.f32.mrf.mxu0
  %2468 = vdwg.mxu0
  %2469 = vmatprep.subr.bf16.mxu0 %v2395
  %2470 = vmatpush1.bf16.msra.mxu0 %v2394
  %2471 = vmatprep.subr.bf16.mxu0 %v2391
  %2472 = vmatpush1.bf16.msra.mxu0 %v2390
  %2473 = vmatprep.subr.bf16.mxu0 %v2387
  %2474 = vmatpush1.bf16.msra.mxu0 %v2386
  %2475 = vmatprep.subr.bf16.mxu0 %v2383
  %2476 = vmatpush1.bf16.msra.mxu0 %v2382
  %2477 = vmatprep.subr.bf16.mxu0 %v2379
  %2478 = vmatpush1.bf16.msra.mxu0 %v2378
  %2479 = vmatprep.subr.bf16.mxu0 %v2375
  %2480 = vmatpush1.bf16.msra.mxu0 %v2374
  %2481 = vmatprep.subr.bf16.mxu0 %v2371
  %2482 = vmatpush1.bf16.msra.mxu0 %v2370
  %2483 = vmatprep.subr.bf16.mxu0 %v2367
  %2484 = vmatpush1.bf16.msra.mxu0 %v2366
  %2485 = vmatprep.subr.bf16.mxu0 0
  %2486 = vmatpush2.bf16.msra.mxu0 0
  %2487 = vmatprep.subr.bf16.mxu0 0
  %2488 = vmatpush2.bf16.msra.mxu0 0
  %2489 = vmatprep.subr.bf16.mxu0 0
  %2490 = vmatpush2.bf16.msra.mxu0 0
  %2491 = vmatprep.subr.bf16.mxu0 0
  %2492 = vmatpush2.bf16.msra.mxu0 0
  %2493 = vmatprep.subr.bf16.mxu0 0
  %2494 = vmatpush2.bf16.msra.mxu0 0
  %2495 = vmatprep.subr.bf16.mxu0 0
  %2496 = vmatpush2.bf16.msra.mxu0 0
  %2497 = vmatprep.subr.bf16.mxu0 0
  %2498 = vmatpush2.bf16.msra.mxu0 0
  %2499 = vmatprep.subr.bf16.mxu0 0
  %2500 = vmatpush2.bf16.msra.mxu0 0
  %2501 = vmatprep.mubr.bf16.mxu0 0
  %2502 = vmatmul.mubr.bf16.gmra.mxu0 %v2235
  %v2503 = vpop.f32.mrf.mxu0
  %v2504 = vadd.f32 0.0, %v2503
  %v2505 = vpop.f32.mrf.mxu0
  %v2506 = vadd.f32 0.0, %v2505
  %v2507 = vpop.f32.mrf.mxu0
  %v2508 = vpop.f32.mrf.mxu0
  %2509 = vdwg.mxu0
  %v2510 = vadd.f32 %v2231, %v2463
  %v2511 = vadd.f32 %v2232, %v2465
  %v2512 = vadd.f32 %v2233, %v2504
  %v2513 = vadd.f32 %v2234, %v2506
  %v2514 = vxor.u32 %v2510, 2147483648
  %v2515 = vxor.u32 %v2511, 2147483648
  %v2516 = vxor.u32 %v2512, 2147483648
  %v2517 = vmul.f32 %v2514, 1.442695
  %v2518 = vpow.pop %v2517
  %v2519 = vmul.f32 %v2515, 1.442695
  %v2520 = vpow.pop %v2519
  %v2521 = vmul.f32 %v2516, 1.442695
  %v2522 = vpow.pop %v2521
  %v2523 = vadd.f32 %v2518, 1.0
  %v2524 = vadd.f32 %v2520, 1.0
  %v2525 = vadd.f32 %v2522, 1.0
  %v2526 = vrcp.pop %v2523
  %v2527 = vmul.f32 1.0, %v2526
  %v2528 = vrcp.pop %v2524
  %v2529 = vmul.f32 1.0, %v2528
  %v2530 = vrcp.pop %v2525
  %v2531 = vmul.f32 1.0, %v2530
  %v2532 = vtanh.pop %v2513
  %v2533 = vld [vmem:[#allocation3] sm:$0xff]
  %v2534 = vmul.f32 %v2529, %v2533
  %v2535 = vmul.f32 %v2527, %v2532
  %v2536 = vadd.f32 %v2534, %v2535
  %v2537 = vtanh.pop %v2536
  %v2538 = vmul.f32 %v2531, %v2537
  %v2539 = vpack.c.bf16 %v2538, %v2538
  %2540 = vst [vmem:[#allocation3] sm:$0xff] %v2536
  %2541 = vst [vmem:[#allocation2] sm:$0xf] %v2539
  %s2542 = scalar_lea.vmem %s2, 28
  %2543 = vst [vmem:[%s2542] sm:$0xf] %v2539
  // Predicated region
  $region14: #{rnn_seq_note_forward.6} parent=0 // pred_check
    _
  $region15: #{rnn_seq_note_forward.6} parent=0 // pred_check_branch
    %2545 = sbr.rel (0) target = $region17
  $region16: #{rnn_seq_note_forward.6} parent=0 // pred_region
    _
  $region17: #{rnn_seq_note_forward.6} parent=0 // pred_fallthru
    _
  // Predicated region
  $region18: #{rnn_seq_note_forward.6} parent=0 // pred_check
    _
  $region19: #{rnn_seq_note_forward.6} parent=0 // pred_check_branch
    %2547 = sbr.rel (0) target = $region21
  $region20: #{rnn_seq_note_forward.6} parent=0 // pred_region
    _
  $region21: #{rnn_seq_note_forward.6} parent=0 // pred_fallthru
    _

</llo_original>
